<compile_context>
chip_gen: v6e
topology: v6e:2x2x1
jax: 0.10.0
libtpu: 0.0.40
codegen_flags: <defaults>
</compile_context>

<pallas_src>
import functools

import jax
import jax.numpy as jnp
from jax import lax
from jax.experimental import pallas as pl
from jax.experimental.pallas import tpu as pltpu

BOARD_CONV_FILTERS = 64


# ---------------------------------------------------------------------------
# Fused Pallas kernel: conv1 -> relu -> conv2 -> relu -> flatten -> fc1 -> relu
#                      -> fc2 -> softmax, all VMEM-resident.
# ---------------------------------------------------------------------------
def _actor_kernel(p1_ref, w1_ref, b1_ref, w2_ref, b2_ref,
                  fc1w_hbm, fc1b_ref, fc2w_ref, fc2b_ref,
                  o_ref,
                  y1_ref, fc1w_vmem, fc1w_sem,
                  *, B, H1, W1):
    """
    p1_ref   : (B*H1*W1, 9*Cin) f32   conv1 im2col patches (built by XLA in the wrapper)
    w1_ref   : (9*Cin, C)       f32   conv1 weights, rows ordered (di, dj, ci)
    b1_ref   : (1, C)           f32
    w2_ref   : (9*C, C)         f32   conv2 weights, rows ordered (di, dj, ci)
    b2_ref   : (1, C)           f32
    fc1w_hbm : (H2*W2*C, 512)   bf16  stays in HBM; manual DMA overlapped with convs
    fc1b_ref : (1, 512)         f32
    fc2w_ref : (512, NPAD)      bf16  columns zero-padded to a multiple of 128
    fc2b_ref : (1, NPAD)        f32   pad columns = -1e30 (softmax prob -> exactly 0)
    o_ref    : (B, NPAD)        f32   softmax output (lane-dense store)
    y1_ref   : (B*H1*W1, C)     f32   scratch: conv1 activation in natural matmul shape
    fc1w_vmem: (H2*W2*C, 512)   bf16  scratch: VMEM landing buffer for fc1 weights
    fc1w_sem : DMA semaphore
    """
    C = w1_ref.shape[1]
    H2, W2 = H1 - 2, W1 - 2
    P = H2 * W2

    # Kick off the dominant weight DMA first so it overlaps the conv compute.
    fc1_cp = pltpu.make_async_copy(fc1w_hbm, fc1w_vmem, fc1w_sem)
    fc1_cp.start()

    # ---- conv1 + ReLU: ONE batched MXU matmul over every (b, i, j) patch row ----
    y1_ref[...] = jnp.maximum(
        jnp.dot(p1_ref[...], w1_ref[...], preferred_element_type=jnp.float32)
        + b1_ref[...], 0.0)                                          # (B*H1*W1, C)

    # ---- conv2 im2col: contiguous static sublane slices of the flat activation ----
    blocks = []
    for b in range(B):
        for i in range(H2):
            row0 = b * H1 * W1 + i * W1
            blocks.append(jnp.concatenate(
                [y1_ref[row0 + di * W1 + dj: row0 + di * W1 + dj + W2, :]
                 for di in range(3) for dj in range(3)], axis=-1))   # (W2, 9*C)
    patches2 = jnp.concatenate(blocks, axis=0)                       # (B*P, 9*C)

    # ---- conv2 + ReLU: ONE batched MXU matmul -----------------------------------
    y2 = jnp.maximum(
        jnp.dot(patches2, w2_ref[...], preferred_element_type=jnp.float32)
        + b2_ref[...], 0.0)                                          # (B*P, C)

    # ---- flatten to (B, P*C) in (h, w, c) order (matches prepared fc1_w rows) ----
    flat = jnp.concatenate(
        [jnp.concatenate([y2[b * P + p: b * P + p + 1, :] for p in range(P)], axis=-1)
         for b in range(B)], axis=0)                                 # (B, P*C)

    # ---- fc1 + ReLU (bf16 weights, f32 accumulation) -----------------------------
    fc1_cp.wait()
    h1 = jnp.maximum(
        jnp.dot(flat.astype(jnp.bfloat16), fc1w_vmem[...],
                preferred_element_type=jnp.float32) + fc1b_ref[...], 0.0)   # (B, 512)

    # ---- fc2 + softmax over lane-padded columns ----------------------------------
    logits = jnp.dot(h1.astype(jnp.bfloat16), fc2w_ref[...],
                     preferred_element_type=jnp.float32) + fc2b_ref[...]
    m = jnp.max(logits, axis=-1, keepdims=True)
    e = jnp.exp(logits - m)                       # padded lanes -> exp(-1e30 - m) == 0
    s = jnp.sum(e, axis=-1, keepdims=True)
    inv = pl.reciprocal(s, approx=True)           # EUP slot (free-ish)
    inv = inv * (2.0 - s * inv)                   # one Newton step -> ~f32 accuracy
    o_ref[...] = e * inv


# ---------------------------------------------------------------------------
# Wrapper: single pallas_call for the whole forward pass
# ---------------------------------------------------------------------------
@jax.jit
def actor_forward(prepared, x):
    """x: (B, 2, height, width) NCHW, as in the PyTorch module. Returns (B, width)."""
    B, Cin, H, W = x.shape
    C = BOARD_CONV_FILTERS
    H1, W1, H2, W2 = H - 2, W - 2, H - 4, W - 4
    nh = prepared["fc1_w"].shape[1]
    npad = prepared["fc2_w"].shape[1]

    # Layout plumbing stays in XLA (x is ~1 KB): NCHW->NHWC + conv1 im2col fuse for free.
    xh = jnp.transpose(x.astype(jnp.float32), (0, 2, 3, 1))               # (B, H, W, Cin)
    p1 = jnp.concatenate(
        [xh[:, di:di + H1, dj:dj + W1, :] for di in range(3) for dj in range(3)],
        axis=-1).reshape(B * H1 * W1, 9 * Cin)                            # (B*H1*W1, 9*Cin)

    flops = 2 * B * (H1 * W1 * 9 * Cin * C + H2 * W2 * 9 * C * C
                     + H2 * W2 * C * nh + nh * npad)
    bytes_accessed = int(
        p1.size * 4 + B * npad * 4
        + sum(int(prepared[k].size) * prepared[k].dtype.itemsize
              for k in ("conv1_w", "conv1_b", "conv2_w", "conv2_b",
                        "fc1_w", "fc1_b", "fc2_w", "fc2_b")))

    vmem = pl.BlockSpec(memory_space=pltpu.MemorySpace.VMEM)
    out = pl.pallas_call(
        functools.partial(_actor_kernel, B=B, H1=H1, W1=W1),
        out_shape=jax.ShapeDtypeStruct((B, npad), jnp.float32),
        in_specs=[vmem, vmem, vmem, vmem, vmem,
                  pl.BlockSpec(memory_space=pl.ANY),   # fc1_w stays in HBM; manual DMA
                  vmem, vmem, vmem],
        out_specs=vmem,
        scratch_shapes=[pltpu.VMEM((B * H1 * W1, C), jnp.float32),
                        pltpu.VMEM(prepared["fc1_w"].shape, prepared["fc1_w"].dtype),
                        pltpu.SemaphoreType.DMA],
        cost_estimate=pl.CostEstimate(flops=flops,
                                      transcendentals=B * (npad + 1),
                                      bytes_accessed=bytes_accessed),
    )(p1, prepared["conv1_w"], prepared["conv1_b"],
      prepared["conv2_w"], prepared["conv2_b"],
      prepared["fc1_w"], prepared["fc1_b"],
      prepared["fc2_w"], prepared["fc2_b"])
    # TODO(synk): for large batches on v7x, add a grid over B-tiles with
    # dimension_semantics=("parallel",) so the two TensorCores split rows, and K-tile
    # fc1 (with vmem_limit_bytes) once (H-4)*(W-4)*64*512 outgrows the 64 MiB VMEM.
    return out[:, :W]


# ---------------------------------------------------------------------------
# One-time layout plumbing: torch-layout params -> kernel-ready operands
# ---------------------------------------------------------------------------
def prepare_params(params, width, height):
    C = BOARD_CONV_FILTERS
    H2, W2 = height - 4, width - 4
    nh = params["fc1_w"].shape[1]
    npad = ((width + 127) // 128) * 128

    def conv_w(w):   # (Cout, Cin, kh, kw) -> (kh*kw*Cin, Cout), rows in (di, dj, ci) order
        co, ci, kh, kw = w.shape
        return jnp.transpose(w, (2, 3, 1, 0)).reshape(kh * kw * ci, co).astype(jnp.float32)

    # fc1 rows: torch.flatten(x,1) NCHW order (c, h, w) -> kernel NHWC order (h, w, c)
    fc1_w = (params["fc1_w"].reshape(C, H2, W2, nh)
             .transpose(1, 2, 0, 3).reshape(H2 * W2 * C, nh).astype(jnp.bfloat16))

    fc2_w = jnp.pad(params["fc2_w"].astype(jnp.float32),
                    ((0, 0), (0, npad - width))).astype(jnp.bfloat16)
    fc2_b = jnp.concatenate([params["fc2_b"].astype(jnp.float32),
                             jnp.full((npad - width,), -1e30, jnp.float32)])

    return {
        "conv1_w": conv_w(params["conv1_w"]),
        "conv1_b": params["conv1_b"].reshape(1, C).astype(jnp.float32),
        "conv2_w": conv_w(params["conv2_w"]),
        "conv2_b": params["conv2_b"].reshape(1, C).astype(jnp.float32),
        "fc1_w": fc1_w,
        "fc1_b": params["fc1_b"].reshape(1, nh).astype(jnp.float32),
        "fc2_w": fc2_w,
        "fc2_b": fc2_b.reshape(1, npad),
    }


# ---------------------------------------------------------------------------
# Deterministic parameter init (PyTorch-style uniform(-1/sqrt(fan_in), +))
# ---------------------------------------------------------------------------
def init_params(key, width, height):
    keys = jax.random.split(key, 8)

    def u(k, shape, fan_in):
        bound = 1.0 / jnp.sqrt(float(fan_in))
        return jax.random.uniform(k, shape, jnp.float32, -bound, bound)

    fc1_in = (width - 4) * (height - 4) * BOARD_CONV_FILTERS
    return {
        "conv1_w": u(keys[0], (BOARD_CONV_FILTERS, 2, 3, 3), 2 * 9),
        "conv1_b": u(keys[1], (BOARD_CONV_FILTERS,), 2 * 9),
        "conv2_w": u(keys[2], (BOARD_CONV_FILTERS, BOARD_CONV_FILTERS, 3, 3),
                     BOARD_CONV_FILTERS * 9),
        "conv2_b": u(keys[3], (BOARD_CONV_FILTERS,), BOARD_CONV_FILTERS * 9),
        "fc1_w": u(keys[4], (fc1_in, 512), fc1_in),          # stored as (in, out)
        "fc1_b": u(keys[5], (512,), fc1_in),
        "fc2_w": u(keys[6], (512, width), 512),
        "fc2_b": u(keys[7], (width,), 512),
    }


# ---------------------------------------------------------------------------
# Pure-JAX reference (mirror of the PyTorch module) for the self-check.
# bf16_fc=True mirrors the kernel's bf16-weight / f32-accumulate fc numerics.
# ---------------------------------------------------------------------------
def _reference_forward(params, x, *, bf16_fc=False):
    x = x.astype(jnp.float32)
    dn = ("NCHW", "OIHW", "NCHW")
    hp = lax.Precision.HIGHEST
    y = lax.conv_general_dilated(x, params["conv1_w"], (1, 1), "VALID",
                                 dimension_numbers=dn, precision=hp)
    y = jax.nn.relu(y + params["conv1_b"].reshape(1, -1, 1, 1))
    y = lax.conv_general_dilated(y, params["conv2_w"], (1, 1), "VALID",
                                 dimension_numbers=dn, precision=hp)
    y = jax.nn.relu(y + params["conv2_b"].reshape(1, -1, 1, 1))
    y = y.reshape(y.shape[0], -1)                        # torch.flatten(x, 1) on NCHW
    if bf16_fc:
        h = jax.nn.relu(jnp.dot(y.astype(jnp.bfloat16),
                                params["fc1_w"].astype(jnp.bfloat16),
                                preferred_element_type=jnp.float32) + params["fc1_b"])
        logits = jnp.dot(h.astype(jnp.bfloat16),
                         params["fc2_w"].astype(jnp.bfloat16),
                         preferred_element_type=jnp.float32) + params["fc2_b"]
    else:
        h = jax.nn.relu(jnp.dot(y, params["fc1_w"], precision=hp) + params["fc1_b"])
        logits = jnp.dot(h, params["fc2_w"], precision=hp) + params["fc2_b"]
    return jax.nn.softmax(logits, axis=-1)


if __name__ == "__main__":
    width, height, batch = 8, 8, 2

    root = jax.random.PRNGKey(0)
    k_params, k_x = jax.random.split(root)
    params = init_params(k_params, width, height)
    prepared = prepare_params(params, width, height)
    x = jax.random.normal(k_x, (batch, 2, height, width), dtype=jnp.float32)

    out = jax.block_until_ready(actor_forward(prepared, x))

    assert out.shape == (batch, width), out.shape
    assert bool(jnp.all(jnp.isfinite(out)))
    assert bool(jnp.allclose(jnp.sum(out, axis=1), 1.0, atol=1e-5))

    # Tight check against a reference with the same bf16-weight fc numerics ...
    ref_same = _reference_forward(params, x, bf16_fc=True)
    assert bool(jnp.allclose(out, ref_same, atol=2e-3)), \
        float(jnp.max(jnp.abs(out - ref_same)))
    # ... and a looser check against the full-f32 module semantics.
    ref_f32 = _reference_forward(params, x, bf16_fc=False)
    assert bool(jnp.allclose(out, ref_f32, atol=1e-2)), \
        float(jnp.max(jnp.abs(out - ref_f32)))

    print("KERNEL_OK")
</pallas_src>

<mosaic_0001>
module attributes {stable_mosaic.version = 11 : i64} {
  func.func @_actor_kernel(%arg0: memref<72x18xf32, #tpu.memory_space<vmem>>, %arg1: memref<18x64xf32, #tpu.memory_space<vmem>>, %arg2: memref<1x64xf32, #tpu.memory_space<vmem>>, %arg3: memref<576x64xf32, #tpu.memory_space<vmem>>, %arg4: memref<1x64xf32, #tpu.memory_space<vmem>>, %arg5: memref<1024x512xbf16, #tpu.memory_space<any>>, %arg6: memref<1x512xf32, #tpu.memory_space<vmem>>, %arg7: memref<512x128xbf16, #tpu.memory_space<vmem>>, %arg8: memref<1x128xf32, #tpu.memory_space<vmem>>, %arg9: memref<2x128xf32, #tpu.memory_space<vmem>>, %arg10: memref<72x64xf32, #tpu.memory_space<vmem>>, %arg11: memref<1024x512xbf16, #tpu.memory_space<vmem>>, %arg12: memref<!tpu.dma_semaphore, #tpu.memory_space<semaphore_mem>>) attributes {dimension_semantics = [], scalar_prefetch = 0 : i64, scratch_operands = 3 : i64, tpu.core_type = #tpu.core_type<tc>} {
    tpu.enqueue_dma source(%arg5 : memref<1024x512xbf16, #tpu.memory_space<any>>) target(%arg11 : memref<1024x512xbf16, #tpu.memory_space<vmem>>) target_semaphore(%arg12 : memref<!tpu.dma_semaphore, #tpu.memory_space<semaphore_mem>>)
    %c0 = arith.constant 0 : index
    %c0_0 = arith.constant 0 : index
    %0 = vector.load %arg0[%c0, %c0_0] : memref<72x18xf32, #tpu.memory_space<vmem>>, vector<72x18xf32>
    %c0_1 = arith.constant 0 : index
    %c0_2 = arith.constant 0 : index
    %1 = vector.load %arg1[%c0_1, %c0_2] : memref<18x64xf32, #tpu.memory_space<vmem>>, vector<18x64xf32>
    %cst = arith.constant dense<0.000000e+00> : vector<72x64xf32>
    %2 = tpu.matmul %0, %1, %cst {dimension_numbers = #tpu.dot_dimension_numbers<[1], [0], [0], [1], [0, 0, 1, 1], [], []>} : vector<72x18xf32>, vector<18x64xf32>, vector<72x64xf32> -> vector<72x64xf32>
    %c0_3 = arith.constant 0 : index
    %c0_4 = arith.constant 0 : index
    %3 = vector.load %arg2[%c0_3, %c0_4] : memref<1x64xf32, #tpu.memory_space<vmem>>, vector<1x64xf32>
    %4 = vector.broadcast %3 : vector<1x64xf32> to vector<72x64xf32>
    %5 = arith.addf %2, %4 : vector<72x64xf32>
    %cst_5 = arith.constant 0.000000e+00 : f32
    %6 = vector.broadcast %cst_5 : f32 to vector<72x64xf32>
    %7 = arith.maximumf %5, %6 : vector<72x64xf32>
    %c0_6 = arith.constant 0 : index
    %c0_7 = arith.constant 0 : index
    %8 = vector.load %arg10[%c0_6, %c0_7] : memref<72x64xf32, #tpu.memory_space<vmem>>, vector<72x64xf32>
    tpu.vector_store %arg10[%c0_6, %c0_7], %7 {strides = array<i32>} : memref<72x64xf32, #tpu.memory_space<vmem>>, vector<72x64xf32>,
    %c0_8 = arith.constant 0 : index
    %c0_9 = arith.constant 0 : index
    %9 = vector.load %arg10[%c0_8, %c0_9] : memref<72x64xf32, #tpu.memory_space<vmem>>, vector<4x64xf32>
    %c1 = arith.constant 1 : index
    %c0_10 = arith.constant 0 : index
    %10 = vector.load %arg10[%c1, %c0_10] : memref<72x64xf32, #tpu.memory_space<vmem>>, vector<4x64xf32>
    %c2 = arith.constant 2 : index
    %c0_11 = arith.constant 0 : index
    %11 = vector.load %arg10[%c2, %c0_11] : memref<72x64xf32, #tpu.memory_space<vmem>>, vector<4x64xf32>
    %c6 = arith.constant 6 : index
    %c0_12 = arith.constant 0 : index
    %12 = vector.load %arg10[%c6, %c0_12] : memref<72x64xf32, #tpu.memory_space<vmem>>, vector<4x64xf32>
    %c7 = arith.constant 7 : index
    %c0_13 = arith.constant 0 : index
    %13 = vector.load %arg10[%c7, %c0_13] : memref<72x64xf32, #tpu.memory_space<vmem>>, vector<4x64xf32>
    %c8 = arith.constant 8 : index
    %c0_14 = arith.constant 0 : index
    %14 = vector.load %arg10[%c8, %c0_14] : memref<72x64xf32, #tpu.memory_space<vmem>>, vector<4x64xf32>
    %c12 = arith.constant 12 : index
    %c0_15 = arith.constant 0 : index
    %15 = vector.load %arg10[%c12, %c0_15] : memref<72x64xf32, #tpu.memory_space<vmem>>, vector<4x64xf32>
    %c13 = arith.constant 13 : index
    %c0_16 = arith.constant 0 : index
    %16 = vector.load %arg10[%c13, %c0_16] : memref<72x64xf32, #tpu.memory_space<vmem>>, vector<4x64xf32>
    %c14 = arith.constant 14 : index
    %c0_17 = arith.constant 0 : index
    %17 = vector.load %arg10[%c14, %c0_17] : memref<72x64xf32, #tpu.memory_space<vmem>>, vector<4x64xf32>
    %18 = tpu.concatenate %9, %10, %11, %12, %13, %14, %15, %16, %17 in 1 : vector<4x64xf32>, vector<4x64xf32>, vector<4x64xf32>, vector<4x64xf32>, vector<4x64xf32>, vector<4x64xf32>, vector<4x64xf32>, vector<4x64xf32>, vector<4x64xf32> -> vector<4x576xf32>
    %c6_18 = arith.constant 6 : index
    %c0_19 = arith.constant 0 : index
    %19 = vector.load %arg10[%c6_18, %c0_19] : memref<72x64xf32, #tpu.memory_space<vmem>>, vector<4x64xf32>
    %c7_20 = arith.constant 7 : index
    %c0_21 = arith.constant 0 : index
    %20 = vector.load %arg10[%c7_20, %c0_21] : memref<72x64xf32, #tpu.memory_space<vmem>>, vector<4x64xf32>
    %c8_22 = arith.constant 8 : index
    %c0_23 = arith.constant 0 : index
    %21 = vector.load %arg10[%c8_22, %c0_23] : memref<72x64xf32, #tpu.memory_space<vmem>>, vector<4x64xf32>
    %c12_24 = arith.constant 12 : index
    %c0_25 = arith.constant 0 : index
    %22 = vector.load %arg10[%c12_24, %c0_25] : memref<72x64xf32, #tpu.memory_space<vmem>>, vector<4x64xf32>
    %c13_26 = arith.constant 13 : index
    %c0_27 = arith.constant 0 : index
    %23 = vector.load %arg10[%c13_26, %c0_27] : memref<72x64xf32, #tpu.memory_space<vmem>>, vector<4x64xf32>
    %c14_28 = arith.constant 14 : index
    %c0_29 = arith.constant 0 : index
    %24 = vector.load %arg10[%c14_28, %c0_29] : memref<72x64xf32, #tpu.memory_space<vmem>>, vector<4x64xf32>
    %c18 = arith.constant 18 : index
    %c0_30 = arith.constant 0 : index
    %25 = vector.load %arg10[%c18, %c0_30] : memref<72x64xf32, #tpu.memory_space<vmem>>, vector<4x64xf32>
    %c19 = arith.constant 19 : index
    %c0_31 = arith.constant 0 : index
    %26 = vector.load %arg10[%c19, %c0_31] : memref<72x64xf32, #tpu.memory_space<vmem>>, vector<4x64xf32>
    %c20 = arith.constant 20 : index
    %c0_32 = arith.constant 0 : index
    %27 = vector.load %arg10[%c20, %c0_32] : memref<72x64xf32, #tpu.memory_space<vmem>>, vector<4x64xf32>
    %28 = tpu.concatenate %19, %20, %21, %22, %23, %24, %25, %26, %27 in 1 : vector<4x64xf32>, vector<4x64xf32>, vector<4x64xf32>, vector<4x64xf32>, vector<4x64xf32>, vector<4x64xf32>, vector<4x64xf32>, vector<4x64xf32>, vector<4x64xf32> -> vector<4x576xf32>
    %c12_33 = arith.constant 12 : index
    %c0_34 = arith.constant 0 : index
    %29 = vector.load %arg10[%c12_33, %c0_34] : memref<72x64xf32, #tpu.memory_space<vmem>>, vector<4x64xf32>
    %c13_35 = arith.constant 13 : index
    %c0_36 = arith.constant 0 : index
    %30 = vector.load %arg10[%c13_35, %c0_36] : memref<72x64xf32, #tpu.memory_space<vmem>>, vector<4x64xf32>
    %c14_37 = arith.constant 14 : index
    %c0_38 = arith.constant 0 : index
    %31 = vector.load %arg10[%c14_37, %c0_38] : memref<72x64xf32, #tpu.memory_space<vmem>>, vector<4x64xf32>
    %c18_39 = arith.constant 18 : index
    %c0_40 = arith.constant 0 : index
    %32 = vector.load %arg10[%c18_39, %c0_40] : memref<72x64xf32, #tpu.memory_space<vmem>>, vector<4x64xf32>
    %c19_41 = arith.constant 19 : index
    %c0_42 = arith.constant 0 : index
    %33 = vector.load %arg10[%c19_41, %c0_42] : memref<72x64xf32, #tpu.memory_space<vmem>>, vector<4x64xf32>
    %c20_43 = arith.constant 20 : index
    %c0_44 = arith.constant 0 : index
    %34 = vector.load %arg10[%c20_43, %c0_44] : memref<72x64xf32, #tpu.memory_space<vmem>>, vector<4x64xf32>
    %c24 = arith.constant 24 : index
    %c0_45 = arith.constant 0 : index
    %35 = vector.load %arg10[%c24, %c0_45] : memref<72x64xf32, #tpu.memory_space<vmem>>, vector<4x64xf32>
    %c25 = arith.constant 25 : index
    %c0_46 = arith.constant 0 : index
    %36 = vector.load %arg10[%c25, %c0_46] : memref<72x64xf32, #tpu.memory_space<vmem>>, vector<4x64xf32>
    %c26 = arith.constant 26 : index
    %c0_47 = arith.constant 0 : index
    %37 = vector.load %arg10[%c26, %c0_47] : memref<72x64xf32, #tpu.memory_space<vmem>>, vector<4x64xf32>
    %38 = tpu.concatenate %29, %30, %31, %32, %33, %34, %35, %36, %37 in 1 : vector<4x64xf32>, vector<4x64xf32>, vector<4x64xf32>, vector<4x64xf32>, vector<4x64xf32>, vector<4x64xf32>, vector<4x64xf32>, vector<4x64xf32>, vector<4x64xf32> -> vector<4x576xf32>
    %c18_48 = arith.constant 18 : index
    %c0_49 = arith.constant 0 : index
    %39 = vector.load %arg10[%c18_48, %c0_49] : memref<72x64xf32, #tpu.memory_space<vmem>>, vector<4x64xf32>
    %c19_50 = arith.constant 19 : index
    %c0_51 = arith.constant 0 : index
    %40 = vector.load %arg10[%c19_50, %c0_51] : memref<72x64xf32, #tpu.memory_space<vmem>>, vector<4x64xf32>
    %c20_52 = arith.constant 20 : index
    %c0_53 = arith.constant 0 : index
    %41 = vector.load %arg10[%c20_52, %c0_53] : memref<72x64xf32, #tpu.memory_space<vmem>>, vector<4x64xf32>
    %c24_54 = arith.constant 24 : index
    %c0_55 = arith.constant 0 : index
    %42 = vector.load %arg10[%c24_54, %c0_55] : memref<72x64xf32, #tpu.memory_space<vmem>>, vector<4x64xf32>
    %c25_56 = arith.constant 25 : index
    %c0_57 = arith.constant 0 : index
    %43 = vector.load %arg10[%c25_56, %c0_57] : memref<72x64xf32, #tpu.memory_space<vmem>>, vector<4x64xf32>
    %c26_58 = arith.constant 26 : index
    %c0_59 = arith.constant 0 : index
    %44 = vector.load %arg10[%c26_58, %c0_59] : memref<72x64xf32, #tpu.memory_space<vmem>>, vector<4x64xf32>
    %c30 = arith.constant 30 : index
    %c0_60 = arith.constant 0 : index
    %45 = vector.load %arg10[%c30, %c0_60] : memref<72x64xf32, #tpu.memory_space<vmem>>, vector<4x64xf32>
    %c31 = arith.constant 31 : index
    %c0_61 = arith.constant 0 : index
    %46 = vector.load %arg10[%c31, %c0_61] : memref<72x64xf32, #tpu.memory_space<vmem>>, vector<4x64xf32>
    %c32 = arith.constant 32 : index
    %c0_62 = arith.constant 0 : index
    %47 = vector.load %arg10[%c32, %c0_62] : memref<72x64xf32, #tpu.memory_space<vmem>>, vector<4x64xf32>
    %48 = tpu.concatenate %39, %40, %41, %42, %43, %44, %45, %46, %47 in 1 : vector<4x64xf32>, vector<4x64xf32>, vector<4x64xf32>, vector<4x64xf32>, vector<4x64xf32>, vector<4x64xf32>, vector<4x64xf32>, vector<4x64xf32>, vector<4x64xf32> -> vector<4x576xf32>
    %c36 = arith.constant 36 : index
    %c0_63 = arith.constant 0 : index
    %49 = vector.load %arg10[%c36, %c0_63] : memref<72x64xf32, #tpu.memory_space<vmem>>, vector<4x64xf32>
    %c37 = arith.constant 37 : index
    %c0_64 = arith.constant 0 : index
    %50 = vector.load %arg10[%c37, %c0_64] : memref<72x64xf32, #tpu.memory_space<vmem>>, vector<4x64xf32>
    %c38 = arith.constant 38 : index
    %c0_65 = arith.constant 0 : index
    %51 = vector.load %arg10[%c38, %c0_65] : memref<72x64xf32, #tpu.memory_space<vmem>>, vector<4x64xf32>
    %c42 = arith.constant 42 : index
    %c0_66 = arith.constant 0 : index
    %52 = vector.load %arg10[%c42, %c0_66] : memref<72x64xf32, #tpu.memory_space<vmem>>, vector<4x64xf32>
    %c43 = arith.constant 43 : index
    %c0_67 = arith.constant 0 : index
    %53 = vector.load %arg10[%c43, %c0_67] : memref<72x64xf32, #tpu.memory_space<vmem>>, vector<4x64xf32>
    %c44 = arith.constant 44 : index
    %c0_68 = arith.constant 0 : index
    %54 = vector.load %arg10[%c44, %c0_68] : memref<72x64xf32, #tpu.memory_space<vmem>>, vector<4x64xf32>
    %c48 = arith.constant 48 : index
    %c0_69 = arith.constant 0 : index
    %55 = vector.load %arg10[%c48, %c0_69] : memref<72x64xf32, #tpu.memory_space<vmem>>, vector<4x64xf32>
    %c49 = arith.constant 49 : index
    %c0_70 = arith.constant 0 : index
    %56 = vector.load %arg10[%c49, %c0_70] : memref<72x64xf32, #tpu.memory_space<vmem>>, vector<4x64xf32>
    %c50 = arith.constant 50 : index
    %c0_71 = arith.constant 0 : index
    %57 = vector.load %arg10[%c50, %c0_71] : memref<72x64xf32, #tpu.memory_space<vmem>>, vector<4x64xf32>
    %58 = tpu.concatenate %49, %50, %51, %52, %53, %54, %55, %56, %57 in 1 : vector<4x64xf32>, vector<4x64xf32>, vector<4x64xf32>, vector<4x64xf32>, vector<4x64xf32>, vector<4x64xf32>, vector<4x64xf32>, vector<4x64xf32>, vector<4x64xf32> -> vector<4x576xf32>
    %c42_72 = arith.constant 42 : index
    %c0_73 = arith.constant 0 : index
    %59 = vector.load %arg10[%c42_72, %c0_73] : memref<72x64xf32, #tpu.memory_space<vmem>>, vector<4x64xf32>
    %c43_74 = arith.constant 43 : index
    %c0_75 = arith.constant 0 : index
    %60 = vector.load %arg10[%c43_74, %c0_75] : memref<72x64xf32, #tpu.memory_space<vmem>>, vector<4x64xf32>
    %c44_76 = arith.constant 44 : index
    %c0_77 = arith.constant 0 : index
    %61 = vector.load %arg10[%c44_76, %c0_77] : memref<72x64xf32, #tpu.memory_space<vmem>>, vector<4x64xf32>
    %c48_78 = arith.constant 48 : index
    %c0_79 = arith.constant 0 : index
    %62 = vector.load %arg10[%c48_78, %c0_79] : memref<72x64xf32, #tpu.memory_space<vmem>>, vector<4x64xf32>
    %c49_80 = arith.constant 49 : index
    %c0_81 = arith.constant 0 : index
    %63 = vector.load %arg10[%c49_80, %c0_81] : memref<72x64xf32, #tpu.memory_space<vmem>>, vector<4x64xf32>
    %c50_82 = arith.constant 50 : index
    %c0_83 = arith.constant 0 : index
    %64 = vector.load %arg10[%c50_82, %c0_83] : memref<72x64xf32, #tpu.memory_space<vmem>>, vector<4x64xf32>
    %c54 = arith.constant 54 : index
    %c0_84 = arith.constant 0 : index
    %65 = vector.load %arg10[%c54, %c0_84] : memref<72x64xf32, #tpu.memory_space<vmem>>, vector<4x64xf32>
    %c55 = arith.constant 55 : index
    %c0_85 = arith.constant 0 : index
    %66 = vector.load %arg10[%c55, %c0_85] : memref<72x64xf32, #tpu.memory_space<vmem>>, vector<4x64xf32>
    %c56 = arith.constant 56 : index
    %c0_86 = arith.constant 0 : index
    %67 = vector.load %arg10[%c56, %c0_86] : memref<72x64xf32, #tpu.memory_space<vmem>>, vector<4x64xf32>
    %68 = tpu.concatenate %59, %60, %61, %62, %63, %64, %65, %66, %67 in 1 : vector<4x64xf32>, vector<4x64xf32>, vector<4x64xf32>, vector<4x64xf32>, vector<4x64xf32>, vector<4x64xf32>, vector<4x64xf32>, vector<4x64xf32>, vector<4x64xf32> -> vector<4x576xf32>
    %c48_87 = arith.constant 48 : index
    %c0_88 = arith.constant 0 : index
    %69 = vector.load %arg10[%c48_87, %c0_88] : memref<72x64xf32, #tpu.memory_space<vmem>>, vector<4x64xf32>
    %c49_89 = arith.constant 49 : index
    %c0_90 = arith.constant 0 : index
    %70 = vector.load %arg10[%c49_89, %c0_90] : memref<72x64xf32, #tpu.memory_space<vmem>>, vector<4x64xf32>
    %c50_91 = arith.constant 50 : index
    %c0_92 = arith.constant 0 : index
    %71 = vector.load %arg10[%c50_91, %c0_92] : memref<72x64xf32, #tpu.memory_space<vmem>>, vector<4x64xf32>
    %c54_93 = arith.constant 54 : index
    %c0_94 = arith.constant 0 : index
    %72 = vector.load %arg10[%c54_93, %c0_94] : memref<72x64xf32, #tpu.memory_space<vmem>>, vector<4x64xf32>
    %c55_95 = arith.constant 55 : index
    %c0_96 = arith.constant 0 : index
    %73 = vector.load %arg10[%c55_95, %c0_96] : memref<72x64xf32, #tpu.memory_space<vmem>>, vector<4x64xf32>
    %c56_97 = arith.constant 56 : index
    %c0_98 = arith.constant 0 : index
    %74 = vector.load %arg10[%c56_97, %c0_98] : memref<72x64xf32, #tpu.memory_space<vmem>>, vector<4x64xf32>
    %c60 = arith.constant 60 : index
    %c0_99 = arith.constant 0 : index
    %75 = vector.load %arg10[%c60, %c0_99] : memref<72x64xf32, #tpu.memory_space<vmem>>, vector<4x64xf32>
    %c61 = arith.constant 61 : index
    %c0_100 = arith.constant 0 : index
    %76 = vector.load %arg10[%c61, %c0_100] : memref<72x64xf32, #tpu.memory_space<vmem>>, vector<4x64xf32>
    %c62 = arith.constant 62 : index
    %c0_101 = arith.constant 0 : index
    %77 = vector.load %arg10[%c62, %c0_101] : memref<72x64xf32, #tpu.memory_space<vmem>>, vector<4x64xf32>
    %78 = tpu.concatenate %69, %70, %71, %72, %73, %74, %75, %76, %77 in 1 : vector<4x64xf32>, vector<4x64xf32>, vector<4x64xf32>, vector<4x64xf32>, vector<4x64xf32>, vector<4x64xf32>, vector<4x64xf32>, vector<4x64xf32>, vector<4x64xf32> -> vector<4x576xf32>
    %c54_102 = arith.constant 54 : index
    %c0_103 = arith.constant 0 : index
    %79 = vector.load %arg10[%c54_102, %c0_103] : memref<72x64xf32, #tpu.memory_space<vmem>>, vector<4x64xf32>
    %c55_104 = arith.constant 55 : index
    %c0_105 = arith.constant 0 : index
    %80 = vector.load %arg10[%c55_104, %c0_105] : memref<72x64xf32, #tpu.memory_space<vmem>>, vector<4x64xf32>
    %c56_106 = arith.constant 56 : index
    %c0_107 = arith.constant 0 : index
    %81 = vector.load %arg10[%c56_106, %c0_107] : memref<72x64xf32, #tpu.memory_space<vmem>>, vector<4x64xf32>
    %c60_108 = arith.constant 60 : index
    %c0_109 = arith.constant 0 : index
    %82 = vector.load %arg10[%c60_108, %c0_109] : memref<72x64xf32, #tpu.memory_space<vmem>>, vector<4x64xf32>
    %c61_110 = arith.constant 61 : index
    %c0_111 = arith.constant 0 : index
    %83 = vector.load %arg10[%c61_110, %c0_111] : memref<72x64xf32, #tpu.memory_space<vmem>>, vector<4x64xf32>
    %c62_112 = arith.constant 62 : index
    %c0_113 = arith.constant 0 : index
    %84 = vector.load %arg10[%c62_112, %c0_113] : memref<72x64xf32, #tpu.memory_space<vmem>>, vector<4x64xf32>
    %c66 = arith.constant 66 : index
    %c0_114 = arith.constant 0 : index
    %85 = vector.load %arg10[%c66, %c0_114] : memref<72x64xf32, #tpu.memory_space<vmem>>, vector<4x64xf32>
    %c67 = arith.constant 67 : index
    %c0_115 = arith.constant 0 : index
    %86 = vector.load %arg10[%c67, %c0_115] : memref<72x64xf32, #tpu.memory_space<vmem>>, vector<4x64xf32>
    %c68 = arith.constant 68 : index
    %c0_116 = arith.constant 0 : index
    %87 = vector.load %arg10[%c68, %c0_116] : memref<72x64xf32, #tpu.memory_space<vmem>>, vector<4x64xf32>
    %88 = tpu.concatenate %79, %80, %81, %82, %83, %84, %85, %86, %87 in 1 : vector<4x64xf32>, vector<4x64xf32>, vector<4x64xf32>, vector<4x64xf32>, vector<4x64xf32>, vector<4x64xf32>, vector<4x64xf32>, vector<4x64xf32>, vector<4x64xf32> -> vector<4x576xf32>
    %89 = tpu.concatenate %18, %28, %38, %48, %58, %68, %78, %88 in 0 : vector<4x576xf32>, vector<4x576xf32>, vector<4x576xf32>, vector<4x576xf32>, vector<4x576xf32>, vector<4x576xf32>, vector<4x576xf32>, vector<4x576xf32> -> vector<32x576xf32>
    %c0_117 = arith.constant 0 : index
    %c0_118 = arith.constant 0 : index
    %90 = vector.load %arg3[%c0_117, %c0_118] : memref<576x64xf32, #tpu.memory_space<vmem>>, vector<576x64xf32>
    %cst_119 = arith.constant dense<0.000000e+00> : vector<32x64xf32>
    %91 = tpu.matmul %89, %90, %cst_119 {dimension_numbers = #tpu.dot_dimension_numbers<[1], [0], [0], [1], [0, 0, 1, 1], [], []>} : vector<32x576xf32>, vector<576x64xf32>, vector<32x64xf32> -> vector<32x64xf32>
    %c0_120 = arith.constant 0 : index
    %c0_121 = arith.constant 0 : index
    %92 = vector.load %arg4[%c0_120, %c0_121] : memref<1x64xf32, #tpu.memory_space<vmem>>, vector<1x64xf32>
    %93 = vector.broadcast %92 : vector<1x64xf32> to vector<32x64xf32>
    %94 = arith.addf %91, %93 : vector<32x64xf32>
    %cst_122 = arith.constant 0.000000e+00 : f32
    %95 = vector.broadcast %cst_122 : f32 to vector<32x64xf32>
    %96 = arith.maximumf %94, %95 : vector<32x64xf32>
    %97 = vector.extract_strided_slice %96 {offsets = [0, 0], sizes = [1, 64], strides = [1, 1]} : vector<32x64xf32> to vector<1x64xf32>
    %98 = vector.extract_strided_slice %96 {offsets = [1, 0], sizes = [1, 64], strides = [1, 1]} : vector<32x64xf32> to vector<1x64xf32>
    %99 = vector.extract_strided_slice %96 {offsets = [2, 0], sizes = [1, 64], strides = [1, 1]} : vector<32x64xf32> to vector<1x64xf32>
    %100 = vector.extract_strided_slice %96 {offsets = [3, 0], sizes = [1, 64], strides = [1, 1]} : vector<32x64xf32> to vector<1x64xf32>
    %101 = vector.extract_strided_slice %96 {offsets = [4, 0], sizes = [1, 64], strides = [1, 1]} : vector<32x64xf32> to vector<1x64xf32>
    %102 = vector.extract_strided_slice %96 {offsets = [5, 0], sizes = [1, 64], strides = [1, 1]} : vector<32x64xf32> to vector<1x64xf32>
    %103 = vector.extract_strided_slice %96 {offsets = [6, 0], sizes = [1, 64], strides = [1, 1]} : vector<32x64xf32> to vector<1x64xf32>
    %104 = vector.extract_strided_slice %96 {offsets = [7, 0], sizes = [1, 64], strides = [1, 1]} : vector<32x64xf32> to vector<1x64xf32>
    %105 = vector.extract_strided_slice %96 {offsets = [8, 0], sizes = [1, 64], strides = [1, 1]} : vector<32x64xf32> to vector<1x64xf32>
    %106 = vector.extract_strided_slice %96 {offsets = [9, 0], sizes = [1, 64], strides = [1, 1]} : vector<32x64xf32> to vector<1x64xf32>
    %107 = vector.extract_strided_slice %96 {offsets = [10, 0], sizes = [1, 64], strides = [1, 1]} : vector<32x64xf32> to vector<1x64xf32>
    %108 = vector.extract_strided_slice %96 {offsets = [11, 0], sizes = [1, 64], strides = [1, 1]} : vector<32x64xf32> to vector<1x64xf32>
    %109 = vector.extract_strided_slice %96 {offsets = [12, 0], sizes = [1, 64], strides = [1, 1]} : vector<32x64xf32> to vector<1x64xf32>
    %110 = vector.extract_strided_slice %96 {offsets = [13, 0], sizes = [1, 64], strides = [1, 1]} : vector<32x64xf32> to vector<1x64xf32>
    %111 = vector.extract_strided_slice %96 {offsets = [14, 0], sizes = [1, 64], strides = [1, 1]} : vector<32x64xf32> to vector<1x64xf32>
    %112 = vector.extract_strided_slice %96 {offsets = [15, 0], sizes = [1, 64], strides = [1, 1]} : vector<32x64xf32> to vector<1x64xf32>
    %113 = tpu.concatenate %97, %98, %99, %100, %101, %102, %103, %104, %105, %106, %107, %108, %109, %110, %111, %112 in 1 : vector<1x64xf32>, vector<1x64xf32>, vector<1x64xf32>, vector<1x64xf32>, vector<1x64xf32>, vector<1x64xf32>, vector<1x64xf32>, vector<1x64xf32>, vector<1x64xf32>, vector<1x64xf32>, vector<1x64xf32>, vector<1x64xf32>, vector<1x64xf32>, vector<1x64xf32>, vector<1x64xf32>, vector<1x64xf32> -> vector<1x1024xf32>
    %114 = vector.extract_strided_slice %96 {offsets = [16, 0], sizes = [1, 64], strides = [1, 1]} : vector<32x64xf32> to vector<1x64xf32>
    %115 = vector.extract_strided_slice %96 {offsets = [17, 0], sizes = [1, 64], strides = [1, 1]} : vector<32x64xf32> to vector<1x64xf32>
    %116 = vector.extract_strided_slice %96 {offsets = [18, 0], sizes = [1, 64], strides = [1, 1]} : vector<32x64xf32> to vector<1x64xf32>
    %117 = vector.extract_strided_slice %96 {offsets = [19, 0], sizes = [1, 64], strides = [1, 1]} : vector<32x64xf32> to vector<1x64xf32>
    %118 = vector.extract_strided_slice %96 {offsets = [20, 0], sizes = [1, 64], strides = [1, 1]} : vector<32x64xf32> to vector<1x64xf32>
    %119 = vector.extract_strided_slice %96 {offsets = [21, 0], sizes = [1, 64], strides = [1, 1]} : vector<32x64xf32> to vector<1x64xf32>
    %120 = vector.extract_strided_slice %96 {offsets = [22, 0], sizes = [1, 64], strides = [1, 1]} : vector<32x64xf32> to vector<1x64xf32>
    %121 = vector.extract_strided_slice %96 {offsets = [23, 0], sizes = [1, 64], strides = [1, 1]} : vector<32x64xf32> to vector<1x64xf32>
    %122 = vector.extract_strided_slice %96 {offsets = [24, 0], sizes = [1, 64], strides = [1, 1]} : vector<32x64xf32> to vector<1x64xf32>
    %123 = vector.extract_strided_slice %96 {offsets = [25, 0], sizes = [1, 64], strides = [1, 1]} : vector<32x64xf32> to vector<1x64xf32>
    %124 = vector.extract_strided_slice %96 {offsets = [26, 0], sizes = [1, 64], strides = [1, 1]} : vector<32x64xf32> to vector<1x64xf32>
    %125 = vector.extract_strided_slice %96 {offsets = [27, 0], sizes = [1, 64], strides = [1, 1]} : vector<32x64xf32> to vector<1x64xf32>
    %126 = vector.extract_strided_slice %96 {offsets = [28, 0], sizes = [1, 64], strides = [1, 1]} : vector<32x64xf32> to vector<1x64xf32>
    %127 = vector.extract_strided_slice %96 {offsets = [29, 0], sizes = [1, 64], strides = [1, 1]} : vector<32x64xf32> to vector<1x64xf32>
    %128 = vector.extract_strided_slice %96 {offsets = [30, 0], sizes = [1, 64], strides = [1, 1]} : vector<32x64xf32> to vector<1x64xf32>
    %129 = vector.extract_strided_slice %96 {offsets = [31, 0], sizes = [1, 64], strides = [1, 1]} : vector<32x64xf32> to vector<1x64xf32>
    %130 = tpu.concatenate %114, %115, %116, %117, %118, %119, %120, %121, %122, %123, %124, %125, %126, %127, %128, %129 in 1 : vector<1x64xf32>, vector<1x64xf32>, vector<1x64xf32>, vector<1x64xf32>, vector<1x64xf32>, vector<1x64xf32>, vector<1x64xf32>, vector<1x64xf32>, vector<1x64xf32>, vector<1x64xf32>, vector<1x64xf32>, vector<1x64xf32>, vector<1x64xf32>, vector<1x64xf32>, vector<1x64xf32>, vector<1x64xf32> -> vector<1x1024xf32>
    %131 = tpu.concatenate %113, %130 in 0 : vector<1x1024xf32>, vector<1x1024xf32> -> vector<2x1024xf32>
    tpu.wait_dma2 semaphore(%arg12 : memref<!tpu.dma_semaphore, #tpu.memory_space<semaphore_mem>>) src(%arg5 : memref<1024x512xbf16, #tpu.memory_space<any>>) dst(%arg11 : memref<1024x512xbf16, #tpu.memory_space<vmem>>)
    %132 = arith.truncf %131 : vector<2x1024xf32> to vector<2x1024xbf16>
    %c0_123 = arith.constant 0 : index
    %c0_124 = arith.constant 0 : index
    %133 = vector.load %arg11[%c0_123, %c0_124] : memref<1024x512xbf16, #tpu.memory_space<vmem>>, vector<1024x512xbf16>
    %cst_125 = arith.constant dense<0.000000e+00> : vector<2x512xf32>
    %134 = tpu.matmul %132, %133, %cst_125 {dimension_numbers = #tpu.dot_dimension_numbers<[1], [0], [0], [1], [0, 0, 1, 1], [], []>} : vector<2x1024xbf16>, vector<1024x512xbf16>, vector<2x512xf32> -> vector<2x512xf32>
    %c0_126 = arith.constant 0 : index
    %c0_127 = arith.constant 0 : index
    %135 = vector.load %arg6[%c0_126, %c0_127] : memref<1x512xf32, #tpu.memory_space<vmem>>, vector<1x512xf32>
    %136 = vector.broadcast %135 : vector<1x512xf32> to vector<2x512xf32>
    %137 = arith.addf %134, %136 : vector<2x512xf32>
    %cst_128 = arith.constant 0.000000e+00 : f32
    %138 = vector.broadcast %cst_128 : f32 to vector<2x512xf32>
    %139 = arith.maximumf %137, %138 : vector<2x512xf32>
    %140 = arith.truncf %139 : vector<2x512xf32> to vector<2x512xbf16>
    %c0_129 = arith.constant 0 : index
    %c0_130 = arith.constant 0 : index
    %141 = vector.load %arg7[%c0_129, %c0_130] : memref<512x128xbf16, #tpu.memory_space<vmem>>, vector<512x128xbf16>
    %cst_131 = arith.constant dense<0.000000e+00> : vector<2x128xf32>
    %142 = tpu.matmul %140, %141, %cst_131 {dimension_numbers = #tpu.dot_dimension_numbers<[1], [0], [0], [1], [0, 0, 1, 1], [], []>} : vector<2x512xbf16>, vector<512x128xbf16>, vector<2x128xf32> -> vector<2x128xf32>
    %c0_132 = arith.constant 0 : index
    %c0_133 = arith.constant 0 : index
    %143 = vector.load %arg8[%c0_132, %c0_133] : memref<1x128xf32, #tpu.memory_space<vmem>>, vector<1x128xf32>
    %144 = vector.broadcast %143 : vector<1x128xf32> to vector<2x128xf32>
    %145 = arith.addf %142, %144 : vector<2x128xf32>
    %cst_134 = arith.constant dense<0xFF800000> : vector<2xf32>
    %146 = vector.multi_reduction <maximumf>, %145, %cst_134 [1] : vector<2x128xf32> to vector<2xf32>
    %147 = vector.shape_cast %146 : vector<2xf32> to vector<2x1xf32>
    %148 = vector.broadcast %147 : vector<2x1xf32> to vector<2x128xf32>
    %149 = arith.subf %145, %148 : vector<2x128xf32>
    %150 = math.exp %149 : vector<2x128xf32>
    %cst_135 = arith.constant dense<0.000000e+00> : vector<2xf32>
    %151 = vector.multi_reduction <add>, %150, %cst_135 [1] : vector<2x128xf32> to vector<2xf32>
    %152 = vector.shape_cast %151 : vector<2xf32> to vector<2x1xf32>
    %153 = tpu.reciprocal %152 {approx = true} : vector<2x1xf32> -> vector<2x1xf32>
    %154 = arith.mulf %152, %153 : vector<2x1xf32>
    %cst_136 = arith.constant 2.000000e+00 : f32
    %155 = vector.broadcast %cst_136 : f32 to vector<2x1xf32>
    %156 = arith.subf %155, %154 : vector<2x1xf32>
    %157 = arith.mulf %153, %156 : vector<2x1xf32>
    %158 = vector.broadcast %157 : vector<2x1xf32> to vector<2x128xf32>
    %159 = arith.mulf %150, %158 : vector<2x128xf32>
    %c0_137 = arith.constant 0 : index
    %c0_138 = arith.constant 0 : index
    %160 = vector.load %arg9[%c0_137, %c0_138] : memref<2x128xf32, #tpu.memory_space<vmem>>, vector<2x128xf32>
    tpu.vector_store %arg9[%c0_137, %c0_138], %159 {strides = array<i32>} : memref<2x128xf32, #tpu.memory_space<vmem>>, vector<2x128xf32>,
    return
  }
}

</mosaic_0001>

<llo_original>
// kernel: actor_forward.1
$region0: #{actor_forward.1}
  #allocation0 [shape = 'u32[]', space=smem, size = 0x4, offset = 0x4, fixed_abs, tag = 'smem constant byte address 0x4 - core index']
  #allocation1 [shape = 'u32[144,128]{1,0:T(1,128)}', space=vmem, size = 0x12000, scoped, tag = 'internal scratch']
  #allocation2 [shape = 'f32[72,64]{1,0:T(8,128)}', space=vmem, size = 0x9000, scoped, tag = 'scratch operand']
  #allocation3 [shape = 'bf16[1024,512]{1,0:T(8,128)(2,1)}', space=vmem, size = 0x100000, scoped, tag = 'scratch operand']
  #allocation4 [shape = 's32[1]{0}', space=sflag, size = 0x4, scoped, tag = 'scratch operand']
  #allocation7 [shape = 's32[]', space=sflag, size = 0x4, offset = 0, fixed_abs, tag = 'sflag constant byte address 0x0 - dummy sync flag']
  %s0 = inlined_call_operand.vmem [shape: f32[72,18], index: 0, kind: input, shape index: {}]
  %s1 = inlined_call_operand.vmem [shape: f32[18,64], index: 1, kind: input, shape index: {}]
  %s2 = inlined_call_operand.vmem [shape: f32[1,64], index: 2, kind: input, shape index: {}]
  %s3 = inlined_call_operand.vmem [shape: f32[576,64], index: 3, kind: input, shape index: {}]
  %s4 = inlined_call_operand.vmem [shape: f32[1,64], index: 4, kind: input, shape index: {}]
  %s5 = inlined_call_operand.vmem [shape: bf16[1024,512], index: 5, kind: input, shape index: {}]
  %s6 = inlined_call_operand.vmem [shape: f32[1,512], index: 6, kind: input, shape index: {}]
  %s7 = inlined_call_operand.vmem [shape: bf16[512,128], index: 7, kind: input, shape index: {}]
  %s8 = inlined_call_operand.vmem [shape: f32[1,128], index: 8, kind: input, shape index: {}]
  %s9 = inlined_call_operand.hbm [shape: f32[2,128], index: 9, kind: output, shape index: {}]
  %s10 = sld [smem:[#allocation0]]
  $region76: #{actor_forward.1} parent=0
    _
  %s12 = ssub.s32 1, %s10
  %s13 = scalar_select 0, %s12, %s10
  $region1: #{actor_forward.1} parent=0
    #allocation5 [shape = 'u8[1024]{0}', space=vmem, size = 0x400, scoped, tag = 'output window, operand 0, single buffered']
    #allocation6 [shape = 's32[1]{0}', space=sflag, size = 0x4, scoped, tag = 'scoped memory for actor_forward.1']
    %14 = vsyncpa [#allocation6], 0
    // Predicated region
    $region2: #{actor_forward.1} parent=1 // pred_check
      _
    $region3: #{actor_forward.1} parent=1 // pred_check_branch
      %16 = sbr.rel (0) target = $region5
    $region4: #{actor_forward.1} parent=1 // pred_region
      _
    $region5: #{actor_forward.1} parent=1 // pred_fallthru
      _
    // Predicated region
    $region6: #{actor_forward.1} parent=1 // pred_check
      _
    $region7: #{actor_forward.1} parent=1 // pred_check_branch
      %18 = sbr.rel (0) target = $region9
    $region8: #{actor_forward.1} parent=1 // pred_region
      _
    $region9: #{actor_forward.1} parent=1 // pred_fallthru
      _
    // Predicated region
    $region10: #{actor_forward.1} parent=1 // pred_check
      _
    $region11: #{actor_forward.1} parent=1 // pred_check_branch
      %20 = sbr.rel (0) target = $region13
    $region12: #{actor_forward.1} parent=1 // pred_region
      _
    $region13: #{actor_forward.1} parent=1 // pred_fallthru
      _
    // Predicated region
    $region14: #{actor_forward.1} parent=1 // pred_check
      _
    $region15: #{actor_forward.1} parent=1 // pred_check_branch
      %22 = sbr.rel (0) target = $region17
    $region16: #{actor_forward.1} parent=1 // pred_region
      _
    $region17: #{actor_forward.1} parent=1 // pred_fallthru
      _
    // Predicated region
    $region18: #{actor_forward.1} parent=1 // pred_check
      _
    $region19: #{actor_forward.1} parent=1 // pred_check_branch
      %24 = sbr.rel (0) target = $region21
    $region20: #{actor_forward.1} parent=1 // pred_region
      _
    $region21: #{actor_forward.1} parent=1 // pred_fallthru
      _
    // Predicated region
    $region22: #{actor_forward.1} parent=1 // pred_check
      _
    $region23: #{actor_forward.1} parent=1 // pred_check_branch
      %26 = sbr.rel (0) target = $region25
    $region24: #{actor_forward.1} parent=1 // pred_region
      _
    $region25: #{actor_forward.1} parent=1 // pred_fallthru
      _
    // Predicated region
    $region26: #{actor_forward.1} parent=1 // pred_check
      _
    $region27: #{actor_forward.1} parent=1 // pred_check_branch
      %28 = sbr.rel (0) target = $region29
    $region28: #{actor_forward.1} parent=1 // pred_region
      _
    $region29: #{actor_forward.1} parent=1 // pred_fallthru
      _
    // Predicated region
    $region30: #{actor_forward.1} parent=1 // pred_check
      _
    $region31: #{actor_forward.1} parent=1 // pred_check_branch
      %30 = sbr.rel (0) target = $region33
    $region32: #{actor_forward.1} parent=1 // pred_region
      _
    $region33: #{actor_forward.1} parent=1 // pred_fallthru
      _
    %p33 = scmp.lt.u32.totalorder 2048, 8
    %p34 = pneg %p33
    // Predicated region
    $region34: #{actor_forward.1} parent=1 // pred_check
      _
    $region35: #{actor_forward.1} parent=1 // pred_check_branch
      %36 = sbr.rel (%p33) target = $region37
    $region36: #{actor_forward.1} parent=1 // pred_region
      %s52 = sand.u32 2048, 7
      %p53 = scmp.eq.s32.totalorder %s52, 0
      // Predicated region
      $region49: #{actor_forward.1} parent=36 // pred_check
        %p54 = pneg %p53
      $region50: #{actor_forward.1} parent=36 // pred_check_branch
        %56 = sbr.rel (%p54) target = $region52
      $region51: #{actor_forward.1} parent=36 // pred_region
        loop: start=0, step=1, limit=1
        $region53: #{actor_forward.1} parent=51 // loop_pre_header
          _
        $region54: #{actor_forward.1} parent=51 // loop_header
          %s58 = sphi 0, %s62
          %p59 = scmp.ge.s32.totalorder %s58, 1
          %s63 = sphi %s5, %s5
          %s64 = sphi [#allocation3], [#allocation3]
        $region55: #{actor_forward.1} parent=51 // loop_header_branch
          %61 = sbr.rel (%p59) target = $region59
        $region56: #{actor_forward.1} parent=51 // loop_body
          %v65 = vld [vmem:[%s63] sm:$0xff]
          %66 = vst [vmem:[%s64] sm:$0xff] %v65
          %v67 = vld [vmem:[%s63 + $0x8] sm:$0xff]
          %68 = vst [vmem:[%s64 + $0x8] sm:$0xff] %v67
          %v69 = vld [vmem:[%s63 + $0x10] sm:$0xff]
          %70 = vst [vmem:[%s64 + $0x10] sm:$0xff] %v69
          %v71 = vld [vmem:[%s63 + $0x18] sm:$0xff]
          %72 = vst [vmem:[%s64 + $0x18] sm:$0xff] %v71
          %v73 = vld [vmem:[%s63 + $0x20] sm:$0xff]
          %74 = vst [vmem:[%s64 + $0x20] sm:$0xff] %v73
          %v75 = vld [vmem:[%s63 + $0x28] sm:$0xff]
          %76 = vst [vmem:[%s64 + $0x28] sm:$0xff] %v75
          %v77 = vld [vmem:[%s63 + $0x30] sm:$0xff]
          %78 = vst [vmem:[%s64 + $0x30] sm:$0xff] %v77
          %v79 = vld [vmem:[%s63 + $0x38] sm:$0xff]
          %80 = vst [vmem:[%s64 + $0x38] sm:$0xff] %v79
          %v81 = vld [vmem:[%s63 + $0x40] sm:$0xff]
          %82 = vst [vmem:[%s64 + $0x40] sm:$0xff] %v81
          %v83 = vld [vmem:[%s63 + $0x48] sm:$0xff]
          %84 = vst [vmem:[%s64 + $0x48] sm:$0xff] %v83
          %v85 = vld [vmem:[%s63 + $0x50] sm:$0xff]
          %86 = vst [vmem:[%s64 + $0x50] sm:$0xff] %v85
          %v87 = vld [vmem:[%s63 + $0x58] sm:$0xff]
          %88 = vst [vmem:[%s64 + $0x58] sm:$0xff] %v87
          %v89 = vld [vmem:[%s63 + $0x60] sm:$0xff]
          %90 = vst [vmem:[%s64 + $0x60] sm:$0xff] %v89
          %v91 = vld [vmem:[%s63 + $0x68] sm:$0xff]
          %92 = vst [vmem:[%s64 + $0x68] sm:$0xff] %v91
          %v93 = vld [vmem:[%s63 + $0x70] sm:$0xff]
          %94 = vst [vmem:[%s64 + $0x70] sm:$0xff] %v93
          %v95 = vld [vmem:[%s63 + $0x78] sm:$0xff]
          %96 = vst [vmem:[%s64 + $0x78] sm:$0xff] %v95
          %v97 = vld [vmem:[%s63 + $0x80] sm:$0xff]
          %98 = vst [vmem:[%s64 + $0x80] sm:$0xff] %v97
          %v99 = vld [vmem:[%s63 + $0x88] sm:$0xff]
          %100 = vst [vmem:[%s64 + $0x88] sm:$0xff] %v99
          %v101 = vld [vmem:[%s63 + $0x90] sm:$0xff]
          %102 = vst [vmem:[%s64 + $0x90] sm:$0xff] %v101
          %v103 = vld [vmem:[%s63 + $0x98] sm:$0xff]
          %104 = vst [vmem:[%s64 + $0x98] sm:$0xff] %v103
          %v105 = vld [vmem:[%s63 + $0xa0] sm:$0xff]
          %106 = vst [vmem:[%s64 + $0xa0] sm:$0xff] %v105
          %v107 = vld [vmem:[%s63 + $0xa8] sm:$0xff]
          %108 = vst [vmem:[%s64 + $0xa8] sm:$0xff] %v107
          %v109 = vld [vmem:[%s63 + $0xb0] sm:$0xff]
          %110 = vst [vmem:[%s64 + $0xb0] sm:$0xff] %v109
          %v111 = vld [vmem:[%s63 + $0xb8] sm:$0xff]
          %112 = vst [vmem:[%s64 + $0xb8] sm:$0xff] %v111
          %v113 = vld [vmem:[%s63 + $0xc0] sm:$0xff]
          %114 = vst [vmem:[%s64 + $0xc0] sm:$0xff] %v113
          %v115 = vld [vmem:[%s63 + $0xc8] sm:$0xff]
          %116 = vst [vmem:[%s64 + $0xc8] sm:$0xff] %v115
          %v117 = vld [vmem:[%s63 + $0xd0] sm:$0xff]
          %118 = vst [vmem:[%s64 + $0xd0] sm:$0xff] %v117
          %v119 = vld [vmem:[%s63 + $0xd8] sm:$0xff]
          %120 = vst [vmem:[%s64 + $0xd8] sm:$0xff] %v119
          %v121 = vld [vmem:[%s63 + $0xe0] sm:$0xff]
          %122 = vst [vmem:[%s64 + $0xe0] sm:$0xff] %v121
          %v123 = vld [vmem:[%s63 + $0xe8] sm:$0xff]
          %124 = vst [vmem:[%s64 + $0xe8] sm:$0xff] %v123
          %v125 = vld [vmem:[%s63 + $0xf0] sm:$0xff]
          %126 = vst [vmem:[%s64 + $0xf0] sm:$0xff] %v125
          %v127 = vld [vmem:[%s63 + $0xf8] sm:$0xff]
          %128 = vst [vmem:[%s64 + $0xf8] sm:$0xff] %v127
          %v129 = vld [vmem:[%s63 + $0x100] sm:$0xff]
          %130 = vst [vmem:[%s64 + $0x100] sm:$0xff] %v129
          %v131 = vld [vmem:[%s63 + $0x108] sm:$0xff]
          %132 = vst [vmem:[%s64 + $0x108] sm:$0xff] %v131
          %v133 = vld [vmem:[%s63 + $0x110] sm:$0xff]
          %134 = vst [vmem:[%s64 + $0x110] sm:$0xff] %v133
          %v135 = vld [vmem:[%s63 + $0x118] sm:$0xff]
          %136 = vst [vmem:[%s64 + $0x118] sm:$0xff] %v135
          %v137 = vld [vmem:[%s63 + $0x120] sm:$0xff]
          %138 = vst [vmem:[%s64 + $0x120] sm:$0xff] %v137
          %v139 = vld [vmem:[%s63 + $0x128] sm:$0xff]
          %140 = vst [vmem:[%s64 + $0x128] sm:$0xff] %v139
          %v141 = vld [vmem:[%s63 + $0x130] sm:$0xff]
          %142 = vst [vmem:[%s64 + $0x130] sm:$0xff] %v141
          %v143 = vld [vmem:[%s63 + $0x138] sm:$0xff]
          %144 = vst [vmem:[%s64 + $0x138] sm:$0xff] %v143
          %v145 = vld [vmem:[%s63 + $0x140] sm:$0xff]
          %146 = vst [vmem:[%s64 + $0x140] sm:$0xff] %v145
          %v147 = vld [vmem:[%s63 + $0x148] sm:$0xff]
          %148 = vst [vmem:[%s64 + $0x148] sm:$0xff] %v147
          %v149 = vld [vmem:[%s63 + $0x150] sm:$0xff]
          %150 = vst [vmem:[%s64 + $0x150] sm:$0xff] %v149
          %v151 = vld [vmem:[%s63 + $0x158] sm:$0xff]
          %152 = vst [vmem:[%s64 + $0x158] sm:$0xff] %v151
          %v153 = vld [vmem:[%s63 + $0x160] sm:$0xff]
          %154 = vst [vmem:[%s64 + $0x160] sm:$0xff] %v153
          %v155 = vld [vmem:[%s63 + $0x168] sm:$0xff]
          %156 = vst [vmem:[%s64 + $0x168] sm:$0xff] %v155
          %v157 = vld [vmem:[%s63 + $0x170] sm:$0xff]
          %158 = vst [vmem:[%s64 + $0x170] sm:$0xff] %v157
          %v159 = vld [vmem:[%s63 + $0x178] sm:$0xff]
          %160 = vst [vmem:[%s64 + $0x178] sm:$0xff] %v159
          %v161 = vld [vmem:[%s63 + $0x180] sm:$0xff]
          %162 = vst [vmem:[%s64 + $0x180] sm:$0xff] %v161
          %v163 = vld [vmem:[%s63 + $0x188] sm:$0xff]
          %164 = vst [vmem:[%s64 + $0x188] sm:$0xff] %v163
          %v165 = vld [vmem:[%s63 + $0x190] sm:$0xff]
          %166 = vst [vmem:[%s64 + $0x190] sm:$0xff] %v165
          %v167 = vld [vmem:[%s63 + $0x198] sm:$0xff]
          %168 = vst [vmem:[%s64 + $0x198] sm:$0xff] %v167
          %v169 = vld [vmem:[%s63 + $0x1a0] sm:$0xff]
          %170 = vst [vmem:[%s64 + $0x1a0] sm:$0xff] %v169
          %v171 = vld [vmem:[%s63 + $0x1a8] sm:$0xff]
          %172 = vst [vmem:[%s64 + $0x1a8] sm:$0xff] %v171
          %v173 = vld [vmem:[%s63 + $0x1b0] sm:$0xff]
          %174 = vst [vmem:[%s64 + $0x1b0] sm:$0xff] %v173
          %v175 = vld [vmem:[%s63 + $0x1b8] sm:$0xff]
          %176 = vst [vmem:[%s64 + $0x1b8] sm:$0xff] %v175
          %v177 = vld [vmem:[%s63 + $0x1c0] sm:$0xff]
          %178 = vst [vmem:[%s64 + $0x1c0] sm:$0xff] %v177
          %v179 = vld [vmem:[%s63 + $0x1c8] sm:$0xff]
          %180 = vst [vmem:[%s64 + $0x1c8] sm:$0xff] %v179
          %v181 = vld [vmem:[%s63 + $0x1d0] sm:$0xff]
          %182 = vst [vmem:[%s64 + $0x1d0] sm:$0xff] %v181
          %v183 = vld [vmem:[%s63 + $0x1d8] sm:$0xff]
          %184 = vst [vmem:[%s64 + $0x1d8] sm:$0xff] %v183
          %v185 = vld [vmem:[%s63 + $0x1e0] sm:$0xff]
          %186 = vst [vmem:[%s64 + $0x1e0] sm:$0xff] %v185
          %v187 = vld [vmem:[%s63 + $0x1e8] sm:$0xff]
          %188 = vst [vmem:[%s64 + $0x1e8] sm:$0xff] %v187
          %v189 = vld [vmem:[%s63 + $0x1f0] sm:$0xff]
          %190 = vst [vmem:[%s64 + $0x1f0] sm:$0xff] %v189
          %v191 = vld [vmem:[%s63 + $0x1f8] sm:$0xff]
          %192 = vst [vmem:[%s64 + $0x1f8] sm:$0xff] %v191
          %v193 = vld [vmem:[%s63 + $0x200] sm:$0xff]
          %194 = vst [vmem:[%s64 + $0x200] sm:$0xff] %v193
          %v195 = vld [vmem:[%s63 + $0x208] sm:$0xff]
          %196 = vst [vmem:[%s64 + $0x208] sm:$0xff] %v195
          %v197 = vld [vmem:[%s63 + $0x210] sm:$0xff]
          %198 = vst [vmem:[%s64 + $0x210] sm:$0xff] %v197
          %v199 = vld [vmem:[%s63 + $0x218] sm:$0xff]
          %200 = vst [vmem:[%s64 + $0x218] sm:$0xff] %v199
          %v201 = vld [vmem:[%s63 + $0x220] sm:$0xff]
          %202 = vst [vmem:[%s64 + $0x220] sm:$0xff] %v201
          %v203 = vld [vmem:[%s63 + $0x228] sm:$0xff]
          %204 = vst [vmem:[%s64 + $0x228] sm:$0xff] %v203
          %v205 = vld [vmem:[%s63 + $0x230] sm:$0xff]
          %206 = vst [vmem:[%s64 + $0x230] sm:$0xff] %v205
          %v207 = vld [vmem:[%s63 + $0x238] sm:$0xff]
          %208 = vst [vmem:[%s64 + $0x238] sm:$0xff] %v207
          %v209 = vld [vmem:[%s63 + $0x240] sm:$0xff]
          %210 = vst [vmem:[%s64 + $0x240] sm:$0xff] %v209
          %v211 = vld [vmem:[%s63 + $0x248] sm:$0xff]
          %212 = vst [vmem:[%s64 + $0x248] sm:$0xff] %v211
          %v213 = vld [vmem:[%s63 + $0x250] sm:$0xff]
          %214 = vst [vmem:[%s64 + $0x250] sm:$0xff] %v213
          %v215 = vld [vmem:[%s63 + $0x258] sm:$0xff]
          %216 = vst [vmem:[%s64 + $0x258] sm:$0xff] %v215
          %v217 = vld [vmem:[%s63 + $0x260] sm:$0xff]
          %218 = vst [vmem:[%s64 + $0x260] sm:$0xff] %v217
          %v219 = vld [vmem:[%s63 + $0x268] sm:$0xff]
          %220 = vst [vmem:[%s64 + $0x268] sm:$0xff] %v219
          %v221 = vld [vmem:[%s63 + $0x270] sm:$0xff]
          %222 = vst [vmem:[%s64 + $0x270] sm:$0xff] %v221
          %v223 = vld [vmem:[%s63 + $0x278] sm:$0xff]
          %224 = vst [vmem:[%s64 + $0x278] sm:$0xff] %v223
          %v225 = vld [vmem:[%s63 + $0x280] sm:$0xff]
          %226 = vst [vmem:[%s64 + $0x280] sm:$0xff] %v225
          %v227 = vld [vmem:[%s63 + $0x288] sm:$0xff]
          %228 = vst [vmem:[%s64 + $0x288] sm:$0xff] %v227
          %v229 = vld [vmem:[%s63 + $0x290] sm:$0xff]
          %230 = vst [vmem:[%s64 + $0x290] sm:$0xff] %v229
          %v231 = vld [vmem:[%s63 + $0x298] sm:$0xff]
          %232 = vst [vmem:[%s64 + $0x298] sm:$0xff] %v231
          %v233 = vld [vmem:[%s63 + $0x2a0] sm:$0xff]
          %234 = vst [vmem:[%s64 + $0x2a0] sm:$0xff] %v233
          %v235 = vld [vmem:[%s63 + $0x2a8] sm:$0xff]
          %236 = vst [vmem:[%s64 + $0x2a8] sm:$0xff] %v235
          %v237 = vld [vmem:[%s63 + $0x2b0] sm:$0xff]
          %238 = vst [vmem:[%s64 + $0x2b0] sm:$0xff] %v237
          %v239 = vld [vmem:[%s63 + $0x2b8] sm:$0xff]
          %240 = vst [vmem:[%s64 + $0x2b8] sm:$0xff] %v239
          %v241 = vld [vmem:[%s63 + $0x2c0] sm:$0xff]
          %242 = vst [vmem:[%s64 + $0x2c0] sm:$0xff] %v241
          %v243 = vld [vmem:[%s63 + $0x2c8] sm:$0xff]
          %244 = vst [vmem:[%s64 + $0x2c8] sm:$0xff] %v243
          %v245 = vld [vmem:[%s63 + $0x2d0] sm:$0xff]
          %246 = vst [vmem:[%s64 + $0x2d0] sm:$0xff] %v245
          %v247 = vld [vmem:[%s63 + $0x2d8] sm:$0xff]
          %248 = vst [vmem:[%s64 + $0x2d8] sm:$0xff] %v247
          %v249 = vld [vmem:[%s63 + $0x2e0] sm:$0xff]
          %250 = vst [vmem:[%s64 + $0x2e0] sm:$0xff] %v249
          %v251 = vld [vmem:[%s63 + $0x2e8] sm:$0xff]
          %252 = vst [vmem:[%s64 + $0x2e8] sm:$0xff] %v251
          %v253 = vld [vmem:[%s63 + $0x2f0] sm:$0xff]
          %254 = vst [vmem:[%s64 + $0x2f0] sm:$0xff] %v253
          %v255 = vld [vmem:[%s63 + $0x2f8] sm:$0xff]
          %256 = vst [vmem:[%s64 + $0x2f8] sm:$0xff] %v255
          %v257 = vld [vmem:[%s63 + $0x300] sm:$0xff]
          %258 = vst [vmem:[%s64 + $0x300] sm:$0xff] %v257
          %v259 = vld [vmem:[%s63 + $0x308] sm:$0xff]
          %260 = vst [vmem:[%s64 + $0x308] sm:$0xff] %v259
          %v261 = vld [vmem:[%s63 + $0x310] sm:$0xff]
          %262 = vst [vmem:[%s64 + $0x310] sm:$0xff] %v261
          %v263 = vld [vmem:[%s63 + $0x318] sm:$0xff]
          %264 = vst [vmem:[%s64 + $0x318] sm:$0xff] %v263
          %v265 = vld [vmem:[%s63 + $0x320] sm:$0xff]
          %266 = vst [vmem:[%s64 + $0x320] sm:$0xff] %v265
          %v267 = vld [vmem:[%s63 + $0x328] sm:$0xff]
          %268 = vst [vmem:[%s64 + $0x328] sm:$0xff] %v267
          %v269 = vld [vmem:[%s63 + $0x330] sm:$0xff]
          %270 = vst [vmem:[%s64 + $0x330] sm:$0xff] %v269
          %v271 = vld [vmem:[%s63 + $0x338] sm:$0xff]
          %272 = vst [vmem:[%s64 + $0x338] sm:$0xff] %v271
          %v273 = vld [vmem:[%s63 + $0x340] sm:$0xff]
          %274 = vst [vmem:[%s64 + $0x340] sm:$0xff] %v273
          %v275 = vld [vmem:[%s63 + $0x348] sm:$0xff]
          %276 = vst [vmem:[%s64 + $0x348] sm:$0xff] %v275
          %v277 = vld [vmem:[%s63 + $0x350] sm:$0xff]
          %278 = vst [vmem:[%s64 + $0x350] sm:$0xff] %v277
          %v279 = vld [vmem:[%s63 + $0x358] sm:$0xff]
          %280 = vst [vmem:[%s64 + $0x358] sm:$0xff] %v279
          %v281 = vld [vmem:[%s63 + $0x360] sm:$0xff]
          %282 = vst [vmem:[%s64 + $0x360] sm:$0xff] %v281
          %v283 = vld [vmem:[%s63 + $0x368] sm:$0xff]
          %284 = vst [vmem:[%s64 + $0x368] sm:$0xff] %v283
          %v285 = vld [vmem:[%s63 + $0x370] sm:$0xff]
          %286 = vst [vmem:[%s64 + $0x370] sm:$0xff] %v285
          %v287 = vld [vmem:[%s63 + $0x378] sm:$0xff]
          %288 = vst [vmem:[%s64 + $0x378] sm:$0xff] %v287
          %v289 = vld [vmem:[%s63 + $0x380] sm:$0xff]
          %290 = vst [vmem:[%s64 + $0x380] sm:$0xff] %v289
          %v291 = vld [vmem:[%s63 + $0x388] sm:$0xff]
          %292 = vst [vmem:[%s64 + $0x388] sm:$0xff] %v291
          %v293 = vld [vmem:[%s63 + $0x390] sm:$0xff]
          %294 = vst [vmem:[%s64 + $0x390] sm:$0xff] %v293
          %v295 = vld [vmem:[%s63 + $0x398] sm:$0xff]
          %296 = vst [vmem:[%s64 + $0x398] sm:$0xff] %v295
          %v297 = vld [vmem:[%s63 + $0x3a0] sm:$0xff]
          %298 = vst [vmem:[%s64 + $0x3a0] sm:$0xff] %v297
          %v299 = vld [vmem:[%s63 + $0x3a8] sm:$0xff]
          %300 = vst [vmem:[%s64 + $0x3a8] sm:$0xff] %v299
          %v301 = vld [vmem:[%s63 + $0x3b0] sm:$0xff]
          %302 = vst [vmem:[%s64 + $0x3b0] sm:$0xff] %v301
          %v303 = vld [vmem:[%s63 + $0x3b8] sm:$0xff]
          %304 = vst [vmem:[%s64 + $0x3b8] sm:$0xff] %v303
          %v305 = vld [vmem:[%s63 + $0x3c0] sm:$0xff]
          %306 = vst [vmem:[%s64 + $0x3c0] sm:$0xff] %v305
          %v307 = vld [vmem:[%s63 + $0x3c8] sm:$0xff]
          %308 = vst [vmem:[%s64 + $0x3c8] sm:$0xff] %v307
          %v309 = vld [vmem:[%s63 + $0x3d0] sm:$0xff]
          %310 = vst [vmem:[%s64 + $0x3d0] sm:$0xff] %v309
          %v311 = vld [vmem:[%s63 + $0x3d8] sm:$0xff]
          %312 = vst [vmem:[%s64 + $0x3d8] sm:$0xff] %v311
          %v313 = vld [vmem:[%s63 + $0x3e0] sm:$0xff]
          %314 = vst [vmem:[%s64 + $0x3e0] sm:$0xff] %v313
          %v315 = vld [vmem:[%s63 + $0x3e8] sm:$0xff]
          %316 = vst [vmem:[%s64 + $0x3e8] sm:$0xff] %v315
          %v317 = vld [vmem:[%s63 + $0x3f0] sm:$0xff]
          %318 = vst [vmem:[%s64 + $0x3f0] sm:$0xff] %v317
          %v319 = vld [vmem:[%s63 + $0x3f8] sm:$0xff]
          %320 = vst [vmem:[%s64 + $0x3f8] sm:$0xff] %v319
          %v321 = vld [vmem:[%s63 + $0x400] sm:$0xff]
          %322 = vst [vmem:[%s64 + $0x400] sm:$0xff] %v321
          %v323 = vld [vmem:[%s63 + $0x408] sm:$0xff]
          %324 = vst [vmem:[%s64 + $0x408] sm:$0xff] %v323
          %v325 = vld [vmem:[%s63 + $0x410] sm:$0xff]
          %326 = vst [vmem:[%s64 + $0x410] sm:$0xff] %v325
          %v327 = vld [vmem:[%s63 + $0x418] sm:$0xff]
          %328 = vst [vmem:[%s64 + $0x418] sm:$0xff] %v327
          %v329 = vld [vmem:[%s63 + $0x420] sm:$0xff]
          %330 = vst [vmem:[%s64 + $0x420] sm:$0xff] %v329
          %v331 = vld [vmem:[%s63 + $0x428] sm:$0xff]
          %332 = vst [vmem:[%s64 + $0x428] sm:$0xff] %v331
          %v333 = vld [vmem:[%s63 + $0x430] sm:$0xff]
          %334 = vst [vmem:[%s64 + $0x430] sm:$0xff] %v333
          %v335 = vld [vmem:[%s63 + $0x438] sm:$0xff]
          %336 = vst [vmem:[%s64 + $0x438] sm:$0xff] %v335
          %v337 = vld [vmem:[%s63 + $0x440] sm:$0xff]
          %338 = vst [vmem:[%s64 + $0x440] sm:$0xff] %v337
          %v339 = vld [vmem:[%s63 + $0x448] sm:$0xff]
          %340 = vst [vmem:[%s64 + $0x448] sm:$0xff] %v339
          %v341 = vld [vmem:[%s63 + $0x450] sm:$0xff]
          %342 = vst [vmem:[%s64 + $0x450] sm:$0xff] %v341
          %v343 = vld [vmem:[%s63 + $0x458] sm:$0xff]
          %344 = vst [vmem:[%s64 + $0x458] sm:$0xff] %v343
          %v345 = vld [vmem:[%s63 + $0x460] sm:$0xff]
          %346 = vst [vmem:[%s64 + $0x460] sm:$0xff] %v345
          %v347 = vld [vmem:[%s63 + $0x468] sm:$0xff]
          %348 = vst [vmem:[%s64 + $0x468] sm:$0xff] %v347
          %v349 = vld [vmem:[%s63 + $0x470] sm:$0xff]
          %350 = vst [vmem:[%s64 + $0x470] sm:$0xff] %v349
          %v351 = vld [vmem:[%s63 + $0x478] sm:$0xff]
          %352 = vst [vmem:[%s64 + $0x478] sm:$0xff] %v351
          %v353 = vld [vmem:[%s63 + $0x480] sm:$0xff]
          %354 = vst [vmem:[%s64 + $0x480] sm:$0xff] %v353
          %v355 = vld [vmem:[%s63 + $0x488] sm:$0xff]
          %356 = vst [vmem:[%s64 + $0x488] sm:$0xff] %v355
          %v357 = vld [vmem:[%s63 + $0x490] sm:$0xff]
          %358 = vst [vmem:[%s64 + $0x490] sm:$0xff] %v357
          %v359 = vld [vmem:[%s63 + $0x498] sm:$0xff]
          %360 = vst [vmem:[%s64 + $0x498] sm:$0xff] %v359
          %v361 = vld [vmem:[%s63 + $0x4a0] sm:$0xff]
          %362 = vst [vmem:[%s64 + $0x4a0] sm:$0xff] %v361
          %v363 = vld [vmem:[%s63 + $0x4a8] sm:$0xff]
          %364 = vst [vmem:[%s64 + $0x4a8] sm:$0xff] %v363
          %v365 = vld [vmem:[%s63 + $0x4b0] sm:$0xff]
          %366 = vst [vmem:[%s64 + $0x4b0] sm:$0xff] %v365
          %v367 = vld [vmem:[%s63 + $0x4b8] sm:$0xff]
          %368 = vst [vmem:[%s64 + $0x4b8] sm:$0xff] %v367
          %v369 = vld [vmem:[%s63 + $0x4c0] sm:$0xff]
          %370 = vst [vmem:[%s64 + $0x4c0] sm:$0xff] %v369
          %v371 = vld [vmem:[%s63 + $0x4c8] sm:$0xff]
          %372 = vst [vmem:[%s64 + $0x4c8] sm:$0xff] %v371
          %v373 = vld [vmem:[%s63 + $0x4d0] sm:$0xff]
          %374 = vst [vmem:[%s64 + $0x4d0] sm:$0xff] %v373
          %v375 = vld [vmem:[%s63 + $0x4d8] sm:$0xff]
          %376 = vst [vmem:[%s64 + $0x4d8] sm:$0xff] %v375
          %v377 = vld [vmem:[%s63 + $0x4e0] sm:$0xff]
          %378 = vst [vmem:[%s64 + $0x4e0] sm:$0xff] %v377
          %v379 = vld [vmem:[%s63 + $0x4e8] sm:$0xff]
          %380 = vst [vmem:[%s64 + $0x4e8] sm:$0xff] %v379
          %v381 = vld [vmem:[%s63 + $0x4f0] sm:$0xff]
          %382 = vst [vmem:[%s64 + $0x4f0] sm:$0xff] %v381
          %v383 = vld [vmem:[%s63 + $0x4f8] sm:$0xff]
          %384 = vst [vmem:[%s64 + $0x4f8] sm:$0xff] %v383
          %v385 = vld [vmem:[%s63 + $0x500] sm:$0xff]
          %386 = vst [vmem:[%s64 + $0x500] sm:$0xff] %v385
          %v387 = vld [vmem:[%s63 + $0x508] sm:$0xff]
          %388 = vst [vmem:[%s64 + $0x508] sm:$0xff] %v387
          %v389 = vld [vmem:[%s63 + $0x510] sm:$0xff]
          %390 = vst [vmem:[%s64 + $0x510] sm:$0xff] %v389
          %v391 = vld [vmem:[%s63 + $0x518] sm:$0xff]
          %392 = vst [vmem:[%s64 + $0x518] sm:$0xff] %v391
          %v393 = vld [vmem:[%s63 + $0x520] sm:$0xff]
          %394 = vst [vmem:[%s64 + $0x520] sm:$0xff] %v393
          %v395 = vld [vmem:[%s63 + $0x528] sm:$0xff]
          %396 = vst [vmem:[%s64 + $0x528] sm:$0xff] %v395
          %v397 = vld [vmem:[%s63 + $0x530] sm:$0xff]
          %398 = vst [vmem:[%s64 + $0x530] sm:$0xff] %v397
          %v399 = vld [vmem:[%s63 + $0x538] sm:$0xff]
          %400 = vst [vmem:[%s64 + $0x538] sm:$0xff] %v399
          %v401 = vld [vmem:[%s63 + $0x540] sm:$0xff]
          %402 = vst [vmem:[%s64 + $0x540] sm:$0xff] %v401
          %v403 = vld [vmem:[%s63 + $0x548] sm:$0xff]
          %404 = vst [vmem:[%s64 + $0x548] sm:$0xff] %v403
          %v405 = vld [vmem:[%s63 + $0x550] sm:$0xff]
          %406 = vst [vmem:[%s64 + $0x550] sm:$0xff] %v405
          %v407 = vld [vmem:[%s63 + $0x558] sm:$0xff]
          %408 = vst [vmem:[%s64 + $0x558] sm:$0xff] %v407
          %v409 = vld [vmem:[%s63 + $0x560] sm:$0xff]
          %410 = vst [vmem:[%s64 + $0x560] sm:$0xff] %v409
          %v411 = vld [vmem:[%s63 + $0x568] sm:$0xff]
          %412 = vst [vmem:[%s64 + $0x568] sm:$0xff] %v411
          %v413 = vld [vmem:[%s63 + $0x570] sm:$0xff]
          %414 = vst [vmem:[%s64 + $0x570] sm:$0xff] %v413
          %v415 = vld [vmem:[%s63 + $0x578] sm:$0xff]
          %416 = vst [vmem:[%s64 + $0x578] sm:$0xff] %v415
          %v417 = vld [vmem:[%s63 + $0x580] sm:$0xff]
          %418 = vst [vmem:[%s64 + $0x580] sm:$0xff] %v417
          %v419 = vld [vmem:[%s63 + $0x588] sm:$0xff]
          %420 = vst [vmem:[%s64 + $0x588] sm:$0xff] %v419
          %v421 = vld [vmem:[%s63 + $0x590] sm:$0xff]
          %422 = vst [vmem:[%s64 + $0x590] sm:$0xff] %v421
          %v423 = vld [vmem:[%s63 + $0x598] sm:$0xff]
          %424 = vst [vmem:[%s64 + $0x598] sm:$0xff] %v423
          %v425 = vld [vmem:[%s63 + $0x5a0] sm:$0xff]
          %426 = vst [vmem:[%s64 + $0x5a0] sm:$0xff] %v425
          %v427 = vld [vmem:[%s63 + $0x5a8] sm:$0xff]
          %428 = vst [vmem:[%s64 + $0x5a8] sm:$0xff] %v427
          %v429 = vld [vmem:[%s63 + $0x5b0] sm:$0xff]
          %430 = vst [vmem:[%s64 + $0x5b0] sm:$0xff] %v429
          %v431 = vld [vmem:[%s63 + $0x5b8] sm:$0xff]
          %432 = vst [vmem:[%s64 + $0x5b8] sm:$0xff] %v431
          %v433 = vld [vmem:[%s63 + $0x5c0] sm:$0xff]
          %434 = vst [vmem:[%s64 + $0x5c0] sm:$0xff] %v433
          %v435 = vld [vmem:[%s63 + $0x5c8] sm:$0xff]
          %436 = vst [vmem:[%s64 + $0x5c8] sm:$0xff] %v435
          %v437 = vld [vmem:[%s63 + $0x5d0] sm:$0xff]
          %438 = vst [vmem:[%s64 + $0x5d0] sm:$0xff] %v437
          %v439 = vld [vmem:[%s63 + $0x5d8] sm:$0xff]
          %440 = vst [vmem:[%s64 + $0x5d8] sm:$0xff] %v439
          %v441 = vld [vmem:[%s63 + $0x5e0] sm:$0xff]
          %442 = vst [vmem:[%s64 + $0x5e0] sm:$0xff] %v441
          %v443 = vld [vmem:[%s63 + $0x5e8] sm:$0xff]
          %444 = vst [vmem:[%s64 + $0x5e8] sm:$0xff] %v443
          %v445 = vld [vmem:[%s63 + $0x5f0] sm:$0xff]
          %446 = vst [vmem:[%s64 + $0x5f0] sm:$0xff] %v445
          %v447 = vld [vmem:[%s63 + $0x5f8] sm:$0xff]
          %448 = vst [vmem:[%s64 + $0x5f8] sm:$0xff] %v447
          %v449 = vld [vmem:[%s63 + $0x600] sm:$0xff]
          %450 = vst [vmem:[%s64 + $0x600] sm:$0xff] %v449
          %v451 = vld [vmem:[%s63 + $0x608] sm:$0xff]
          %452 = vst [vmem:[%s64 + $0x608] sm:$0xff] %v451
          %v453 = vld [vmem:[%s63 + $0x610] sm:$0xff]
          %454 = vst [vmem:[%s64 + $0x610] sm:$0xff] %v453
          %v455 = vld [vmem:[%s63 + $0x618] sm:$0xff]
          %456 = vst [vmem:[%s64 + $0x618] sm:$0xff] %v455
          %v457 = vld [vmem:[%s63 + $0x620] sm:$0xff]
          %458 = vst [vmem:[%s64 + $0x620] sm:$0xff] %v457
          %v459 = vld [vmem:[%s63 + $0x628] sm:$0xff]
          %460 = vst [vmem:[%s64 + $0x628] sm:$0xff] %v459
          %v461 = vld [vmem:[%s63 + $0x630] sm:$0xff]
          %462 = vst [vmem:[%s64 + $0x630] sm:$0xff] %v461
          %v463 = vld [vmem:[%s63 + $0x638] sm:$0xff]
          %464 = vst [vmem:[%s64 + $0x638] sm:$0xff] %v463
          %v465 = vld [vmem:[%s63 + $0x640] sm:$0xff]
          %466 = vst [vmem:[%s64 + $0x640] sm:$0xff] %v465
          %v467 = vld [vmem:[%s63 + $0x648] sm:$0xff]
          %468 = vst [vmem:[%s64 + $0x648] sm:$0xff] %v467
          %v469 = vld [vmem:[%s63 + $0x650] sm:$0xff]
          %470 = vst [vmem:[%s64 + $0x650] sm:$0xff] %v469
          %v471 = vld [vmem:[%s63 + $0x658] sm:$0xff]
          %472 = vst [vmem:[%s64 + $0x658] sm:$0xff] %v471
          %v473 = vld [vmem:[%s63 + $0x660] sm:$0xff]
          %474 = vst [vmem:[%s64 + $0x660] sm:$0xff] %v473
          %v475 = vld [vmem:[%s63 + $0x668] sm:$0xff]
          %476 = vst [vmem:[%s64 + $0x668] sm:$0xff] %v475
          %v477 = vld [vmem:[%s63 + $0x670] sm:$0xff]
          %478 = vst [vmem:[%s64 + $0x670] sm:$0xff] %v477
          %v479 = vld [vmem:[%s63 + $0x678] sm:$0xff]
          %480 = vst [vmem:[%s64 + $0x678] sm:$0xff] %v479
          %v481 = vld [vmem:[%s63 + $0x680] sm:$0xff]
          %482 = vst [vmem:[%s64 + $0x680] sm:$0xff] %v481
          %v483 = vld [vmem:[%s63 + $0x688] sm:$0xff]
          %484 = vst [vmem:[%s64 + $0x688] sm:$0xff] %v483
          %v485 = vld [vmem:[%s63 + $0x690] sm:$0xff]
          %486 = vst [vmem:[%s64 + $0x690] sm:$0xff] %v485
          %v487 = vld [vmem:[%s63 + $0x698] sm:$0xff]
          %488 = vst [vmem:[%s64 + $0x698] sm:$0xff] %v487
          %v489 = vld [vmem:[%s63 + $0x6a0] sm:$0xff]
          %490 = vst [vmem:[%s64 + $0x6a0] sm:$0xff] %v489
          %v491 = vld [vmem:[%s63 + $0x6a8] sm:$0xff]
          %492 = vst [vmem:[%s64 + $0x6a8] sm:$0xff] %v491
          %v493 = vld [vmem:[%s63 + $0x6b0] sm:$0xff]
          %494 = vst [vmem:[%s64 + $0x6b0] sm:$0xff] %v493
          %v495 = vld [vmem:[%s63 + $0x6b8] sm:$0xff]
          %496 = vst [vmem:[%s64 + $0x6b8] sm:$0xff] %v495
          %v497 = vld [vmem:[%s63 + $0x6c0] sm:$0xff]
          %498 = vst [vmem:[%s64 + $0x6c0] sm:$0xff] %v497
          %v499 = vld [vmem:[%s63 + $0x6c8] sm:$0xff]
          %500 = vst [vmem:[%s64 + $0x6c8] sm:$0xff] %v499
          %v501 = vld [vmem:[%s63 + $0x6d0] sm:$0xff]
          %502 = vst [vmem:[%s64 + $0x6d0] sm:$0xff] %v501
          %v503 = vld [vmem:[%s63 + $0x6d8] sm:$0xff]
          %504 = vst [vmem:[%s64 + $0x6d8] sm:$0xff] %v503
          %v505 = vld [vmem:[%s63 + $0x6e0] sm:$0xff]
          %506 = vst [vmem:[%s64 + $0x6e0] sm:$0xff] %v505
          %v507 = vld [vmem:[%s63 + $0x6e8] sm:$0xff]
          %508 = vst [vmem:[%s64 + $0x6e8] sm:$0xff] %v507
          %v509 = vld [vmem:[%s63 + $0x6f0] sm:$0xff]
          %510 = vst [vmem:[%s64 + $0x6f0] sm:$0xff] %v509
          %v511 = vld [vmem:[%s63 + $0x6f8] sm:$0xff]
          %512 = vst [vmem:[%s64 + $0x6f8] sm:$0xff] %v511
          %v513 = vld [vmem:[%s63 + $0x700] sm:$0xff]
          %514 = vst [vmem:[%s64 + $0x700] sm:$0xff] %v513
          %v515 = vld [vmem:[%s63 + $0x708] sm:$0xff]
          %516 = vst [vmem:[%s64 + $0x708] sm:$0xff] %v515
          %v517 = vld [vmem:[%s63 + $0x710] sm:$0xff]
          %518 = vst [vmem:[%s64 + $0x710] sm:$0xff] %v517
          %v519 = vld [vmem:[%s63 + $0x718] sm:$0xff]
          %520 = vst [vmem:[%s64 + $0x718] sm:$0xff] %v519
          %v521 = vld [vmem:[%s63 + $0x720] sm:$0xff]
          %522 = vst [vmem:[%s64 + $0x720] sm:$0xff] %v521
          %v523 = vld [vmem:[%s63 + $0x728] sm:$0xff]
          %524 = vst [vmem:[%s64 + $0x728] sm:$0xff] %v523
          %v525 = vld [vmem:[%s63 + $0x730] sm:$0xff]
          %526 = vst [vmem:[%s64 + $0x730] sm:$0xff] %v525
          %v527 = vld [vmem:[%s63 + $0x738] sm:$0xff]
          %528 = vst [vmem:[%s64 + $0x738] sm:$0xff] %v527
          %v529 = vld [vmem:[%s63 + $0x740] sm:$0xff]
          %530 = vst [vmem:[%s64 + $0x740] sm:$0xff] %v529
          %v531 = vld [vmem:[%s63 + $0x748] sm:$0xff]
          %532 = vst [vmem:[%s64 + $0x748] sm:$0xff] %v531
          %v533 = vld [vmem:[%s63 + $0x750] sm:$0xff]
          %534 = vst [vmem:[%s64 + $0x750] sm:$0xff] %v533
          %v535 = vld [vmem:[%s63 + $0x758] sm:$0xff]
          %536 = vst [vmem:[%s64 + $0x758] sm:$0xff] %v535
          %v537 = vld [vmem:[%s63 + $0x760] sm:$0xff]
          %538 = vst [vmem:[%s64 + $0x760] sm:$0xff] %v537
          %v539 = vld [vmem:[%s63 + $0x768] sm:$0xff]
          %540 = vst [vmem:[%s64 + $0x768] sm:$0xff] %v539
          %v541 = vld [vmem:[%s63 + $0x770] sm:$0xff]
          %542 = vst [vmem:[%s64 + $0x770] sm:$0xff] %v541
          %v543 = vld [vmem:[%s63 + $0x778] sm:$0xff]
          %544 = vst [vmem:[%s64 + $0x778] sm:$0xff] %v543
          %v545 = vld [vmem:[%s63 + $0x780] sm:$0xff]
          %546 = vst [vmem:[%s64 + $0x780] sm:$0xff] %v545
          %v547 = vld [vmem:[%s63 + $0x788] sm:$0xff]
          %548 = vst [vmem:[%s64 + $0x788] sm:$0xff] %v547
          %v549 = vld [vmem:[%s63 + $0x790] sm:$0xff]
          %550 = vst [vmem:[%s64 + $0x790] sm:$0xff] %v549
          %v551 = vld [vmem:[%s63 + $0x798] sm:$0xff]
          %552 = vst [vmem:[%s64 + $0x798] sm:$0xff] %v551
          %v553 = vld [vmem:[%s63 + $0x7a0] sm:$0xff]
          %554 = vst [vmem:[%s64 + $0x7a0] sm:$0xff] %v553
          %v555 = vld [vmem:[%s63 + $0x7a8] sm:$0xff]
          %556 = vst [vmem:[%s64 + $0x7a8] sm:$0xff] %v555
          %v557 = vld [vmem:[%s63 + $0x7b0] sm:$0xff]
          %558 = vst [vmem:[%s64 + $0x7b0] sm:$0xff] %v557
          %v559 = vld [vmem:[%s63 + $0x7b8] sm:$0xff]
          %560 = vst [vmem:[%s64 + $0x7b8] sm:$0xff] %v559
          %v561 = vld [vmem:[%s63 + $0x7c0] sm:$0xff]
          %562 = vst [vmem:[%s64 + $0x7c0] sm:$0xff] %v561
          %v563 = vld [vmem:[%s63 + $0x7c8] sm:$0xff]
          %564 = vst [vmem:[%s64 + $0x7c8] sm:$0xff] %v563
          %v565 = vld [vmem:[%s63 + $0x7d0] sm:$0xff]
          %566 = vst [vmem:[%s64 + $0x7d0] sm:$0xff] %v565
          %v567 = vld [vmem:[%s63 + $0x7d8] sm:$0xff]
          %568 = vst [vmem:[%s64 + $0x7d8] sm:$0xff] %v567
          %v569 = vld [vmem:[%s63 + $0x7e0] sm:$0xff]
          %570 = vst [vmem:[%s64 + $0x7e0] sm:$0xff] %v569
          %v571 = vld [vmem:[%s63 + $0x7e8] sm:$0xff]
          %572 = vst [vmem:[%s64 + $0x7e8] sm:$0xff] %v571
          %v573 = vld [vmem:[%s63 + $0x7f0] sm:$0xff]
          %574 = vst [vmem:[%s64 + $0x7f0] sm:$0xff] %v573
          %v575 = vld [vmem:[%s63 + $0x7f8] sm:$0xff]
          %576 = vst [vmem:[%s64 + $0x7f8] sm:$0xff] %v575
        $region57: #{actor_forward.1} parent=51 // loop_footer
          %s62 = sadd.s32 1, %s58
        $region58: #{actor_forward.1} parent=51 // loop_footer_branch
          %57 = sbr.rel target = $region54
        $region59: #{actor_forward.1} parent=51 // loop_exit
          _
      $region52: #{actor_forward.1} parent=36 // pred_fallthru
        _
      %p577 = pneg %p53
      // Predicated region
      $region60: #{actor_forward.1} parent=36 // pred_check
        _
      $region61: #{actor_forward.1} parent=36 // pred_check_branch
        %579 = sbr.rel (%p53) target = $region63
      $region62: #{actor_forward.1} parent=36 // pred_region
        %s580 = sand.u32 2048, 7
      $region63: #{actor_forward.1} parent=36 // pred_fallthru
        _
    $region37: #{actor_forward.1} parent=1 // pred_fallthru
      _
    // Predicated region
    $region38: #{actor_forward.1} parent=1 // pred_check
      %p37 = pneg %p33
    $region39: #{actor_forward.1} parent=1 // pred_check_branch
      %39 = sbr.rel (%p37) target = $region41
    $region40: #{actor_forward.1} parent=1 // pred_region
      %s40 = sshll.u32 1, 2048
      %s41 = ssub.s32 %s40, 1
      loop: start=0, step=1, limit=1
      $region42: #{actor_forward.1} parent=40 // loop_pre_header
        _
      $region43: #{actor_forward.1} parent=40 // loop_header
        %s43 = sphi 0, %s47
        %p44 = scmp.ge.s32.totalorder %s43, 1
        %s48 = sphi %s5, %s5
        %s49 = sphi [#allocation3], [#allocation3]
      $region44: #{actor_forward.1} parent=40 // loop_header_branch
        %46 = sbr.rel (%p44) target = $region48
      $region45: #{actor_forward.1} parent=40 // loop_body
        %v50 = vld [vmem:[%s48] sm:%s41]
        %51 = vst [vmem:[%s49] sm:%s41] %v50
      $region46: #{actor_forward.1} parent=40 // loop_footer
        %s47 = sadd.s32 1, %s43
      $region47: #{actor_forward.1} parent=40 // loop_footer_branch
        %42 = sbr.rel target = $region43
      $region48: #{actor_forward.1} parent=40 // loop_exit
        _
    $region41: #{actor_forward.1} parent=1 // pred_fallthru
      _
    // Predicated region
    $region64: #{actor_forward.1} parent=1 // pred_check
      _
    $region65: #{actor_forward.1} parent=1 // pred_check_branch
      %583 = sbr.rel (0) target = $region67
    $region66: #{actor_forward.1} parent=1 // pred_region
      %584 = vsyncadd [#allocation4], 32768
    $region67: #{actor_forward.1} parent=1 // pred_fallthru
      _
    %v585 = vld [vmem:[%s0] sm:$0xff]
    %v586 = vld [vmem:[%s0 + $0x8] sm:$0xff]
    %v587 = vld [vmem:[%s0 + $0x10] sm:$0xff]
    %v588 = vld [vmem:[%s0 + $0x18] sm:$0xff]
    %v589 = vld [vmem:[%s0 + $0x20] sm:$0xff]
    %v590 = vld [vmem:[%s0 + $0x28] sm:$0xff]
    %v591 = vld [vmem:[%s0 + $0x30] sm:$0xff]
    %v592 = vld [vmem:[%s0 + $0x38] sm:$0xff]
    %v593 = vld [vmem:[%s0 + $0x40] sm:$0xff]
    %v594 = vld [vmem:[%s1] sm:$0xff]
    %v595 = vld [vmem:[%s1 + $0x8] sm:$0xff]
    %v596 = vld [vmem:[%s1 + $0x10] sm:$0x3]
    %v597 = vld [vmem:[%s2] sm:$0x1]
    %v599 = vlaneseq
    %v600 = vshrl.u32 %v599, 7
    %v601 = vsub.s32 0, %v600
    %v602 = vrot.slane %v597, %v601
    %vm604 = vcmask 146432
    %v606 = vsel %vm604, %v585, 0
    %v609 = vsel %vm604, %v586, 0
    %v612 = vsel %vm604, %v587, 0
    %v615 = vsel %vm604, %v588, 0
    %v618 = vsel %vm604, %v589, 0
    %v621 = vsel %vm604, %v590, 0
    %v624 = vsel %vm604, %v591, 0
    %v627 = vsel %vm604, %v592, 0
    %v630 = vsel %vm604, %v593, 0
    %vm632 = vcmask 1041408
    %v634 = vsel %vm632, %v596, 0
    %636 = vmatprep.subr.mxu0 0.0
    %637 = vmatpush1.msra.mxu0 0.0
    %638 = vmatprep.subr.mxu0 0.0
    %639 = vmatpush1.msra.mxu0 0.0
    %640 = vmatprep.subr.mxu0 0.0
    %641 = vmatpush1.msra.mxu0 0.0
    %642 = vmatprep.subr.mxu0 0.0
    %643 = vmatpush1.msra.mxu0 0.0
    %644 = vmatprep.subr.mxu0 0.0
    %645 = vmatpush1.msra.mxu0 0.0
    %646 = vmatprep.subr.mxu0 0.0
    %647 = vmatpush1.msra.mxu0 0.0
    %648 = vmatprep.subr.mxu0 0.0
    %649 = vmatpush1.msra.mxu0 0.0
    %650 = vmatprep.subr.mxu0 0.0
    %651 = vmatpush1.msra.mxu0 0.0
    %652 = vmatprep.subr.mxu0 0.0
    %653 = vmatpush1.msra.mxu0 0.0
    %654 = vmatprep.subr.mxu0 0.0
    %655 = vmatpush1.msra.mxu0 0.0
    %656 = vmatprep.subr.mxu0 0.0
    %657 = vmatpush1.msra.mxu0 0.0
    %658 = vmatprep.subr.mxu0 0.0
    %659 = vmatpush1.msra.mxu0 0.0
    %660 = vmatprep.subr.mxu0 0.0
    %661 = vmatpush1.msra.mxu0 0.0
    %662 = vmatprep.subr.mxu0 0.0
    %663 = vmatpush1.msra.mxu0 %v634
    %664 = vmatprep.subr.mxu0 0.0
    %665 = vmatpush1.msra.mxu0 %v595
    %666 = vmatprep.subr.mxu0 0.0
    %667 = vmatpush1.msra.mxu0 %v594
    %668 = vmatprep.subr.mxu0 0.0
    %669 = vmatpush2.msra.mxu0 0.0
    %670 = vmatprep.subr.mxu0 0.0
    %671 = vmatpush2.msra.mxu0 0.0
    %672 = vmatprep.subr.mxu0 0.0
    %673 = vmatpush2.msra.mxu0 0.0
    %674 = vmatprep.subr.mxu0 0.0
    %675 = vmatpush2.msra.mxu0 0.0
    %676 = vmatprep.subr.mxu0 0.0
    %677 = vmatpush2.msra.mxu0 0.0
    %678 = vmatprep.subr.mxu0 0.0
    %679 = vmatpush2.msra.mxu0 0.0
    %680 = vmatprep.subr.mxu0 0.0
    %681 = vmatpush2.msra.mxu0 0.0
    %682 = vmatprep.subr.mxu0 0.0
    %683 = vmatpush2.msra.mxu0 0.0
    %684 = vmatprep.subr.mxu0 0.0
    %685 = vmatpush2.msra.mxu0 0.0
    %686 = vmatprep.subr.mxu0 0.0
    %687 = vmatpush2.msra.mxu0 0.0
    %688 = vmatprep.subr.mxu0 0.0
    %689 = vmatpush2.msra.mxu0 0.0
    %690 = vmatprep.subr.mxu0 0.0
    %691 = vmatpush2.msra.mxu0 0.0
    %692 = vmatprep.subr.mxu0 0.0
    %693 = vmatpush2.msra.mxu0 0.0
    %694 = vmatprep.subr.mxu0 0.0
    %695 = vmatpush2.msra.mxu0 0.0
    %696 = vmatprep.subr.mxu0 0.0
    %697 = vmatpush2.msra.mxu0 0.0
    %698 = vmatprep.subr.mxu0 0.0
    %699 = vmatpush2.msra.mxu0 0.0
    %700 = vmatprep.mubr.f32.mxu0 0.0
    %701 = vmatmul.mubr.f32.gmra.mxu0 %v606
    %v702 = vpop.f32.mrf.mxu0
    %v703 = vadd.f32 %v602, %v702
    %v704 = vpop.f32.mrf.mxu0
    %705 = vmatprep.mubr.f32.mxu0 0.0
    %706 = vmatmul.mubr.f32.gmra.mxu0 %v609
    %v707 = vpop.f32.mrf.mxu0
    %v708 = vadd.f32 %v602, %v707
    %v709 = vpop.f32.mrf.mxu0
    %710 = vmatprep.mubr.f32.mxu0 0.0
    %711 = vmatmul.mubr.f32.gmra.mxu0 %v612
    %v712 = vpop.f32.mrf.mxu0
    %v713 = vadd.f32 %v602, %v712
    %v714 = vpop.f32.mrf.mxu0
    %715 = vmatprep.mubr.f32.mxu0 0.0
    %716 = vmatmul.mubr.f32.gmra.mxu0 %v615
    %v717 = vpop.f32.mrf.mxu0
    %v718 = vadd.f32 %v602, %v717
    %v719 = vpop.f32.mrf.mxu0
    %720 = vmatprep.mubr.f32.mxu0 0.0
    %721 = vmatmul.mubr.f32.gmra.mxu0 %v618
    %v722 = vpop.f32.mrf.mxu0
    %v723 = vadd.f32 %v602, %v722
    %v724 = vpop.f32.mrf.mxu0
    %725 = vmatprep.mubr.f32.mxu0 0.0
    %726 = vmatmul.mubr.f32.gmra.mxu0 %v621
    %v727 = vpop.f32.mrf.mxu0
    %v728 = vadd.f32 %v602, %v727
    %v729 = vpop.f32.mrf.mxu0
    %730 = vmatprep.mubr.f32.mxu0 0.0
    %731 = vmatmul.mubr.f32.gmra.mxu0 %v624
    %v732 = vpop.f32.mrf.mxu0
    %v733 = vadd.f32 %v602, %v732
    %v734 = vpop.f32.mrf.mxu0
    %735 = vmatprep.mubr.f32.mxu0 0.0
    %736 = vmatmul.mubr.f32.gmra.mxu0 %v627
    %v737 = vpop.f32.mrf.mxu0
    %v738 = vadd.f32 %v602, %v737
    %v739 = vpop.f32.mrf.mxu0
    %740 = vmatprep.mubr.f32.mxu0 0.0
    %741 = vmatmul.mubr.f32.gmra.mxu0 %v630
    %v742 = vpop.f32.mrf.mxu0
    %v743 = vadd.f32 %v602, %v742
    %v744 = vpop.f32.mrf.mxu0
    %745 = vdwg.mxu0
    %v746 = vmax.f32 %v703, 0.0
    %v747 = vmax.f32 %v708, 0.0
    %v748 = vmax.f32 %v713, 0.0
    %v749 = vmax.f32 %v718, 0.0
    %v750 = vmax.f32 %v723, 0.0
    %v751 = vmax.f32 %v728, 0.0
    %v752 = vmax.f32 %v733, 0.0
    %v753 = vmax.f32 %v738, 0.0
    %v754 = vmax.f32 %v743, 0.0
    %vm755 = vcmask 523264
    %756 = vst.msk [vmem:[#allocation2] sm:$0xff] %vm755, %v746
    %757 = vst.msk [vmem:[#allocation2 + $0x8] sm:$0xff] %vm755, %v747
    %758 = vst.msk [vmem:[#allocation2 + $0x10] sm:$0xff] %vm755, %v748
    %759 = vst.msk [vmem:[#allocation2 + $0x18] sm:$0xff] %vm755, %v749
    %760 = vst.msk [vmem:[#allocation2 + $0x20] sm:$0xff] %vm755, %v750
    %761 = vst.msk [vmem:[#allocation2 + $0x28] sm:$0xff] %vm755, %v751
    %762 = vst.msk [vmem:[#allocation2 + $0x30] sm:$0xff] %vm755, %v752
    %763 = vst.msk [vmem:[#allocation2 + $0x38] sm:$0xff] %vm755, %v753
    %764 = vst.msk [vmem:[#allocation2 + $0x40] sm:$0xff] %vm755, %v754
    %v765 = vld [vmem:[#allocation2] sm:$0xf]
    %v766 = vld [vmem:[#allocation2 + $0x1] sm:$0xf]
    %v767 = vld [vmem:[#allocation2 + $0x2] sm:$0xf]
    %v768 = vld [vmem:[#allocation2 + $0x6] sm:$0xf]
    %v769 = vld [vmem:[#allocation2 + $0x7] sm:$0xf]
    %v770 = vld [vmem:[#allocation2 + $0x8] sm:$0xf]
    %v771 = vld [vmem:[#allocation2 + $0xc] sm:$0xf]
    %v772 = vld [vmem:[#allocation2 + $0xd] sm:$0xf]
    %v773 = vld [vmem:[#allocation2 + $0xe] sm:$0xf]
    %775 = vrot.lane.b32.xlu0 %v766, 64
    %v776 = vpop.permute.xlu0 %775
    %779 = vrot.lane.b32.xlu0 %v768, 64
    %v780 = vpop.permute.xlu0 %779
    %783 = vrot.lane.b32.xlu0 %v770, 64
    %v784 = vpop.permute.xlu0 %783
    %787 = vrot.lane.b32.xlu0 %v772, 64
    %v788 = vpop.permute.xlu0 %787
    %v790 = vsel %vm755, %v765, %v776
    %v791 = vsel %vm755, %v767, %v780
    %v792 = vsel %vm755, %v769, %v784
    %v793 = vsel %vm755, %v771, %v788
    %v794 = vld [vmem:[#allocation2 + $0x12] sm:$0xf]
    %v795 = vld [vmem:[#allocation2 + $0x13] sm:$0xf]
    %v796 = vld [vmem:[#allocation2 + $0x14] sm:$0xf]
    %798 = vrot.lane.b32.xlu0 %v769, 64
    %v799 = vpop.permute.xlu0 %798
    %802 = vrot.lane.b32.xlu0 %v771, 64
    %v803 = vpop.permute.xlu0 %802
    %806 = vrot.lane.b32.xlu0 %v773, 64
    %v807 = vpop.permute.xlu0 %806
    %810 = vrot.lane.b32.xlu0 %v795, 64
    %v811 = vpop.permute.xlu0 %810
    %v813 = vsel %vm755, %v768, %v799
    %v814 = vsel %vm755, %v770, %v803
    %v815 = vsel %vm755, %v772, %v807
    %v816 = vsel %vm755, %v794, %v811
    %v817 = vld [vmem:[#allocation2 + $0x18] sm:$0xf]
    %v818 = vld [vmem:[#allocation2 + $0x19] sm:$0xf]
    %v819 = vld [vmem:[#allocation2 + $0x1a] sm:$0xf]
    %821 = vrot.lane.b32.xlu0 %v794, 64
    %v822 = vpop.permute.xlu0 %821
    %825 = vrot.lane.b32.xlu0 %v796, 64
    %v826 = vpop.permute.xlu0 %825
    %829 = vrot.lane.b32.xlu0 %v818, 64
    %v830 = vpop.permute.xlu0 %829
    %v832 = vsel %vm755, %v773, %v822
    %v833 = vsel %vm755, %v795, %v826
    %v834 = vsel %vm755, %v817, %v830
    %v835 = vld [vmem:[#allocation2 + $0x1e] sm:$0xf]
    %v836 = vld [vmem:[#allocation2 + $0x1f] sm:$0xf]
    %v837 = vld [vmem:[#allocation2 + $0x20] sm:$0xf]
    %839 = vrot.lane.b32.xlu0 %v817, 64
    %v840 = vpop.permute.xlu0 %839
    %843 = vrot.lane.b32.xlu0 %v819, 64
    %v844 = vpop.permute.xlu0 %843
    %847 = vrot.lane.b32.xlu0 %v836, 64
    %v848 = vpop.permute.xlu0 %847
    %v850 = vsel %vm755, %v796, %v840
    %v851 = vsel %vm755, %v818, %v844
    %v852 = vsel %vm755, %v835, %v848
    %v853 = vld [vmem:[#allocation2 + $0x24] sm:$0xf]
    %v854 = vld [vmem:[#allocation2 + $0x25] sm:$0xf]
    %v855 = vld [vmem:[#allocation2 + $0x26] sm:$0xf]
    %v856 = vld [vmem:[#allocation2 + $0x2a] sm:$0xf]
    %v857 = vld [vmem:[#allocation2 + $0x2b] sm:$0xf]
    %v858 = vld [vmem:[#allocation2 + $0x2c] sm:$0xf]
    %v859 = vld [vmem:[#allocation2 + $0x30] sm:$0xf]
    %v860 = vld [vmem:[#allocation2 + $0x31] sm:$0xf]
    %v861 = vld [vmem:[#allocation2 + $0x32] sm:$0xf]
    %863 = vrot.lane.b32.xlu0 %v854, 64
    %v864 = vpop.permute.xlu0 %863
    %867 = vrot.lane.b32.xlu0 %v856, 64
    %v868 = vpop.permute.xlu0 %867
    %871 = vrot.lane.b32.xlu0 %v858, 64
    %v872 = vpop.permute.xlu0 %871
    %875 = vrot.lane.b32.xlu0 %v860, 64
    %v876 = vpop.permute.xlu0 %875
    %v878 = vsel %vm755, %v853, %v864
    %v879 = vsel %vm755, %v855, %v868
    %v880 = vsel %vm755, %v857, %v872
    %v881 = vsel %vm755, %v859, %v876
    %v882 = vld [vmem:[#allocation2 + $0x36] sm:$0xf]
    %v883 = vld [vmem:[#allocation2 + $0x37] sm:$0xf]
    %v884 = vld [vmem:[#allocation2 + $0x38] sm:$0xf]
    %886 = vrot.lane.b32.xlu0 %v857, 64
    %v887 = vpop.permute.xlu0 %886
    %890 = vrot.lane.b32.xlu0 %v859, 64
    %v891 = vpop.permute.xlu0 %890
    %894 = vrot.lane.b32.xlu0 %v861, 64
    %v895 = vpop.permute.xlu0 %894
    %898 = vrot.lane.b32.xlu0 %v883, 64
    %v899 = vpop.permute.xlu0 %898
    %v901 = vsel %vm755, %v856, %v887
    %v902 = vsel %vm755, %v858, %v891
    %v903 = vsel %vm755, %v860, %v895
    %v904 = vsel %vm755, %v882, %v899
    %v905 = vld [vmem:[#allocation2 + $0x3c] sm:$0xf]
    %v906 = vld [vmem:[#allocation2 + $0x3d] sm:$0xf]
    %v907 = vld [vmem:[#allocation2 + $0x3e] sm:$0xf]
    %909 = vrot.lane.b32.xlu0 %v882, 64
    %v910 = vpop.permute.xlu0 %909
    %913 = vrot.lane.b32.xlu0 %v884, 64
    %v914 = vpop.permute.xlu0 %913
    %917 = vrot.lane.b32.xlu0 %v906, 64
    %v918 = vpop.permute.xlu0 %917
    %v920 = vsel %vm755, %v861, %v910
    %v921 = vsel %vm755, %v883, %v914
    %v922 = vsel %vm755, %v905, %v918
    %v923 = vld [vmem:[#allocation2 + $0x42] sm:$0xf]
    %v924 = vld [vmem:[#allocation2 + $0x43] sm:$0xf]
    %v925 = vld [vmem:[#allocation2 + $0x44] sm:$0xf]
    %927 = vrot.lane.b32.xlu0 %v905, 64
    %v928 = vpop.permute.xlu0 %927
    %931 = vrot.lane.b32.xlu0 %v907, 64
    %v932 = vpop.permute.xlu0 %931
    %935 = vrot.lane.b32.xlu0 %v924, 64
    %v936 = vpop.permute.xlu0 %935
    %v938 = vsel %vm755, %v884, %v928
    %v939 = vsel %vm755, %v906, %v932
    %v940 = vsel %vm755, %v923, %v936
    %v945 = vrot.slane %v813, 4
    %v946 = vrot.slane %v814, 4
    %v947 = vrot.slane %v815, 4
    %v948 = vrot.slane %v816, 4
    %v949 = vrot.slane %v796, 4
    %v959 = vrot.slane %v850, 4
    %v960 = vrot.slane %v851, 4
    %v961 = vrot.slane %v852, 4
    %v962 = vrot.slane %v837, 4
    %v971 = vrot.slane %v901, 4
    %v972 = vrot.slane %v902, 4
    %v973 = vrot.slane %v903, 4
    %v974 = vrot.slane %v904, 4
    %v975 = vrot.slane %v884, 4
    %v985 = vrot.slane %v938, 4
    %v986 = vrot.slane %v939, 4
    %v987 = vrot.slane %v940, 4
    %v988 = vrot.slane %v925, 4
    %vm993 = vcmask 1043456
    %v994 = vsel %vm993, %v790, %v945
    %v995 = vsel %vm993, %v791, %v946
    %v996 = vsel %vm993, %v792, %v947
    %v997 = vsel %vm993, %v793, %v948
    %v998 = vsel %vm993, %v773, %v949
    %v999 = vsel %vm993, %v832, %v959
    %v1000 = vsel %vm993, %v833, %v960
    %v1001 = vsel %vm993, %v834, %v961
    %v1002 = vsel %vm993, %v819, %v962
    %v1003 = vsel %vm993, %v878, %v971
    %v1004 = vsel %vm993, %v879, %v972
    %v1005 = vsel %vm993, %v880, %v973
    %v1006 = vsel %vm993, %v881, %v974
    %v1007 = vsel %vm993, %v861, %v975
    %v1008 = vsel %vm993, %v920, %v985
    %v1009 = vsel %vm993, %v921, %v986
    %v1010 = vsel %vm993, %v922, %v987
    %v1011 = vsel %vm993, %v907, %v988
    %v1012 = vld [vmem:[%s3] sm:$0xff]
    %v1013 = vld [vmem:[%s3 + $0x8] sm:$0xff]
    %v1014 = vld [vmem:[%s3 + $0x10] sm:$0xff]
    %v1015 = vld [vmem:[%s3 + $0x18] sm:$0xff]
    %v1016 = vld [vmem:[%s3 + $0x20] sm:$0xff]
    %v1017 = vld [vmem:[%s3 + $0x28] sm:$0xff]
    %v1018 = vld [vmem:[%s3 + $0x30] sm:$0xff]
    %v1019 = vld [vmem:[%s3 + $0x38] sm:$0xff]
    %v1020 = vld [vmem:[%s3 + $0x40] sm:$0xff]
    %v1021 = vld [vmem:[%s3 + $0x48] sm:$0xff]
    %v1022 = vld [vmem:[%s3 + $0x50] sm:$0xff]
    %v1023 = vld [vmem:[%s3 + $0x58] sm:$0xff]
    %v1024 = vld [vmem:[%s3 + $0x60] sm:$0xff]
    %v1025 = vld [vmem:[%s3 + $0x68] sm:$0xff]
    %v1026 = vld [vmem:[%s3 + $0x70] sm:$0xff]
    %v1027 = vld [vmem:[%s3 + $0x78] sm:$0xff]
    %v1028 = vld [vmem:[%s3 + $0x80] sm:$0xff]
    %v1029 = vld [vmem:[%s3 + $0x88] sm:$0xff]
    %v1030 = vld [vmem:[%s3 + $0x90] sm:$0xff]
    %v1031 = vld [vmem:[%s3 + $0x98] sm:$0xff]
    %v1032 = vld [vmem:[%s3 + $0xa0] sm:$0xff]
    %v1033 = vld [vmem:[%s3 + $0xa8] sm:$0xff]
    %v1034 = vld [vmem:[%s3 + $0xb0] sm:$0xff]
    %v1035 = vld [vmem:[%s3 + $0xb8] sm:$0xff]
    %v1036 = vld [vmem:[%s3 + $0xc0] sm:$0xff]
    %v1037 = vld [vmem:[%s3 + $0xc8] sm:$0xff]
    %v1038 = vld [vmem:[%s3 + $0xd0] sm:$0xff]
    %v1039 = vld [vmem:[%s3 + $0xd8] sm:$0xff]
    %v1040 = vld [vmem:[%s3 + $0xe0] sm:$0xff]
    %v1041 = vld [vmem:[%s3 + $0xe8] sm:$0xff]
    %v1042 = vld [vmem:[%s3 + $0xf0] sm:$0xff]
    %v1043 = vld [vmem:[%s3 + $0xf8] sm:$0xff]
    %v1044 = vld [vmem:[%s3 + $0x100] sm:$0xff]
    %v1045 = vld [vmem:[%s3 + $0x108] sm:$0xff]
    %v1046 = vld [vmem:[%s3 + $0x110] sm:$0xff]
    %v1047 = vld [vmem:[%s3 + $0x118] sm:$0xff]
    %v1048 = vld [vmem:[%s3 + $0x120] sm:$0xff]
    %v1049 = vld [vmem:[%s3 + $0x128] sm:$0xff]
    %v1050 = vld [vmem:[%s3 + $0x130] sm:$0xff]
    %v1051 = vld [vmem:[%s3 + $0x138] sm:$0xff]
    %v1052 = vld [vmem:[%s3 + $0x140] sm:$0xff]
    %v1053 = vld [vmem:[%s3 + $0x148] sm:$0xff]
    %v1054 = vld [vmem:[%s3 + $0x150] sm:$0xff]
    %v1055 = vld [vmem:[%s3 + $0x158] sm:$0xff]
    %v1056 = vld [vmem:[%s3 + $0x160] sm:$0xff]
    %v1057 = vld [vmem:[%s3 + $0x168] sm:$0xff]
    %v1058 = vld [vmem:[%s3 + $0x170] sm:$0xff]
    %v1059 = vld [vmem:[%s3 + $0x178] sm:$0xff]
    %v1060 = vld [vmem:[%s3 + $0x180] sm:$0xff]
    %v1061 = vld [vmem:[%s3 + $0x188] sm:$0xff]
    %v1062 = vld [vmem:[%s3 + $0x190] sm:$0xff]
    %v1063 = vld [vmem:[%s3 + $0x198] sm:$0xff]
    %v1064 = vld [vmem:[%s3 + $0x1a0] sm:$0xff]
    %v1065 = vld [vmem:[%s3 + $0x1a8] sm:$0xff]
    %v1066 = vld [vmem:[%s3 + $0x1b0] sm:$0xff]
    %v1067 = vld [vmem:[%s3 + $0x1b8] sm:$0xff]
    %v1068 = vld [vmem:[%s3 + $0x1c0] sm:$0xff]
    %v1069 = vld [vmem:[%s3 + $0x1c8] sm:$0xff]
    %v1070 = vld [vmem:[%s3 + $0x1d0] sm:$0xff]
    %v1071 = vld [vmem:[%s3 + $0x1d8] sm:$0xff]
    %v1072 = vld [vmem:[%s3 + $0x1e0] sm:$0xff]
    %v1073 = vld [vmem:[%s3 + $0x1e8] sm:$0xff]
    %v1074 = vld [vmem:[%s3 + $0x1f0] sm:$0xff]
    %v1075 = vld [vmem:[%s3 + $0x1f8] sm:$0xff]
    %v1076 = vld [vmem:[%s3 + $0x200] sm:$0xff]
    %v1077 = vld [vmem:[%s3 + $0x208] sm:$0xff]
    %v1078 = vld [vmem:[%s3 + $0x210] sm:$0xff]
    %v1079 = vld [vmem:[%s3 + $0x218] sm:$0xff]
    %v1080 = vld [vmem:[%s3 + $0x220] sm:$0xff]
    %v1081 = vld [vmem:[%s3 + $0x228] sm:$0xff]
    %v1082 = vld [vmem:[%s3 + $0x230] sm:$0xff]
    %v1083 = vld [vmem:[%s3 + $0x238] sm:$0xff]
    %v1084 = vld [vmem:[%s4] sm:$0x1]
    %v1086 = vlaneseq
    %v1087 = vshrl.u32 %v1086, 7
    %v1088 = vsub.s32 0, %v1087
    %v1089 = vrot.slane %v1084, %v1088
    %v1092 = vsel %vm755, %v998, 0
    %v1095 = vsel %vm755, %v1002, 0
    %v1098 = vsel %vm755, %v1007, 0
    %v1101 = vsel %vm755, %v1011, 0
    %1103 = vmatprep.subr.mxu0 0.0
    %1104 = vmatpush1.msra.mxu0 %v1027
    %1105 = vmatprep.subr.mxu0 0.0
    %1106 = vmatpush1.msra.mxu0 %v1026
    %1107 = vmatprep.subr.mxu0 0.0
    %1108 = vmatpush1.msra.mxu0 %v1025
    %1109 = vmatprep.subr.mxu0 0.0
    %1110 = vmatpush1.msra.mxu0 %v1024
    %1111 = vmatprep.subr.mxu0 0.0
    %1112 = vmatpush1.msra.mxu0 %v1023
    %1113 = vmatprep.subr.mxu0 0.0
    %1114 = vmatpush1.msra.mxu0 %v1022
    %1115 = vmatprep.subr.mxu0 0.0
    %1116 = vmatpush1.msra.mxu0 %v1021
    %1117 = vmatprep.subr.mxu0 0.0
    %1118 = vmatpush1.msra.mxu0 %v1020
    %1119 = vmatprep.subr.mxu0 0.0
    %1120 = vmatpush1.msra.mxu0 %v1019
    %1121 = vmatprep.subr.mxu0 0.0
    %1122 = vmatpush1.msra.mxu0 %v1018
    %1123 = vmatprep.subr.mxu0 0.0
    %1124 = vmatpush1.msra.mxu0 %v1017
    %1125 = vmatprep.subr.mxu0 0.0
    %1126 = vmatpush1.msra.mxu0 %v1016
    %1127 = vmatprep.subr.mxu0 0.0
    %1128 = vmatpush1.msra.mxu0 %v1015
    %1129 = vmatprep.subr.mxu0 0.0
    %1130 = vmatpush1.msra.mxu0 %v1014
    %1131 = vmatprep.subr.mxu0 0.0
    %1132 = vmatpush1.msra.mxu0 %v1013
    %1133 = vmatprep.subr.mxu0 0.0
    %1134 = vmatpush1.msra.mxu0 %v1012
    %1135 = vmatprep.subr.mxu0 0.0
    %1136 = vmatpush2.msra.mxu0 %v1043
    %1137 = vmatprep.subr.mxu0 0.0
    %1138 = vmatpush2.msra.mxu0 %v1042
    %1139 = vmatprep.subr.mxu0 0.0
    %1140 = vmatpush2.msra.mxu0 %v1041
    %1141 = vmatprep.subr.mxu0 0.0
    %1142 = vmatpush2.msra.mxu0 %v1040
    %1143 = vmatprep.subr.mxu0 0.0
    %1144 = vmatpush2.msra.mxu0 %v1039
    %1145 = vmatprep.subr.mxu0 0.0
    %1146 = vmatpush2.msra.mxu0 %v1038
    %1147 = vmatprep.subr.mxu0 0.0
    %1148 = vmatpush2.msra.mxu0 %v1037
    %1149 = vmatprep.subr.mxu0 0.0
    %1150 = vmatpush2.msra.mxu0 %v1036
    %1151 = vmatprep.subr.mxu0 0.0
    %1152 = vmatpush2.msra.mxu0 %v1035
    %1153 = vmatprep.subr.mxu0 0.0
    %1154 = vmatpush2.msra.mxu0 %v1034
    %1155 = vmatprep.subr.mxu0 0.0
    %1156 = vmatpush2.msra.mxu0 %v1033
    %1157 = vmatprep.subr.mxu0 0.0
    %1158 = vmatpush2.msra.mxu0 %v1032
    %1159 = vmatprep.subr.mxu0 0.0
    %1160 = vmatpush2.msra.mxu0 %v1031
    %1161 = vmatprep.subr.mxu0 0.0
    %1162 = vmatpush2.msra.mxu0 %v1030
    %1163 = vmatprep.subr.mxu0 0.0
    %1164 = vmatpush2.msra.mxu0 %v1029
    %1165 = vmatprep.subr.mxu0 0.0
    %1166 = vmatpush2.msra.mxu0 %v1028
    %1167 = vmatprep.mubr.f32.mxu0 %v995
    %1168 = vmatmul.mubr.f32.gmra.mxu0 %v994
    %v1169 = vpop.f32.mrf.mxu0
    %v1170 = vadd.f32 %v1089, %v1169
    %v1171 = vpop.f32.mrf.mxu0
    %1172 = vmatprep.mubr.f32.mxu0 %v999
    %1173 = vmatmul.mubr.f32.gmra.mxu0 %v997
    %v1174 = vpop.f32.mrf.mxu0
    %v1175 = vadd.f32 %v1089, %v1174
    %v1176 = vpop.f32.mrf.mxu0
    %1177 = vmatprep.mubr.f32.mxu0 %v1004
    %1178 = vmatmul.mubr.f32.gmra.mxu0 %v1003
    %v1179 = vpop.f32.mrf.mxu0
    %v1180 = vadd.f32 %v1089, %v1179
    %v1181 = vpop.f32.mrf.mxu0
    %1182 = vmatprep.mubr.f32.mxu0 %v1008
    %1183 = vmatmul.mubr.f32.gmra.mxu0 %v1006
    %v1184 = vpop.f32.mrf.mxu0
    %v1185 = vadd.f32 %v1089, %v1184
    %v1186 = vpop.f32.mrf.mxu0
    %1187 = vdwg.mxu0
    %1188 = vmatprep.subr.mxu0 0.0
    %1189 = vmatpush1.msra.mxu0 %v1059
    %1190 = vmatprep.subr.mxu0 0.0
    %1191 = vmatpush1.msra.mxu0 %v1058
    %1192 = vmatprep.subr.mxu0 0.0
    %1193 = vmatpush1.msra.mxu0 %v1057
    %1194 = vmatprep.subr.mxu0 0.0
    %1195 = vmatpush1.msra.mxu0 %v1056
    %1196 = vmatprep.subr.mxu0 0.0
    %1197 = vmatpush1.msra.mxu0 %v1055
    %1198 = vmatprep.subr.mxu0 0.0
    %1199 = vmatpush1.msra.mxu0 %v1054
    %1200 = vmatprep.subr.mxu0 0.0
    %1201 = vmatpush1.msra.mxu0 %v1053
    %1202 = vmatprep.subr.mxu0 0.0
    %1203 = vmatpush1.msra.mxu0 %v1052
    %1204 = vmatprep.subr.mxu0 0.0
    %1205 = vmatpush1.msra.mxu0 %v1051
    %1206 = vmatprep.subr.mxu0 0.0
    %1207 = vmatpush1.msra.mxu0 %v1050
    %1208 = vmatprep.subr.mxu0 0.0
    %1209 = vmatpush1.msra.mxu0 %v1049
    %1210 = vmatprep.subr.mxu0 0.0
    %1211 = vmatpush1.msra.mxu0 %v1048
    %1212 = vmatprep.subr.mxu0 0.0
    %1213 = vmatpush1.msra.mxu0 %v1047
    %1214 = vmatprep.subr.mxu0 0.0
    %1215 = vmatpush1.msra.mxu0 %v1046
    %1216 = vmatprep.subr.mxu0 0.0
    %1217 = vmatpush1.msra.mxu0 %v1045
    %1218 = vmatprep.subr.mxu0 0.0
    %1219 = vmatpush1.msra.mxu0 %v1044
    %1220 = vmatprep.subr.mxu0 0.0
    %1221 = vmatpush2.msra.mxu0 %v1075
    %1222 = vmatprep.subr.mxu0 0.0
    %1223 = vmatpush2.msra.mxu0 %v1074
    %1224 = vmatprep.subr.mxu0 0.0
    %1225 = vmatpush2.msra.mxu0 %v1073
    %1226 = vmatprep.subr.mxu0 0.0
    %1227 = vmatpush2.msra.mxu0 %v1072
    %1228 = vmatprep.subr.mxu0 0.0
    %1229 = vmatpush2.msra.mxu0 %v1071
    %1230 = vmatprep.subr.mxu0 0.0
    %1231 = vmatpush2.msra.mxu0 %v1070
    %1232 = vmatprep.subr.mxu0 0.0
    %1233 = vmatpush2.msra.mxu0 %v1069
    %1234 = vmatprep.subr.mxu0 0.0
    %1235 = vmatpush2.msra.mxu0 %v1068
    %1236 = vmatprep.subr.mxu0 0.0
    %1237 = vmatpush2.msra.mxu0 %v1067
    %1238 = vmatprep.subr.mxu0 0.0
    %1239 = vmatpush2.msra.mxu0 %v1066
    %1240 = vmatprep.subr.mxu0 0.0
    %1241 = vmatpush2.msra.mxu0 %v1065
    %1242 = vmatprep.subr.mxu0 0.0
    %1243 = vmatpush2.msra.mxu0 %v1064
    %1244 = vmatprep.subr.mxu0 0.0
    %1245 = vmatpush2.msra.mxu0 %v1063
    %1246 = vmatprep.subr.mxu0 0.0
    %1247 = vmatpush2.msra.mxu0 %v1062
    %1248 = vmatprep.subr.mxu0 0.0
    %1249 = vmatpush2.msra.mxu0 %v1061
    %1250 = vmatprep.subr.mxu0 0.0
    %1251 = vmatpush2.msra.mxu0 %v1060
    %1252 = vmatprep.mubr.f32.mxu0 %v997
    %1253 = vmatmul.mubr.f32.gmra.mxu0 %v996
    %v1254 = vpop.f32.mrf.mxu0
    %v1255 = vadd.f32 %v1170, %v1254
    %v1256 = vpop.f32.mrf.mxu0
    %1257 = vmatprep.mubr.f32.mxu0 %v1001
    %1258 = vmatmul.mubr.f32.gmra.mxu0 %v1000
    %v1259 = vpop.f32.mrf.mxu0
    %v1260 = vadd.f32 %v1175, %v1259
    %v1261 = vpop.f32.mrf.mxu0
    %1262 = vmatprep.mubr.f32.mxu0 %v1006
    %1263 = vmatmul.mubr.f32.gmra.mxu0 %v1005
    %v1264 = vpop.f32.mrf.mxu0
    %v1265 = vadd.f32 %v1180, %v1264
    %v1266 = vpop.f32.mrf.mxu0
    %1267 = vmatprep.mubr.f32.mxu0 %v1010
    %1268 = vmatmul.mubr.f32.gmra.mxu0 %v1009
    %v1269 = vpop.f32.mrf.mxu0
    %v1270 = vadd.f32 %v1185, %v1269
    %v1271 = vpop.f32.mrf.mxu0
    %1272 = vdwg.mxu0
    %1273 = vmatprep.subr.mxu0 0.0
    %1274 = vmatpush1.msra.mxu0 0.0
    %1275 = vmatprep.subr.mxu0 0.0
    %1276 = vmatpush1.msra.mxu0 0.0
    %1277 = vmatprep.subr.mxu0 0.0
    %1278 = vmatpush1.msra.mxu0 0.0
    %1279 = vmatprep.subr.mxu0 0.0
    %1280 = vmatpush1.msra.mxu0 0.0
    %1281 = vmatprep.subr.mxu0 0.0
    %1282 = vmatpush1.msra.mxu0 0.0
    %1283 = vmatprep.subr.mxu0 0.0
    %1284 = vmatpush1.msra.mxu0 0.0
    %1285 = vmatprep.subr.mxu0 0.0
    %1286 = vmatpush1.msra.mxu0 0.0
    %1287 = vmatprep.subr.mxu0 0.0
    %1288 = vmatpush1.msra.mxu0 0.0
    %1289 = vmatprep.subr.mxu0 0.0
    %1290 = vmatpush1.msra.mxu0 %v1083
    %1291 = vmatprep.subr.mxu0 0.0
    %1292 = vmatpush1.msra.mxu0 %v1082
    %1293 = vmatprep.subr.mxu0 0.0
    %1294 = vmatpush1.msra.mxu0 %v1081
    %1295 = vmatprep.subr.mxu0 0.0
    %1296 = vmatpush1.msra.mxu0 %v1080
    %1297 = vmatprep.subr.mxu0 0.0
    %1298 = vmatpush1.msra.mxu0 %v1079
    %1299 = vmatprep.subr.mxu0 0.0
    %1300 = vmatpush1.msra.mxu0 %v1078
    %1301 = vmatprep.subr.mxu0 0.0
    %1302 = vmatpush1.msra.mxu0 %v1077
    %1303 = vmatprep.subr.mxu0 0.0
    %1304 = vmatpush1.msra.mxu0 %v1076
    %1305 = vmatprep.subr.mxu0 0.0
    %1306 = vmatpush2.msra.mxu0 0.0
    %1307 = vmatprep.subr.mxu0 0.0
    %1308 = vmatpush2.msra.mxu0 0.0
    %1309 = vmatprep.subr.mxu0 0.0
    %1310 = vmatpush2.msra.mxu0 0.0
    %1311 = vmatprep.subr.mxu0 0.0
    %1312 = vmatpush2.msra.mxu0 0.0
    %1313 = vmatprep.subr.mxu0 0.0
    %1314 = vmatpush2.msra.mxu0 0.0
    %1315 = vmatprep.subr.mxu0 0.0
    %1316 = vmatpush2.msra.mxu0 0.0
    %1317 = vmatprep.subr.mxu0 0.0
    %1318 = vmatpush2.msra.mxu0 0.0
    %1319 = vmatprep.subr.mxu0 0.0
    %1320 = vmatpush2.msra.mxu0 0.0
    %1321 = vmatprep.subr.mxu0 0.0
    %1322 = vmatpush2.msra.mxu0 0.0
    %1323 = vmatprep.subr.mxu0 0.0
    %1324 = vmatpush2.msra.mxu0 0.0
    %1325 = vmatprep.subr.mxu0 0.0
    %1326 = vmatpush2.msra.mxu0 0.0
    %1327 = vmatprep.subr.mxu0 0.0
    %1328 = vmatpush2.msra.mxu0 0.0
    %1329 = vmatprep.subr.mxu0 0.0
    %1330 = vmatpush2.msra.mxu0 0.0
    %1331 = vmatprep.subr.mxu0 0.0
    %1332 = vmatpush2.msra.mxu0 0.0
    %1333 = vmatprep.subr.mxu0 0.0
    %1334 = vmatpush2.msra.mxu0 0.0
    %1335 = vmatprep.subr.mxu0 0.0
    %1336 = vmatpush2.msra.mxu0 0.0
    %1337 = vmatprep.mubr.f32.mxu0 0.0
    %1338 = vmatmul.mubr.f32.gmra.mxu0 %v1092
    %v1339 = vpop.f32.mrf.mxu0
    %v1340 = vadd.f32 %v1255, %v1339
    %v1341 = vpop.f32.mrf.mxu0
    %1342 = vmatprep.mubr.f32.mxu0 0.0
    %1343 = vmatmul.mubr.f32.gmra.mxu0 %v1095
    %v1344 = vpop.f32.mrf.mxu0
    %v1345 = vadd.f32 %v1260, %v1344
    %v1346 = vpop.f32.mrf.mxu0
    %1347 = vmatprep.mubr.f32.mxu0 0.0
    %1348 = vmatmul.mubr.f32.gmra.mxu0 %v1098
    %v1349 = vpop.f32.mrf.mxu0
    %v1350 = vadd.f32 %v1265, %v1349
    %v1351 = vpop.f32.mrf.mxu0
    %1352 = vmatprep.mubr.f32.mxu0 0.0
    %1353 = vmatmul.mubr.f32.gmra.mxu0 %v1101
    %v1354 = vpop.f32.mrf.mxu0
    %v1355 = vadd.f32 %v1270, %v1354
    %v1356 = vpop.f32.mrf.mxu0
    %1357 = vdwg.mxu0
    %v1358 = vmax.f32 %v1340, 0.0
    %v1359 = vmax.f32 %v1345, 0.0
    %v1360 = vmax.f32 %v1350, 0.0
    %v1361 = vmax.f32 %v1355, 0.0
    %v1363 = vrot.slane %v1358, 1
    %1364 = vrot.lane.b32.xlu0 %v1363, 64
    %v1365 = vpop.permute.xlu0 %1364
    %v1367 = vrot.slane %v1358, 2
    %v1369 = vrot.slane %v1358, 3
    %1370 = vrot.lane.b32.xlu0 %v1369, 64
    %v1371 = vpop.permute.xlu0 %1370
    %v1373 = vrot.slane %v1358, 4
    %v1375 = vrot.slane %v1358, 5
    %1376 = vrot.lane.b32.xlu0 %v1375, 64
    %v1377 = vpop.permute.xlu0 %1376
    %v1379 = vrot.slane %v1358, 6
    %v1381 = vrot.slane %v1358, 7
    %1382 = vrot.lane.b32.xlu0 %v1381, 64
    %v1383 = vpop.permute.xlu0 %1382
    %v1386 = vrot.slane %v1359, 1
    %1387 = vrot.lane.b32.xlu0 %v1386, 64
    %v1388 = vpop.permute.xlu0 %1387
    %v1390 = vrot.slane %v1359, 2
    %v1392 = vrot.slane %v1359, 3
    %1393 = vrot.lane.b32.xlu0 %v1392, 64
    %v1394 = vpop.permute.xlu0 %1393
    %v1396 = vrot.slane %v1359, 4
    %v1398 = vrot.slane %v1359, 5
    %1399 = vrot.lane.b32.xlu0 %v1398, 64
    %v1400 = vpop.permute.xlu0 %1399
    %v1402 = vrot.slane %v1359, 6
    %v1404 = vrot.slane %v1359, 7
    %1405 = vrot.lane.b32.xlu0 %v1404, 64
    %v1406 = vpop.permute.xlu0 %1405
    %v1408 = vsel %vm755, %v1358, %v1365
    %v1409 = vsel %vm755, %v1367, %v1371
    %v1410 = vsel %vm755, %v1373, %v1377
    %v1411 = vsel %vm755, %v1379, %v1383
    %v1412 = vsel %vm755, %v1359, %v1388
    %v1413 = vsel %vm755, %v1390, %v1394
    %v1414 = vsel %vm755, %v1396, %v1400
    %v1415 = vsel %vm755, %v1402, %v1406
    %v1417 = vrot.slane %v1360, 1
    %1418 = vrot.lane.b32.xlu0 %v1417, 64
    %v1419 = vpop.permute.xlu0 %1418
    %v1421 = vrot.slane %v1360, 2
    %v1423 = vrot.slane %v1360, 3
    %1424 = vrot.lane.b32.xlu0 %v1423, 64
    %v1425 = vpop.permute.xlu0 %1424
    %v1427 = vrot.slane %v1360, 4
    %v1429 = vrot.slane %v1360, 5
    %1430 = vrot.lane.b32.xlu0 %v1429, 64
    %v1431 = vpop.permute.xlu0 %1430
    %v1433 = vrot.slane %v1360, 6
    %v1435 = vrot.slane %v1360, 7
    %1436 = vrot.lane.b32.xlu0 %v1435, 64
    %v1437 = vpop.permute.xlu0 %1436
    %v1440 = vrot.slane %v1361, 1
    %1441 = vrot.lane.b32.xlu0 %v1440, 64
    %v1442 = vpop.permute.xlu0 %1441
    %v1444 = vrot.slane %v1361, 2
    %v1446 = vrot.slane %v1361, 3
    %1447 = vrot.lane.b32.xlu0 %v1446, 64
    %v1448 = vpop.permute.xlu0 %1447
    %v1450 = vrot.slane %v1361, 4
    %v1452 = vrot.slane %v1361, 5
    %1453 = vrot.lane.b32.xlu0 %v1452, 64
    %v1454 = vpop.permute.xlu0 %1453
    %v1456 = vrot.slane %v1361, 6
    %v1458 = vrot.slane %v1361, 7
    %1459 = vrot.lane.b32.xlu0 %v1458, 64
    %v1460 = vpop.permute.xlu0 %1459
    %v1462 = vsel %vm755, %v1360, %v1419
    %v1463 = vsel %vm755, %v1421, %v1425
    %v1464 = vsel %vm755, %v1427, %v1431
    %v1465 = vsel %vm755, %v1433, %v1437
    %v1466 = vsel %vm755, %v1361, %v1442
    %v1467 = vsel %vm755, %v1444, %v1448
    %v1468 = vsel %vm755, %v1450, %v1454
    %v1469 = vsel %vm755, %v1456, %v1460
    %v1478 = vrot.slane %v1462, 7
    %v1479 = vrot.slane %v1463, 7
    %v1480 = vrot.slane %v1464, 7
    %v1481 = vrot.slane %v1465, 7
    %v1482 = vrot.slane %v1466, 7
    %v1483 = vrot.slane %v1467, 7
    %v1484 = vrot.slane %v1468, 7
    %v1485 = vrot.slane %v1469, 7
    %vm1494 = vcmask 1040384
    %v1495 = vsel %vm1494, %v1408, %v1478
    %v1496 = vsel %vm1494, %v1409, %v1479
    %v1497 = vsel %vm1494, %v1410, %v1480
    %v1498 = vsel %vm1494, %v1411, %v1481
    %v1499 = vsel %vm1494, %v1412, %v1482
    %v1500 = vsel %vm1494, %v1413, %v1483
    %v1501 = vsel %vm1494, %v1414, %v1484
    %v1502 = vsel %vm1494, %v1415, %v1485
    %s1503 = smul.u32 4, 128
    %s1504 = smul.u32 %s1503, 4
    %s1505 = sshll.u32 %s1504, 4
    %1506 = dma.done [#allocation4], %s1505
    %v1507 = vpack.c.bf16 %v1495, %v1495
    %v1508 = vpack.c.bf16 %v1496, %v1496
    %v1509 = vpack.c.bf16 %v1497, %v1497
    %v1510 = vpack.c.bf16 %v1498, %v1498
    %v1511 = vpack.c.bf16 %v1499, %v1499
    %v1512 = vpack.c.bf16 %v1500, %v1500
    %v1513 = vpack.c.bf16 %v1501, %v1501
    %v1514 = vpack.c.bf16 %v1502, %v1502
    %v1515 = vld [vmem:[#allocation3] sm:$0xff]
    %v1516 = vld [vmem:[#allocation3 + $0x8] sm:$0xff]
    %v1517 = vld [vmem:[#allocation3 + $0x10] sm:$0xff]
    %v1518 = vld [vmem:[#allocation3 + $0x18] sm:$0xff]
    %v1519 = vld [vmem:[#allocation3 + $0x20] sm:$0xff]
    %v1520 = vld [vmem:[#allocation3 + $0x28] sm:$0xff]
    %v1521 = vld [vmem:[#allocation3 + $0x30] sm:$0xff]
    %v1522 = vld [vmem:[#allocation3 + $0x38] sm:$0xff]
    %v1523 = vld [vmem:[#allocation3 + $0x40] sm:$0xff]
    %v1524 = vld [vmem:[#allocation3 + $0x48] sm:$0xff]
    %v1525 = vld [vmem:[#allocation3 + $0x50] sm:$0xff]
    %v1526 = vld [vmem:[#allocation3 + $0x58] sm:$0xff]
    %v1527 = vld [vmem:[#allocation3 + $0x60] sm:$0xff]
    %v1528 = vld [vmem:[#allocation3 + $0x68] sm:$0xff]
    %v1529 = vld [vmem:[#allocation3 + $0x70] sm:$0xff]
    %v1530 = vld [vmem:[#allocation3 + $0x78] sm:$0xff]
    %v1531 = vld [vmem:[#allocation3 + $0x80] sm:$0xff]
    %v1532 = vld [vmem:[#allocation3 + $0x88] sm:$0xff]
    %v1533 = vld [vmem:[#allocation3 + $0x90] sm:$0xff]
    %v1534 = vld [vmem:[#allocation3 + $0x98] sm:$0xff]
    %v1535 = vld [vmem:[#allocation3 + $0xa0] sm:$0xff]
    %v1536 = vld [vmem:[#allocation3 + $0xa8] sm:$0xff]
    %v1537 = vld [vmem:[#allocation3 + $0xb0] sm:$0xff]
    %v1538 = vld [vmem:[#allocation3 + $0xb8] sm:$0xff]
    %v1539 = vld [vmem:[#allocation3 + $0xc0] sm:$0xff]
    %v1540 = vld [vmem:[#allocation3 + $0xc8] sm:$0xff]
    %v1541 = vld [vmem:[#allocation3 + $0xd0] sm:$0xff]
    %v1542 = vld [vmem:[#allocation3 + $0xd8] sm:$0xff]
    %v1543 = vld [vmem:[#allocation3 + $0xe0] sm:$0xff]
    %v1544 = vld [vmem:[#allocation3 + $0xe8] sm:$0xff]
    %v1545 = vld [vmem:[#allocation3 + $0xf0] sm:$0xff]
    %v1546 = vld [vmem:[#allocation3 + $0xf8] sm:$0xff]
    %v1547 = vld [vmem:[#allocation3 + $0x100] sm:$0xff]
    %v1548 = vld [vmem:[#allocation3 + $0x108] sm:$0xff]
    %v1549 = vld [vmem:[#allocation3 + $0x110] sm:$0xff]
    %v1550 = vld [vmem:[#allocation3 + $0x118] sm:$0xff]
    %v1551 = vld [vmem:[#allocation3 + $0x120] sm:$0xff]
    %v1552 = vld [vmem:[#allocation3 + $0x128] sm:$0xff]
    %v1553 = vld [vmem:[#allocation3 + $0x130] sm:$0xff]
    %v1554 = vld [vmem:[#allocation3 + $0x138] sm:$0xff]
    %v1555 = vld [vmem:[#allocation3 + $0x140] sm:$0xff]
    %v1556 = vld [vmem:[#allocation3 + $0x148] sm:$0xff]
    %v1557 = vld [vmem:[#allocation3 + $0x150] sm:$0xff]
    %v1558 = vld [vmem:[#allocation3 + $0x158] sm:$0xff]
    %v1559 = vld [vmem:[#allocation3 + $0x160] sm:$0xff]
    %v1560 = vld [vmem:[#allocation3 + $0x168] sm:$0xff]
    %v1561 = vld [vmem:[#allocation3 + $0x170] sm:$0xff]
    %v1562 = vld [vmem:[#allocation3 + $0x178] sm:$0xff]
    %v1563 = vld [vmem:[#allocation3 + $0x180] sm:$0xff]
    %v1564 = vld [vmem:[#allocation3 + $0x188] sm:$0xff]
    %v1565 = vld [vmem:[#allocation3 + $0x190] sm:$0xff]
    %v1566 = vld [vmem:[#allocation3 + $0x198] sm:$0xff]
    %v1567 = vld [vmem:[#allocation3 + $0x1a0] sm:$0xff]
    %v1568 = vld [vmem:[#allocation3 + $0x1a8] sm:$0xff]
    %v1569 = vld [vmem:[#allocation3 + $0x1b0] sm:$0xff]
    %v1570 = vld [vmem:[#allocation3 + $0x1b8] sm:$0xff]
    %v1571 = vld [vmem:[#allocation3 + $0x1c0] sm:$0xff]
    %v1572 = vld [vmem:[#allocation3 + $0x1c8] sm:$0xff]
    %v1573 = vld [vmem:[#allocation3 + $0x1d0] sm:$0xff]
    %v1574 = vld [vmem:[#allocation3 + $0x1d8] sm:$0xff]
    %v1575 = vld [vmem:[#allocation3 + $0x1e0] sm:$0xff]
    %v1576 = vld [vmem:[#allocation3 + $0x1e8] sm:$0xff]
    %v1577 = vld [vmem:[#allocation3 + $0x1f0] sm:$0xff]
    %v1578 = vld [vmem:[#allocation3 + $0x1f8] sm:$0xff]
    %v1579 = vld [vmem:[#allocation3 + $0x200] sm:$0xff]
    %v1580 = vld [vmem:[#allocation3 + $0x208] sm:$0xff]
    %v1581 = vld [vmem:[#allocation3 + $0x210] sm:$0xff]
    %v1582 = vld [vmem:[#allocation3 + $0x218] sm:$0xff]
    %v1583 = vld [vmem:[#allocation3 + $0x220] sm:$0xff]
    %v1584 = vld [vmem:[#allocation3 + $0x228] sm:$0xff]
    %v1585 = vld [vmem:[#allocation3 + $0x230] sm:$0xff]
    %v1586 = vld [vmem:[#allocation3 + $0x238] sm:$0xff]
    %v1587 = vld [vmem:[#allocation3 + $0x240] sm:$0xff]
    %v1588 = vld [vmem:[#allocation3 + $0x248] sm:$0xff]
    %v1589 = vld [vmem:[#allocation3 + $0x250] sm:$0xff]
    %v1590 = vld [vmem:[#allocation3 + $0x258] sm:$0xff]
    %v1591 = vld [vmem:[#allocation3 + $0x260] sm:$0xff]
    %v1592 = vld [vmem:[#allocation3 + $0x268] sm:$0xff]
    %v1593 = vld [vmem:[#allocation3 + $0x270] sm:$0xff]
    %v1594 = vld [vmem:[#allocation3 + $0x278] sm:$0xff]
    %v1595 = vld [vmem:[#allocation3 + $0x280] sm:$0xff]
    %v1596 = vld [vmem:[#allocation3 + $0x288] sm:$0xff]
    %v1597 = vld [vmem:[#allocation3 + $0x290] sm:$0xff]
    %v1598 = vld [vmem:[#allocation3 + $0x298] sm:$0xff]
    %v1599 = vld [vmem:[#allocation3 + $0x2a0] sm:$0xff]
    %v1600 = vld [vmem:[#allocation3 + $0x2a8] sm:$0xff]
    %v1601 = vld [vmem:[#allocation3 + $0x2b0] sm:$0xff]
    %v1602 = vld [vmem:[#allocation3 + $0x2b8] sm:$0xff]
    %v1603 = vld [vmem:[#allocation3 + $0x2c0] sm:$0xff]
    %v1604 = vld [vmem:[#allocation3 + $0x2c8] sm:$0xff]
    %v1605 = vld [vmem:[#allocation3 + $0x2d0] sm:$0xff]
    %v1606 = vld [vmem:[#allocation3 + $0x2d8] sm:$0xff]
    %v1607 = vld [vmem:[#allocation3 + $0x2e0] sm:$0xff]
    %v1608 = vld [vmem:[#allocation3 + $0x2e8] sm:$0xff]
    %v1609 = vld [vmem:[#allocation3 + $0x2f0] sm:$0xff]
    %v1610 = vld [vmem:[#allocation3 + $0x2f8] sm:$0xff]
    %v1611 = vld [vmem:[#allocation3 + $0x300] sm:$0xff]
    %v1612 = vld [vmem:[#allocation3 + $0x308] sm:$0xff]
    %v1613 = vld [vmem:[#allocation3 + $0x310] sm:$0xff]
    %v1614 = vld [vmem:[#allocation3 + $0x318] sm:$0xff]
    %v1615 = vld [vmem:[#allocation3 + $0x320] sm:$0xff]
    %v1616 = vld [vmem:[#allocation3 + $0x328] sm:$0xff]
    %v1617 = vld [vmem:[#allocation3 + $0x330] sm:$0xff]
    %v1618 = vld [vmem:[#allocation3 + $0x338] sm:$0xff]
    %v1619 = vld [vmem:[#allocation3 + $0x340] sm:$0xff]
    %v1620 = vld [vmem:[#allocation3 + $0x348] sm:$0xff]
    %v1621 = vld [vmem:[#allocation3 + $0x350] sm:$0xff]
    %v1622 = vld [vmem:[#allocation3 + $0x358] sm:$0xff]
    %v1623 = vld [vmem:[#allocation3 + $0x360] sm:$0xff]
    %v1624 = vld [vmem:[#allocation3 + $0x368] sm:$0xff]
    %v1625 = vld [vmem:[#allocation3 + $0x370] sm:$0xff]
    %v1626 = vld [vmem:[#allocation3 + $0x378] sm:$0xff]
    %v1627 = vld [vmem:[#allocation3 + $0x380] sm:$0xff]
    %v1628 = vld [vmem:[#allocation3 + $0x388] sm:$0xff]
    %v1629 = vld [vmem:[#allocation3 + $0x390] sm:$0xff]
    %v1630 = vld [vmem:[#allocation3 + $0x398] sm:$0xff]
    %v1631 = vld [vmem:[#allocation3 + $0x3a0] sm:$0xff]
    %v1632 = vld [vmem:[#allocation3 + $0x3a8] sm:$0xff]
    %v1633 = vld [vmem:[#allocation3 + $0x3b0] sm:$0xff]
    %v1634 = vld [vmem:[#allocation3 + $0x3b8] sm:$0xff]
    %v1635 = vld [vmem:[#allocation3 + $0x3c0] sm:$0xff]
    %v1636 = vld [vmem:[#allocation3 + $0x3c8] sm:$0xff]
    %v1637 = vld [vmem:[#allocation3 + $0x3d0] sm:$0xff]
    %v1638 = vld [vmem:[#allocation3 + $0x3d8] sm:$0xff]
    %v1639 = vld [vmem:[#allocation3 + $0x3e0] sm:$0xff]
    %v1640 = vld [vmem:[#allocation3 + $0x3e8] sm:$0xff]
    %v1641 = vld [vmem:[#allocation3 + $0x3f0] sm:$0xff]
    %v1642 = vld [vmem:[#allocation3 + $0x3f8] sm:$0xff]
    %v1643 = vld [vmem:[#allocation3 + $0x400] sm:$0xff]
    %v1644 = vld [vmem:[#allocation3 + $0x408] sm:$0xff]
    %v1645 = vld [vmem:[#allocation3 + $0x410] sm:$0xff]
    %v1646 = vld [vmem:[#allocation3 + $0x418] sm:$0xff]
    %v1647 = vld [vmem:[#allocation3 + $0x420] sm:$0xff]
    %v1648 = vld [vmem:[#allocation3 + $0x428] sm:$0xff]
    %v1649 = vld [vmem:[#allocation3 + $0x430] sm:$0xff]
    %v1650 = vld [vmem:[#allocation3 + $0x438] sm:$0xff]
    %v1651 = vld [vmem:[#allocation3 + $0x440] sm:$0xff]
    %v1652 = vld [vmem:[#allocation3 + $0x448] sm:$0xff]
    %v1653 = vld [vmem:[#allocation3 + $0x450] sm:$0xff]
    %v1654 = vld [vmem:[#allocation3 + $0x458] sm:$0xff]
    %v1655 = vld [vmem:[#allocation3 + $0x460] sm:$0xff]
    %v1656 = vld [vmem:[#allocation3 + $0x468] sm:$0xff]
    %v1657 = vld [vmem:[#allocation3 + $0x470] sm:$0xff]
    %v1658 = vld [vmem:[#allocation3 + $0x478] sm:$0xff]
    %v1659 = vld [vmem:[#allocation3 + $0x480] sm:$0xff]
    %v1660 = vld [vmem:[#allocation3 + $0x488] sm:$0xff]
    %v1661 = vld [vmem:[#allocation3 + $0x490] sm:$0xff]
    %v1662 = vld [vmem:[#allocation3 + $0x498] sm:$0xff]
    %v1663 = vld [vmem:[#allocation3 + $0x4a0] sm:$0xff]
    %v1664 = vld [vmem:[#allocation3 + $0x4a8] sm:$0xff]
    %v1665 = vld [vmem:[#allocation3 + $0x4b0] sm:$0xff]
    %v1666 = vld [vmem:[#allocation3 + $0x4b8] sm:$0xff]
    %v1667 = vld [vmem:[#allocation3 + $0x4c0] sm:$0xff]
    %v1668 = vld [vmem:[#allocation3 + $0x4c8] sm:$0xff]
    %v1669 = vld [vmem:[#allocation3 + $0x4d0] sm:$0xff]
    %v1670 = vld [vmem:[#allocation3 + $0x4d8] sm:$0xff]
    %v1671 = vld [vmem:[#allocation3 + $0x4e0] sm:$0xff]
    %v1672 = vld [vmem:[#allocation3 + $0x4e8] sm:$0xff]
    %v1673 = vld [vmem:[#allocation3 + $0x4f0] sm:$0xff]
    %v1674 = vld [vmem:[#allocation3 + $0x4f8] sm:$0xff]
    %v1675 = vld [vmem:[#allocation3 + $0x500] sm:$0xff]
    %v1676 = vld [vmem:[#allocation3 + $0x508] sm:$0xff]
    %v1677 = vld [vmem:[#allocation3 + $0x510] sm:$0xff]
    %v1678 = vld [vmem:[#allocation3 + $0x518] sm:$0xff]
    %v1679 = vld [vmem:[#allocation3 + $0x520] sm:$0xff]
    %v1680 = vld [vmem:[#allocation3 + $0x528] sm:$0xff]
    %v1681 = vld [vmem:[#allocation3 + $0x530] sm:$0xff]
    %v1682 = vld [vmem:[#allocation3 + $0x538] sm:$0xff]
    %v1683 = vld [vmem:[#allocation3 + $0x540] sm:$0xff]
    %v1684 = vld [vmem:[#allocation3 + $0x548] sm:$0xff]
    %v1685 = vld [vmem:[#allocation3 + $0x550] sm:$0xff]
    %v1686 = vld [vmem:[#allocation3 + $0x558] sm:$0xff]
    %v1687 = vld [vmem:[#allocation3 + $0x560] sm:$0xff]
    %v1688 = vld [vmem:[#allocation3 + $0x568] sm:$0xff]
    %v1689 = vld [vmem:[#allocation3 + $0x570] sm:$0xff]
    %v1690 = vld [vmem:[#allocation3 + $0x578] sm:$0xff]
    %v1691 = vld [vmem:[#allocation3 + $0x580] sm:$0xff]
    %v1692 = vld [vmem:[#allocation3 + $0x588] sm:$0xff]
    %v1693 = vld [vmem:[#allocation3 + $0x590] sm:$0xff]
    %v1694 = vld [vmem:[#allocation3 + $0x598] sm:$0xff]
    %v1695 = vld [vmem:[#allocation3 + $0x5a0] sm:$0xff]
    %v1696 = vld [vmem:[#allocation3 + $0x5a8] sm:$0xff]
    %v1697 = vld [vmem:[#allocation3 + $0x5b0] sm:$0xff]
    %v1698 = vld [vmem:[#allocation3 + $0x5b8] sm:$0xff]
    %v1699 = vld [vmem:[#allocation3 + $0x5c0] sm:$0xff]
    %v1700 = vld [vmem:[#allocation3 + $0x5c8] sm:$0xff]
    %v1701 = vld [vmem:[#allocation3 + $0x5d0] sm:$0xff]
    %v1702 = vld [vmem:[#allocation3 + $0x5d8] sm:$0xff]
    %v1703 = vld [vmem:[#allocation3 + $0x5e0] sm:$0xff]
    %v1704 = vld [vmem:[#allocation3 + $0x5e8] sm:$0xff]
    %v1705 = vld [vmem:[#allocation3 + $0x5f0] sm:$0xff]
    %v1706 = vld [vmem:[#allocation3 + $0x5f8] sm:$0xff]
    %v1707 = vld [vmem:[#allocation3 + $0x600] sm:$0xff]
    %v1708 = vld [vmem:[#allocation3 + $0x608] sm:$0xff]
    %v1709 = vld [vmem:[#allocation3 + $0x610] sm:$0xff]
    %v1710 = vld [vmem:[#allocation3 + $0x618] sm:$0xff]
    %v1711 = vld [vmem:[#allocation3 + $0x620] sm:$0xff]
    %v1712 = vld [vmem:[#allocation3 + $0x628] sm:$0xff]
    %v1713 = vld [vmem:[#allocation3 + $0x630] sm:$0xff]
    %v1714 = vld [vmem:[#allocation3 + $0x638] sm:$0xff]
    %v1715 = vld [vmem:[#allocation3 + $0x640] sm:$0xff]
    %v1716 = vld [vmem:[#allocation3 + $0x648] sm:$0xff]
    %v1717 = vld [vmem:[#allocation3 + $0x650] sm:$0xff]
    %v1718 = vld [vmem:[#allocation3 + $0x658] sm:$0xff]
    %v1719 = vld [vmem:[#allocation3 + $0x660] sm:$0xff]
    %v1720 = vld [vmem:[#allocation3 + $0x668] sm:$0xff]
    %v1721 = vld [vmem:[#allocation3 + $0x670] sm:$0xff]
    %v1722 = vld [vmem:[#allocation3 + $0x678] sm:$0xff]
    %v1723 = vld [vmem:[#allocation3 + $0x680] sm:$0xff]
    %v1724 = vld [vmem:[#allocation3 + $0x688] sm:$0xff]
    %v1725 = vld [vmem:[#allocation3 + $0x690] sm:$0xff]
    %v1726 = vld [vmem:[#allocation3 + $0x698] sm:$0xff]
    %v1727 = vld [vmem:[#allocation3 + $0x6a0] sm:$0xff]
    %v1728 = vld [vmem:[#allocation3 + $0x6a8] sm:$0xff]
    %v1729 = vld [vmem:[#allocation3 + $0x6b0] sm:$0xff]
    %v1730 = vld [vmem:[#allocation3 + $0x6b8] sm:$0xff]
    %v1731 = vld [vmem:[#allocation3 + $0x6c0] sm:$0xff]
    %v1732 = vld [vmem:[#allocation3 + $0x6c8] sm:$0xff]
    %v1733 = vld [vmem:[#allocation3 + $0x6d0] sm:$0xff]
    %v1734 = vld [vmem:[#allocation3 + $0x6d8] sm:$0xff]
    %v1735 = vld [vmem:[#allocation3 + $0x6e0] sm:$0xff]
    %v1736 = vld [vmem:[#allocation3 + $0x6e8] sm:$0xff]
    %v1737 = vld [vmem:[#allocation3 + $0x6f0] sm:$0xff]
    %v1738 = vld [vmem:[#allocation3 + $0x6f8] sm:$0xff]
    %v1739 = vld [vmem:[#allocation3 + $0x700] sm:$0xff]
    %v1740 = vld [vmem:[#allocation3 + $0x708] sm:$0xff]
    %v1741 = vld [vmem:[#allocation3 + $0x710] sm:$0xff]
    %v1742 = vld [vmem:[#allocation3 + $0x718] sm:$0xff]
    %v1743 = vld [vmem:[#allocation3 + $0x720] sm:$0xff]
    %v1744 = vld [vmem:[#allocation3 + $0x728] sm:$0xff]
    %v1745 = vld [vmem:[#allocation3 + $0x730] sm:$0xff]
    %v1746 = vld [vmem:[#allocation3 + $0x738] sm:$0xff]
    %v1747 = vld [vmem:[#allocation3 + $0x740] sm:$0xff]
    %v1748 = vld [vmem:[#allocation3 + $0x748] sm:$0xff]
    %v1749 = vld [vmem:[#allocation3 + $0x750] sm:$0xff]
    %v1750 = vld [vmem:[#allocation3 + $0x758] sm:$0xff]
    %v1751 = vld [vmem:[#allocation3 + $0x760] sm:$0xff]
    %v1752 = vld [vmem:[#allocation3 + $0x768] sm:$0xff]
    %v1753 = vld [vmem:[#allocation3 + $0x770] sm:$0xff]
    %v1754 = vld [vmem:[#allocation3 + $0x778] sm:$0xff]
    %v1755 = vld [vmem:[#allocation3 + $0x780] sm:$0xff]
    %v1756 = vld [vmem:[#allocation3 + $0x788] sm:$0xff]
    %v1757 = vld [vmem:[#allocation3 + $0x790] sm:$0xff]
    %v1758 = vld [vmem:[#allocation3 + $0x798] sm:$0xff]
    %v1759 = vld [vmem:[#allocation3 + $0x7a0] sm:$0xff]
    %v1760 = vld [vmem:[#allocation3 + $0x7a8] sm:$0xff]
    %v1761 = vld [vmem:[#allocation3 + $0x7b0] sm:$0xff]
    %v1762 = vld [vmem:[#allocation3 + $0x7b8] sm:$0xff]
    %v1763 = vld [vmem:[#allocation3 + $0x7c0] sm:$0xff]
    %v1764 = vld [vmem:[#allocation3 + $0x7c8] sm:$0xff]
    %v1765 = vld [vmem:[#allocation3 + $0x7d0] sm:$0xff]
    %v1766 = vld [vmem:[#allocation3 + $0x7d8] sm:$0xff]
    %v1767 = vld [vmem:[#allocation3 + $0x7e0] sm:$0xff]
    %v1768 = vld [vmem:[#allocation3 + $0x7e8] sm:$0xff]
    %v1769 = vld [vmem:[#allocation3 + $0x7f0] sm:$0xff]
    %v1770 = vld [vmem:[#allocation3 + $0x7f8] sm:$0xff]
    %v1771 = vld [vmem:[%s6] sm:$0xf]
    %v1773 = vlaneseq
    %v1774 = vshrl.u32 %v1773, 7
    %v1775 = vsub.s32 0, %v1774
    %v1776 = vrot.slane %v1771, %v1775
    %v1777 = vlaneseq
    %v1778 = vshrl.u32 %v1777, 7
    %v1779 = vsub.s32 1, %v1778
    %v1780 = vrot.slane %v1771, %v1779
    %v1781 = vlaneseq
    %v1782 = vshrl.u32 %v1781, 7
    %v1783 = vsub.s32 2, %v1782
    %v1784 = vrot.slane %v1771, %v1783
    %v1785 = vlaneseq
    %v1786 = vshrl.u32 %v1785, 7
    %v1787 = vsub.s32 3, %v1786
    %v1788 = vrot.slane %v1771, %v1787
    %v2049 = vunpack.c.l.b16 %v1515
    %v2050 = vunpack.c.h.b16 %v1515
    %v2051 = vunpack.c.l.b16 %v1516
    %v2052 = vunpack.c.h.b16 %v1516
    %v2053 = vunpack.c.l.b16 %v1517
    %v2054 = vunpack.c.h.b16 %v1517
    %v2055 = vunpack.c.l.b16 %v1518
    %v2056 = vunpack.c.h.b16 %v1518
    %v2057 = vunpack.c.l.b16 %v1519
    %v2058 = vunpack.c.h.b16 %v1519
    %v2059 = vunpack.c.l.b16 %v1520
    %v2060 = vunpack.c.h.b16 %v1520
    %v2061 = vunpack.c.l.b16 %v1521
    %v2062 = vunpack.c.h.b16 %v1521
    %v2063 = vunpack.c.l.b16 %v1522
    %v2064 = vunpack.c.h.b16 %v1522
    %v2065 = vunpack.c.l.b16 %v1523
    %v2066 = vunpack.c.h.b16 %v1523
    %v2067 = vunpack.c.l.b16 %v1524
    %v2068 = vunpack.c.h.b16 %v1524
    %v2069 = vunpack.c.l.b16 %v1525
    %v2070 = vunpack.c.h.b16 %v1525
    %v2071 = vunpack.c.l.b16 %v1526
    %v2072 = vunpack.c.h.b16 %v1526
    %v2073 = vunpack.c.l.b16 %v1527
    %v2074 = vunpack.c.h.b16 %v1527
    %v2075 = vunpack.c.l.b16 %v1528
    %v2076 = vunpack.c.h.b16 %v1528
    %v2077 = vunpack.c.l.b16 %v1529
    %v2078 = vunpack.c.h.b16 %v1529
    %v2079 = vunpack.c.l.b16 %v1530
    %v2080 = vunpack.c.h.b16 %v1530
    %v2081 = vunpack.c.l.b16 %v1531
    %v2082 = vunpack.c.h.b16 %v1531
    %v2083 = vunpack.c.l.b16 %v1532
    %v2084 = vunpack.c.h.b16 %v1532
    %v2085 = vunpack.c.l.b16 %v1533
    %v2086 = vunpack.c.h.b16 %v1533
    %v2087 = vunpack.c.l.b16 %v1534
    %v2088 = vunpack.c.h.b16 %v1534
    %v2089 = vunpack.c.l.b16 %v1535
    %v2090 = vunpack.c.h.b16 %v1535
    %v2091 = vunpack.c.l.b16 %v1536
    %v2092 = vunpack.c.h.b16 %v1536
    %v2093 = vunpack.c.l.b16 %v1537
    %v2094 = vunpack.c.h.b16 %v1537
    %v2095 = vunpack.c.l.b16 %v1538
    %v2096 = vunpack.c.h.b16 %v1538
    %v2097 = vunpack.c.l.b16 %v1539
    %v2098 = vunpack.c.h.b16 %v1539
    %v2099 = vunpack.c.l.b16 %v1540
    %v2100 = vunpack.c.h.b16 %v1540
    %v2101 = vunpack.c.l.b16 %v1541
    %v2102 = vunpack.c.h.b16 %v1541
    %v2103 = vunpack.c.l.b16 %v1542
    %v2104 = vunpack.c.h.b16 %v1542
    %v2105 = vunpack.c.l.b16 %v1543
    %v2106 = vunpack.c.h.b16 %v1543
    %v2107 = vunpack.c.l.b16 %v1544
    %v2108 = vunpack.c.h.b16 %v1544
    %v2109 = vunpack.c.l.b16 %v1545
    %v2110 = vunpack.c.h.b16 %v1545
    %v2111 = vunpack.c.l.b16 %v1546
    %v2112 = vunpack.c.h.b16 %v1546
    %v2113 = vunpack.c.l.b16 %v1547
    %v2114 = vunpack.c.h.b16 %v1547
    %v2115 = vunpack.c.l.b16 %v1548
    %v2116 = vunpack.c.h.b16 %v1548
    %v2117 = vunpack.c.l.b16 %v1549
    %v2118 = vunpack.c.h.b16 %v1549
    %v2119 = vunpack.c.l.b16 %v1550
    %v2120 = vunpack.c.h.b16 %v1550
    %v2121 = vunpack.c.l.b16 %v1551
    %v2122 = vunpack.c.h.b16 %v1551
    %v2123 = vunpack.c.l.b16 %v1552
    %v2124 = vunpack.c.h.b16 %v1552
    %v2125 = vunpack.c.l.b16 %v1553
    %v2126 = vunpack.c.h.b16 %v1553
    %v2127 = vunpack.c.l.b16 %v1554
    %v2128 = vunpack.c.h.b16 %v1554
    %v2129 = vunpack.c.l.b16 %v1555
    %v2130 = vunpack.c.h.b16 %v1555
    %v2131 = vunpack.c.l.b16 %v1556
    %v2132 = vunpack.c.h.b16 %v1556
    %v2133 = vunpack.c.l.b16 %v1557
    %v2134 = vunpack.c.h.b16 %v1557
    %v2135 = vunpack.c.l.b16 %v1558
    %v2136 = vunpack.c.h.b16 %v1558
    %v2137 = vunpack.c.l.b16 %v1559
    %v2138 = vunpack.c.h.b16 %v1559
    %v2139 = vunpack.c.l.b16 %v1560
    %v2140 = vunpack.c.h.b16 %v1560
    %v2141 = vunpack.c.l.b16 %v1561
    %v2142 = vunpack.c.h.b16 %v1561
    %v2143 = vunpack.c.l.b16 %v1562
    %v2144 = vunpack.c.h.b16 %v1562
    %v2145 = vunpack.c.l.b16 %v1563
    %v2146 = vunpack.c.h.b16 %v1563
    %v2147 = vunpack.c.l.b16 %v1564
    %v2148 = vunpack.c.h.b16 %v1564
    %v2149 = vunpack.c.l.b16 %v1565
    %v2150 = vunpack.c.h.b16 %v1565
    %v2151 = vunpack.c.l.b16 %v1566
    %v2152 = vunpack.c.h.b16 %v1566
    %v2153 = vunpack.c.l.b16 %v1567
    %v2154 = vunpack.c.h.b16 %v1567
    %v2155 = vunpack.c.l.b16 %v1568
    %v2156 = vunpack.c.h.b16 %v1568
    %v2157 = vunpack.c.l.b16 %v1569
    %v2158 = vunpack.c.h.b16 %v1569
    %v2159 = vunpack.c.l.b16 %v1570
    %v2160 = vunpack.c.h.b16 %v1570
    %v2161 = vunpack.c.l.b16 %v1571
    %v2162 = vunpack.c.h.b16 %v1571
    %v2163 = vunpack.c.l.b16 %v1572
    %v2164 = vunpack.c.h.b16 %v1572
    %v2165 = vunpack.c.l.b16 %v1573
    %v2166 = vunpack.c.h.b16 %v1573
    %v2167 = vunpack.c.l.b16 %v1574
    %v2168 = vunpack.c.h.b16 %v1574
    %v2169 = vunpack.c.l.b16 %v1575
    %v2170 = vunpack.c.h.b16 %v1575
    %v2171 = vunpack.c.l.b16 %v1576
    %v2172 = vunpack.c.h.b16 %v1576
    %v2173 = vunpack.c.l.b16 %v1577
    %v2174 = vunpack.c.h.b16 %v1577
    %v2175 = vunpack.c.l.b16 %v1578
    %v2176 = vunpack.c.h.b16 %v1578
    %v2177 = vunpack.c.l.b16 %v1579
    %v2178 = vunpack.c.h.b16 %v1579
    %v2179 = vunpack.c.l.b16 %v1580
    %v2180 = vunpack.c.h.b16 %v1580
    %v2181 = vunpack.c.l.b16 %v1581
    %v2182 = vunpack.c.h.b16 %v1581
    %v2183 = vunpack.c.l.b16 %v1582
    %v2184 = vunpack.c.h.b16 %v1582
    %v2185 = vunpack.c.l.b16 %v1583
    %v2186 = vunpack.c.h.b16 %v1583
    %v2187 = vunpack.c.l.b16 %v1584
    %v2188 = vunpack.c.h.b16 %v1584
    %v2189 = vunpack.c.l.b16 %v1585
    %v2190 = vunpack.c.h.b16 %v1585
    %v2191 = vunpack.c.l.b16 %v1586
    %v2192 = vunpack.c.h.b16 %v1586
    %v2193 = vunpack.c.l.b16 %v1587
    %v2194 = vunpack.c.h.b16 %v1587
    %v2195 = vunpack.c.l.b16 %v1588
    %v2196 = vunpack.c.h.b16 %v1588
    %v2197 = vunpack.c.l.b16 %v1589
    %v2198 = vunpack.c.h.b16 %v1589
    %v2199 = vunpack.c.l.b16 %v1590
    %v2200 = vunpack.c.h.b16 %v1590
    %v2201 = vunpack.c.l.b16 %v1591
    %v2202 = vunpack.c.h.b16 %v1591
    %v2203 = vunpack.c.l.b16 %v1592
    %v2204 = vunpack.c.h.b16 %v1592
    %v2205 = vunpack.c.l.b16 %v1593
    %v2206 = vunpack.c.h.b16 %v1593
    %v2207 = vunpack.c.l.b16 %v1594
    %v2208 = vunpack.c.h.b16 %v1594
    %v2209 = vunpack.c.l.b16 %v1595
    %v2210 = vunpack.c.h.b16 %v1595
    %v2211 = vunpack.c.l.b16 %v1596
    %v2212 = vunpack.c.h.b16 %v1596
    %v2213 = vunpack.c.l.b16 %v1597
    %v2214 = vunpack.c.h.b16 %v1597
    %v2215 = vunpack.c.l.b16 %v1598
    %v2216 = vunpack.c.h.b16 %v1598
    %v2217 = vunpack.c.l.b16 %v1599
    %v2218 = vunpack.c.h.b16 %v1599
    %v2219 = vunpack.c.l.b16 %v1600
    %v2220 = vunpack.c.h.b16 %v1600
    %v2221 = vunpack.c.l.b16 %v1601
    %v2222 = vunpack.c.h.b16 %v1601
    %v2223 = vunpack.c.l.b16 %v1602
    %v2224 = vunpack.c.h.b16 %v1602
    %v2225 = vunpack.c.l.b16 %v1603
    %v2226 = vunpack.c.h.b16 %v1603
    %v2227 = vunpack.c.l.b16 %v1604
    %v2228 = vunpack.c.h.b16 %v1604
    %v2229 = vunpack.c.l.b16 %v1605
    %v2230 = vunpack.c.h.b16 %v1605
    %v2231 = vunpack.c.l.b16 %v1606
    %v2232 = vunpack.c.h.b16 %v1606
    %v2233 = vunpack.c.l.b16 %v1607
    %v2234 = vunpack.c.h.b16 %v1607
    %v2235 = vunpack.c.l.b16 %v1608
    %v2236 = vunpack.c.h.b16 %v1608
    %v2237 = vunpack.c.l.b16 %v1609
    %v2238 = vunpack.c.h.b16 %v1609
    %v2239 = vunpack.c.l.b16 %v1610
    %v2240 = vunpack.c.h.b16 %v1610
    %v2241 = vunpack.c.l.b16 %v1611
    %v2242 = vunpack.c.h.b16 %v1611
    %v2243 = vunpack.c.l.b16 %v1612
    %v2244 = vunpack.c.h.b16 %v1612
    %v2245 = vunpack.c.l.b16 %v1613
    %v2246 = vunpack.c.h.b16 %v1613
    %v2247 = vunpack.c.l.b16 %v1614
    %v2248 = vunpack.c.h.b16 %v1614
    %v2249 = vunpack.c.l.b16 %v1615
    %v2250 = vunpack.c.h.b16 %v1615
    %v2251 = vunpack.c.l.b16 %v1616
    %v2252 = vunpack.c.h.b16 %v1616
    %v2253 = vunpack.c.l.b16 %v1617
    %v2254 = vunpack.c.h.b16 %v1617
    %v2255 = vunpack.c.l.b16 %v1618
    %v2256 = vunpack.c.h.b16 %v1618
    %v2257 = vunpack.c.l.b16 %v1619
    %v2258 = vunpack.c.h.b16 %v1619
    %v2259 = vunpack.c.l.b16 %v1620
    %v2260 = vunpack.c.h.b16 %v1620
    %v2261 = vunpack.c.l.b16 %v1621
    %v2262 = vunpack.c.h.b16 %v1621
    %v2263 = vunpack.c.l.b16 %v1622
    %v2264 = vunpack.c.h.b16 %v1622
    %v2265 = vunpack.c.l.b16 %v1623
    %v2266 = vunpack.c.h.b16 %v1623
    %v2267 = vunpack.c.l.b16 %v1624
    %v2268 = vunpack.c.h.b16 %v1624
    %v2269 = vunpack.c.l.b16 %v1625
    %v2270 = vunpack.c.h.b16 %v1625
    %v2271 = vunpack.c.l.b16 %v1626
    %v2272 = vunpack.c.h.b16 %v1626
    %v2273 = vunpack.c.l.b16 %v1627
    %v2274 = vunpack.c.h.b16 %v1627
    %v2275 = vunpack.c.l.b16 %v1628
    %v2276 = vunpack.c.h.b16 %v1628
    %v2277 = vunpack.c.l.b16 %v1629
    %v2278 = vunpack.c.h.b16 %v1629
    %v2279 = vunpack.c.l.b16 %v1630
    %v2280 = vunpack.c.h.b16 %v1630
    %v2281 = vunpack.c.l.b16 %v1631
    %v2282 = vunpack.c.h.b16 %v1631
    %v2283 = vunpack.c.l.b16 %v1632
    %v2284 = vunpack.c.h.b16 %v1632
    %v2285 = vunpack.c.l.b16 %v1633
    %v2286 = vunpack.c.h.b16 %v1633
    %v2287 = vunpack.c.l.b16 %v1634
    %v2288 = vunpack.c.h.b16 %v1634
    %v2289 = vunpack.c.l.b16 %v1635
    %v2290 = vunpack.c.h.b16 %v1635
    %v2291 = vunpack.c.l.b16 %v1636
    %v2292 = vunpack.c.h.b16 %v1636
    %v2293 = vunpack.c.l.b16 %v1637
    %v2294 = vunpack.c.h.b16 %v1637
    %v2295 = vunpack.c.l.b16 %v1638
    %v2296 = vunpack.c.h.b16 %v1638
    %v2297 = vunpack.c.l.b16 %v1639
    %v2298 = vunpack.c.h.b16 %v1639
    %v2299 = vunpack.c.l.b16 %v1640
    %v2300 = vunpack.c.h.b16 %v1640
    %v2301 = vunpack.c.l.b16 %v1641
    %v2302 = vunpack.c.h.b16 %v1641
    %v2303 = vunpack.c.l.b16 %v1642
    %v2304 = vunpack.c.h.b16 %v1642
    %v2305 = vunpack.c.l.b16 %v1643
    %v2306 = vunpack.c.h.b16 %v1643
    %v2307 = vunpack.c.l.b16 %v1644
    %v2308 = vunpack.c.h.b16 %v1644
    %v2309 = vunpack.c.l.b16 %v1645
    %v2310 = vunpack.c.h.b16 %v1645
    %v2311 = vunpack.c.l.b16 %v1646
    %v2312 = vunpack.c.h.b16 %v1646
    %v2313 = vunpack.c.l.b16 %v1647
    %v2314 = vunpack.c.h.b16 %v1647
    %v2315 = vunpack.c.l.b16 %v1648
    %v2316 = vunpack.c.h.b16 %v1648
    %v2317 = vunpack.c.l.b16 %v1649
    %v2318 = vunpack.c.h.b16 %v1649
    %v2319 = vunpack.c.l.b16 %v1650
    %v2320 = vunpack.c.h.b16 %v1650
    %v2321 = vunpack.c.l.b16 %v1651
    %v2322 = vunpack.c.h.b16 %v1651
    %v2323 = vunpack.c.l.b16 %v1652
    %v2324 = vunpack.c.h.b16 %v1652
    %v2325 = vunpack.c.l.b16 %v1653
    %v2326 = vunpack.c.h.b16 %v1653
    %v2327 = vunpack.c.l.b16 %v1654
    %v2328 = vunpack.c.h.b16 %v1654
    %v2329 = vunpack.c.l.b16 %v1655
    %v2330 = vunpack.c.h.b16 %v1655
    %v2331 = vunpack.c.l.b16 %v1656
    %v2332 = vunpack.c.h.b16 %v1656
    %v2333 = vunpack.c.l.b16 %v1657
    %v2334 = vunpack.c.h.b16 %v1657
    %v2335 = vunpack.c.l.b16 %v1658
    %v2336 = vunpack.c.h.b16 %v1658
    %v2337 = vunpack.c.l.b16 %v1659
    %v2338 = vunpack.c.h.b16 %v1659
    %v2339 = vunpack.c.l.b16 %v1660
    %v2340 = vunpack.c.h.b16 %v1660
    %v2341 = vunpack.c.l.b16 %v1661
    %v2342 = vunpack.c.h.b16 %v1661
    %v2343 = vunpack.c.l.b16 %v1662
    %v2344 = vunpack.c.h.b16 %v1662
    %v2345 = vunpack.c.l.b16 %v1663
    %v2346 = vunpack.c.h.b16 %v1663
    %v2347 = vunpack.c.l.b16 %v1664
    %v2348 = vunpack.c.h.b16 %v1664
    %v2349 = vunpack.c.l.b16 %v1665
    %v2350 = vunpack.c.h.b16 %v1665
    %v2351 = vunpack.c.l.b16 %v1666
    %v2352 = vunpack.c.h.b16 %v1666
    %v2353 = vunpack.c.l.b16 %v1667
    %v2354 = vunpack.c.h.b16 %v1667
    %v2355 = vunpack.c.l.b16 %v1668
    %v2356 = vunpack.c.h.b16 %v1668
    %v2357 = vunpack.c.l.b16 %v1669
    %v2358 = vunpack.c.h.b16 %v1669
    %v2359 = vunpack.c.l.b16 %v1670
    %v2360 = vunpack.c.h.b16 %v1670
    %v2361 = vunpack.c.l.b16 %v1671
    %v2362 = vunpack.c.h.b16 %v1671
    %v2363 = vunpack.c.l.b16 %v1672
    %v2364 = vunpack.c.h.b16 %v1672
    %v2365 = vunpack.c.l.b16 %v1673
    %v2366 = vunpack.c.h.b16 %v1673
    %v2367 = vunpack.c.l.b16 %v1674
    %v2368 = vunpack.c.h.b16 %v1674
    %v2369 = vunpack.c.l.b16 %v1675
    %v2370 = vunpack.c.h.b16 %v1675
    %v2371 = vunpack.c.l.b16 %v1676
    %v2372 = vunpack.c.h.b16 %v1676
    %v2373 = vunpack.c.l.b16 %v1677
    %v2374 = vunpack.c.h.b16 %v1677
    %v2375 = vunpack.c.l.b16 %v1678
    %v2376 = vunpack.c.h.b16 %v1678
    %v2377 = vunpack.c.l.b16 %v1679
    %v2378 = vunpack.c.h.b16 %v1679
    %v2379 = vunpack.c.l.b16 %v1680
    %v2380 = vunpack.c.h.b16 %v1680
    %v2381 = vunpack.c.l.b16 %v1681
    %v2382 = vunpack.c.h.b16 %v1681
    %v2383 = vunpack.c.l.b16 %v1682
    %v2384 = vunpack.c.h.b16 %v1682
    %v2385 = vunpack.c.l.b16 %v1683
    %v2386 = vunpack.c.h.b16 %v1683
    %v2387 = vunpack.c.l.b16 %v1684
    %v2388 = vunpack.c.h.b16 %v1684
    %v2389 = vunpack.c.l.b16 %v1685
    %v2390 = vunpack.c.h.b16 %v1685
    %v2391 = vunpack.c.l.b16 %v1686
    %v2392 = vunpack.c.h.b16 %v1686
    %v2393 = vunpack.c.l.b16 %v1687
    %v2394 = vunpack.c.h.b16 %v1687
    %v2395 = vunpack.c.l.b16 %v1688
    %v2396 = vunpack.c.h.b16 %v1688
    %v2397 = vunpack.c.l.b16 %v1689
    %v2398 = vunpack.c.h.b16 %v1689
    %v2399 = vunpack.c.l.b16 %v1690
    %v2400 = vunpack.c.h.b16 %v1690
    %v2401 = vunpack.c.l.b16 %v1691
    %v2402 = vunpack.c.h.b16 %v1691
    %v2403 = vunpack.c.l.b16 %v1692
    %v2404 = vunpack.c.h.b16 %v1692
    %v2405 = vunpack.c.l.b16 %v1693
    %v2406 = vunpack.c.h.b16 %v1693
    %v2407 = vunpack.c.l.b16 %v1694
    %v2408 = vunpack.c.h.b16 %v1694
    %v2409 = vunpack.c.l.b16 %v1695
    %v2410 = vunpack.c.h.b16 %v1695
    %v2411 = vunpack.c.l.b16 %v1696
    %v2412 = vunpack.c.h.b16 %v1696
    %v2413 = vunpack.c.l.b16 %v1697
    %v2414 = vunpack.c.h.b16 %v1697
    %v2415 = vunpack.c.l.b16 %v1698
    %v2416 = vunpack.c.h.b16 %v1698
    %v2417 = vunpack.c.l.b16 %v1699
    %v2418 = vunpack.c.h.b16 %v1699
    %v2419 = vunpack.c.l.b16 %v1700
    %v2420 = vunpack.c.h.b16 %v1700
    %v2421 = vunpack.c.l.b16 %v1701
    %v2422 = vunpack.c.h.b16 %v1701
    %v2423 = vunpack.c.l.b16 %v1702
    %v2424 = vunpack.c.h.b16 %v1702
    %v2425 = vunpack.c.l.b16 %v1703
    %v2426 = vunpack.c.h.b16 %v1703
    %v2427 = vunpack.c.l.b16 %v1704
    %v2428 = vunpack.c.h.b16 %v1704
    %v2429 = vunpack.c.l.b16 %v1705
    %v2430 = vunpack.c.h.b16 %v1705
    %v2431 = vunpack.c.l.b16 %v1706
    %v2432 = vunpack.c.h.b16 %v1706
    %v2433 = vunpack.c.l.b16 %v1707
    %v2434 = vunpack.c.h.b16 %v1707
    %v2435 = vunpack.c.l.b16 %v1708
    %v2436 = vunpack.c.h.b16 %v1708
    %v2437 = vunpack.c.l.b16 %v1709
    %v2438 = vunpack.c.h.b16 %v1709
    %v2439 = vunpack.c.l.b16 %v1710
    %v2440 = vunpack.c.h.b16 %v1710
    %v2441 = vunpack.c.l.b16 %v1711
    %v2442 = vunpack.c.h.b16 %v1711
    %v2443 = vunpack.c.l.b16 %v1712
    %v2444 = vunpack.c.h.b16 %v1712
    %v2445 = vunpack.c.l.b16 %v1713
    %v2446 = vunpack.c.h.b16 %v1713
    %v2447 = vunpack.c.l.b16 %v1714
    %v2448 = vunpack.c.h.b16 %v1714
    %v2449 = vunpack.c.l.b16 %v1715
    %v2450 = vunpack.c.h.b16 %v1715
    %v2451 = vunpack.c.l.b16 %v1716
    %v2452 = vunpack.c.h.b16 %v1716
    %v2453 = vunpack.c.l.b16 %v1717
    %v2454 = vunpack.c.h.b16 %v1717
    %v2455 = vunpack.c.l.b16 %v1718
    %v2456 = vunpack.c.h.b16 %v1718
    %v2457 = vunpack.c.l.b16 %v1719
    %v2458 = vunpack.c.h.b16 %v1719
    %v2459 = vunpack.c.l.b16 %v1720
    %v2460 = vunpack.c.h.b16 %v1720
    %v2461 = vunpack.c.l.b16 %v1721
    %v2462 = vunpack.c.h.b16 %v1721
    %v2463 = vunpack.c.l.b16 %v1722
    %v2464 = vunpack.c.h.b16 %v1722
    %v2465 = vunpack.c.l.b16 %v1723
    %v2466 = vunpack.c.h.b16 %v1723
    %v2467 = vunpack.c.l.b16 %v1724
    %v2468 = vunpack.c.h.b16 %v1724
    %v2469 = vunpack.c.l.b16 %v1725
    %v2470 = vunpack.c.h.b16 %v1725
    %v2471 = vunpack.c.l.b16 %v1726
    %v2472 = vunpack.c.h.b16 %v1726
    %v2473 = vunpack.c.l.b16 %v1727
    %v2474 = vunpack.c.h.b16 %v1727
    %v2475 = vunpack.c.l.b16 %v1728
    %v2476 = vunpack.c.h.b16 %v1728
    %v2477 = vunpack.c.l.b16 %v1729
    %v2478 = vunpack.c.h.b16 %v1729
    %v2479 = vunpack.c.l.b16 %v1730
    %v2480 = vunpack.c.h.b16 %v1730
    %v2481 = vunpack.c.l.b16 %v1731
    %v2482 = vunpack.c.h.b16 %v1731
    %v2483 = vunpack.c.l.b16 %v1732
    %v2484 = vunpack.c.h.b16 %v1732
    %v2485 = vunpack.c.l.b16 %v1733
    %v2486 = vunpack.c.h.b16 %v1733
    %v2487 = vunpack.c.l.b16 %v1734
    %v2488 = vunpack.c.h.b16 %v1734
    %v2489 = vunpack.c.l.b16 %v1735
    %v2490 = vunpack.c.h.b16 %v1735
    %v2491 = vunpack.c.l.b16 %v1736
    %v2492 = vunpack.c.h.b16 %v1736
    %v2493 = vunpack.c.l.b16 %v1737
    %v2494 = vunpack.c.h.b16 %v1737
    %v2495 = vunpack.c.l.b16 %v1738
    %v2496 = vunpack.c.h.b16 %v1738
    %v2497 = vunpack.c.l.b16 %v1739
    %v2498 = vunpack.c.h.b16 %v1739
    %v2499 = vunpack.c.l.b16 %v1740
    %v2500 = vunpack.c.h.b16 %v1740
    %v2501 = vunpack.c.l.b16 %v1741
    %v2502 = vunpack.c.h.b16 %v1741
    %v2503 = vunpack.c.l.b16 %v1742
    %v2504 = vunpack.c.h.b16 %v1742
    %v2505 = vunpack.c.l.b16 %v1743
    %v2506 = vunpack.c.h.b16 %v1743
    %v2507 = vunpack.c.l.b16 %v1744
    %v2508 = vunpack.c.h.b16 %v1744
    %v2509 = vunpack.c.l.b16 %v1745
    %v2510 = vunpack.c.h.b16 %v1745
    %v2511 = vunpack.c.l.b16 %v1746
    %v2512 = vunpack.c.h.b16 %v1746
    %v2513 = vunpack.c.l.b16 %v1747
    %v2514 = vunpack.c.h.b16 %v1747
    %v2515 = vunpack.c.l.b16 %v1748
    %v2516 = vunpack.c.h.b16 %v1748
    %v2517 = vunpack.c.l.b16 %v1749
    %v2518 = vunpack.c.h.b16 %v1749
    %v2519 = vunpack.c.l.b16 %v1750
    %v2520 = vunpack.c.h.b16 %v1750
    %v2521 = vunpack.c.l.b16 %v1751
    %v2522 = vunpack.c.h.b16 %v1751
    %v2523 = vunpack.c.l.b16 %v1752
    %v2524 = vunpack.c.h.b16 %v1752
    %v2525 = vunpack.c.l.b16 %v1753
    %v2526 = vunpack.c.h.b16 %v1753
    %v2527 = vunpack.c.l.b16 %v1754
    %v2528 = vunpack.c.h.b16 %v1754
    %v2529 = vunpack.c.l.b16 %v1755
    %v2530 = vunpack.c.h.b16 %v1755
    %v2531 = vunpack.c.l.b16 %v1756
    %v2532 = vunpack.c.h.b16 %v1756
    %v2533 = vunpack.c.l.b16 %v1757
    %v2534 = vunpack.c.h.b16 %v1757
    %v2535 = vunpack.c.l.b16 %v1758
    %v2536 = vunpack.c.h.b16 %v1758
    %v2537 = vunpack.c.l.b16 %v1759
    %v2538 = vunpack.c.h.b16 %v1759
    %v2539 = vunpack.c.l.b16 %v1760
    %v2540 = vunpack.c.h.b16 %v1760
    %v2541 = vunpack.c.l.b16 %v1761
    %v2542 = vunpack.c.h.b16 %v1761
    %v2543 = vunpack.c.l.b16 %v1762
    %v2544 = vunpack.c.h.b16 %v1762
    %v2545 = vunpack.c.l.b16 %v1763
    %v2546 = vunpack.c.h.b16 %v1763
    %v2547 = vunpack.c.l.b16 %v1764
    %v2548 = vunpack.c.h.b16 %v1764
    %v2549 = vunpack.c.l.b16 %v1765
    %v2550 = vunpack.c.h.b16 %v1765
    %v2551 = vunpack.c.l.b16 %v1766
    %v2552 = vunpack.c.h.b16 %v1766
    %v2553 = vunpack.c.l.b16 %v1767
    %v2554 = vunpack.c.h.b16 %v1767
    %v2555 = vunpack.c.l.b16 %v1768
    %v2556 = vunpack.c.h.b16 %v1768
    %v2557 = vunpack.c.l.b16 %v1769
    %v2558 = vunpack.c.h.b16 %v1769
    %v2559 = vunpack.c.l.b16 %v1770
    %v2560 = vunpack.c.h.b16 %v1770
    %v2561 = vpack.c.b16 %v2053, %v2049
    %v2562 = vpack.c.b16 %v2054, %v2050
    %v2563 = vpack.c.b16 %v2055, %v2051
    %v2564 = vpack.c.b16 %v2056, %v2052
    %v2565 = vpack.c.b16 %v2061, %v2057
    %v2566 = vpack.c.b16 %v2062, %v2058
    %v2567 = vpack.c.b16 %v2063, %v2059
    %v2568 = vpack.c.b16 %v2064, %v2060
    %v2569 = vpack.c.b16 %v2069, %v2065
    %v2570 = vpack.c.b16 %v2070, %v2066
    %v2571 = vpack.c.b16 %v2071, %v2067
    %v2572 = vpack.c.b16 %v2072, %v2068
    %v2573 = vpack.c.b16 %v2077, %v2073
    %v2574 = vpack.c.b16 %v2078, %v2074
    %v2575 = vpack.c.b16 %v2079, %v2075
    %v2576 = vpack.c.b16 %v2080, %v2076
    %v2577 = vpack.c.b16 %v2085, %v2081
    %v2578 = vpack.c.b16 %v2086, %v2082
    %v2579 = vpack.c.b16 %v2087, %v2083
    %v2580 = vpack.c.b16 %v2088, %v2084
    %v2581 = vpack.c.b16 %v2093, %v2089
    %v2582 = vpack.c.b16 %v2094, %v2090
    %v2583 = vpack.c.b16 %v2095, %v2091
    %v2584 = vpack.c.b16 %v2096, %v2092
    %v2585 = vpack.c.b16 %v2101, %v2097
    %v2586 = vpack.c.b16 %v2102, %v2098
    %v2587 = vpack.c.b16 %v2103, %v2099
    %v2588 = vpack.c.b16 %v2104, %v2100
    %v2589 = vpack.c.b16 %v2109, %v2105
    %v2590 = vpack.c.b16 %v2110, %v2106
    %v2591 = vpack.c.b16 %v2111, %v2107
    %v2592 = vpack.c.b16 %v2112, %v2108
    %v2593 = vpack.c.b16 %v2117, %v2113
    %v2594 = vpack.c.b16 %v2118, %v2114
    %v2595 = vpack.c.b16 %v2119, %v2115
    %v2596 = vpack.c.b16 %v2120, %v2116
    %v2597 = vpack.c.b16 %v2125, %v2121
    %v2598 = vpack.c.b16 %v2126, %v2122
    %v2599 = vpack.c.b16 %v2127, %v2123
    %v2600 = vpack.c.b16 %v2128, %v2124
    %v2601 = vpack.c.b16 %v2133, %v2129
    %v2602 = vpack.c.b16 %v2134, %v2130
    %v2603 = vpack.c.b16 %v2135, %v2131
    %v2604 = vpack.c.b16 %v2136, %v2132
    %v2605 = vpack.c.b16 %v2141, %v2137
    %v2606 = vpack.c.b16 %v2142, %v2138
    %v2607 = vpack.c.b16 %v2143, %v2139
    %v2608 = vpack.c.b16 %v2144, %v2140
    %v2609 = vpack.c.b16 %v2149, %v2145
    %v2610 = vpack.c.b16 %v2150, %v2146
    %v2611 = vpack.c.b16 %v2151, %v2147
    %v2612 = vpack.c.b16 %v2152, %v2148
    %v2613 = vpack.c.b16 %v2157, %v2153
    %v2614 = vpack.c.b16 %v2158, %v2154
    %v2615 = vpack.c.b16 %v2159, %v2155
    %v2616 = vpack.c.b16 %v2160, %v2156
    %v2617 = vpack.c.b16 %v2165, %v2161
    %v2618 = vpack.c.b16 %v2166, %v2162
    %v2619 = vpack.c.b16 %v2167, %v2163
    %v2620 = vpack.c.b16 %v2168, %v2164
    %v2621 = vpack.c.b16 %v2173, %v2169
    %v2622 = vpack.c.b16 %v2174, %v2170
    %v2623 = vpack.c.b16 %v2175, %v2171
    %v2624 = vpack.c.b16 %v2176, %v2172
    %v2625 = vpack.c.b16 %v2181, %v2177
    %v2626 = vpack.c.b16 %v2182, %v2178
    %v2627 = vpack.c.b16 %v2183, %v2179
    %v2628 = vpack.c.b16 %v2184, %v2180
    %v2629 = vpack.c.b16 %v2189, %v2185
    %v2630 = vpack.c.b16 %v2190, %v2186
    %v2631 = vpack.c.b16 %v2191, %v2187
    %v2632 = vpack.c.b16 %v2192, %v2188
    %v2633 = vpack.c.b16 %v2197, %v2193
    %v2634 = vpack.c.b16 %v2198, %v2194
    %v2635 = vpack.c.b16 %v2199, %v2195
    %v2636 = vpack.c.b16 %v2200, %v2196
    %v2637 = vpack.c.b16 %v2205, %v2201
    %v2638 = vpack.c.b16 %v2206, %v2202
    %v2639 = vpack.c.b16 %v2207, %v2203
    %v2640 = vpack.c.b16 %v2208, %v2204
    %v2641 = vpack.c.b16 %v2213, %v2209
    %v2642 = vpack.c.b16 %v2214, %v2210
    %v2643 = vpack.c.b16 %v2215, %v2211
    %v2644 = vpack.c.b16 %v2216, %v2212
    %v2645 = vpack.c.b16 %v2221, %v2217
    %v2646 = vpack.c.b16 %v2222, %v2218
    %v2647 = vpack.c.b16 %v2223, %v2219
    %v2648 = vpack.c.b16 %v2224, %v2220
    %v2649 = vpack.c.b16 %v2229, %v2225
    %v2650 = vpack.c.b16 %v2230, %v2226
    %v2651 = vpack.c.b16 %v2231, %v2227
    %v2652 = vpack.c.b16 %v2232, %v2228
    %v2653 = vpack.c.b16 %v2237, %v2233
    %v2654 = vpack.c.b16 %v2238, %v2234
    %v2655 = vpack.c.b16 %v2239, %v2235
    %v2656 = vpack.c.b16 %v2240, %v2236
    %v2657 = vpack.c.b16 %v2245, %v2241
    %v2658 = vpack.c.b16 %v2246, %v2242
    %v2659 = vpack.c.b16 %v2247, %v2243
    %v2660 = vpack.c.b16 %v2248, %v2244
    %v2661 = vpack.c.b16 %v2253, %v2249
    %v2662 = vpack.c.b16 %v2254, %v2250
    %v2663 = vpack.c.b16 %v2255, %v2251
    %v2664 = vpack.c.b16 %v2256, %v2252
    %v2665 = vpack.c.b16 %v2261, %v2257
    %v2666 = vpack.c.b16 %v2262, %v2258
    %v2667 = vpack.c.b16 %v2263, %v2259
    %v2668 = vpack.c.b16 %v2264, %v2260
    %v2669 = vpack.c.b16 %v2269, %v2265
    %v2670 = vpack.c.b16 %v2270, %v2266
    %v2671 = vpack.c.b16 %v2271, %v2267
    %v2672 = vpack.c.b16 %v2272, %v2268
    %v2673 = vpack.c.b16 %v2277, %v2273
    %v2674 = vpack.c.b16 %v2278, %v2274
    %v2675 = vpack.c.b16 %v2279, %v2275
    %v2676 = vpack.c.b16 %v2280, %v2276
    %v2677 = vpack.c.b16 %v2285, %v2281
    %v2678 = vpack.c.b16 %v2286, %v2282
    %v2679 = vpack.c.b16 %v2287, %v2283
    %v2680 = vpack.c.b16 %v2288, %v2284
    %v2681 = vpack.c.b16 %v2293, %v2289
    %v2682 = vpack.c.b16 %v2294, %v2290
    %v2683 = vpack.c.b16 %v2295, %v2291
    %v2684 = vpack.c.b16 %v2296, %v2292
    %v2685 = vpack.c.b16 %v2301, %v2297
    %v2686 = vpack.c.b16 %v2302, %v2298
    %v2687 = vpack.c.b16 %v2303, %v2299
    %v2688 = vpack.c.b16 %v2304, %v2300
    %v2689 = vpack.c.b16 %v2309, %v2305
    %v2690 = vpack.c.b16 %v2310, %v2306
    %v2691 = vpack.c.b16 %v2311, %v2307
    %v2692 = vpack.c.b16 %v2312, %v2308
    %v2693 = vpack.c.b16 %v2317, %v2313
    %v2694 = vpack.c.b16 %v2318, %v2314
    %v2695 = vpack.c.b16 %v2319, %v2315
    %v2696 = vpack.c.b16 %v2320, %v2316
    %v2697 = vpack.c.b16 %v2325, %v2321
    %v2698 = vpack.c.b16 %v2326, %v2322
    %v2699 = vpack.c.b16 %v2327, %v2323
    %v2700 = vpack.c.b16 %v2328, %v2324
    %v2701 = vpack.c.b16 %v2333, %v2329
    %v2702 = vpack.c.b16 %v2334, %v2330
    %v2703 = vpack.c.b16 %v2335, %v2331
    %v2704 = vpack.c.b16 %v2336, %v2332
    %v2705 = vpack.c.b16 %v2341, %v2337
    %v2706 = vpack.c.b16 %v2342, %v2338
    %v2707 = vpack.c.b16 %v2343, %v2339
    %v2708 = vpack.c.b16 %v2344, %v2340
    %v2709 = vpack.c.b16 %v2349, %v2345
    %v2710 = vpack.c.b16 %v2350, %v2346
    %v2711 = vpack.c.b16 %v2351, %v2347
    %v2712 = vpack.c.b16 %v2352, %v2348
    %v2713 = vpack.c.b16 %v2357, %v2353
    %v2714 = vpack.c.b16 %v2358, %v2354
    %v2715 = vpack.c.b16 %v2359, %v2355
    %v2716 = vpack.c.b16 %v2360, %v2356
    %v2717 = vpack.c.b16 %v2365, %v2361
    %v2718 = vpack.c.b16 %v2366, %v2362
    %v2719 = vpack.c.b16 %v2367, %v2363
    %v2720 = vpack.c.b16 %v2368, %v2364
    %v2721 = vpack.c.b16 %v2373, %v2369
    %v2722 = vpack.c.b16 %v2374, %v2370
    %v2723 = vpack.c.b16 %v2375, %v2371
    %v2724 = vpack.c.b16 %v2376, %v2372
    %v2725 = vpack.c.b16 %v2381, %v2377
    %v2726 = vpack.c.b16 %v2382, %v2378
    %v2727 = vpack.c.b16 %v2383, %v2379
    %v2728 = vpack.c.b16 %v2384, %v2380
    %v2729 = vpack.c.b16 %v2389, %v2385
    %v2730 = vpack.c.b16 %v2390, %v2386
    %v2731 = vpack.c.b16 %v2391, %v2387
    %v2732 = vpack.c.b16 %v2392, %v2388
    %v2733 = vpack.c.b16 %v2397, %v2393
    %v2734 = vpack.c.b16 %v2398, %v2394
    %v2735 = vpack.c.b16 %v2399, %v2395
    %v2736 = vpack.c.b16 %v2400, %v2396
    %v2737 = vpack.c.b16 %v2405, %v2401
    %v2738 = vpack.c.b16 %v2406, %v2402
    %v2739 = vpack.c.b16 %v2407, %v2403
    %v2740 = vpack.c.b16 %v2408, %v2404
    %v2741 = vpack.c.b16 %v2413, %v2409
    %v2742 = vpack.c.b16 %v2414, %v2410
    %v2743 = vpack.c.b16 %v2415, %v2411
    %v2744 = vpack.c.b16 %v2416, %v2412
    %v2745 = vpack.c.b16 %v2421, %v2417
    %v2746 = vpack.c.b16 %v2422, %v2418
    %v2747 = vpack.c.b16 %v2423, %v2419
    %v2748 = vpack.c.b16 %v2424, %v2420
    %v2749 = vpack.c.b16 %v2429, %v2425
    %v2750 = vpack.c.b16 %v2430, %v2426
    %v2751 = vpack.c.b16 %v2431, %v2427
    %v2752 = vpack.c.b16 %v2432, %v2428
    %v2753 = vpack.c.b16 %v2437, %v2433
    %v2754 = vpack.c.b16 %v2438, %v2434
    %v2755 = vpack.c.b16 %v2439, %v2435
    %v2756 = vpack.c.b16 %v2440, %v2436
    %v2757 = vpack.c.b16 %v2445, %v2441
    %v2758 = vpack.c.b16 %v2446, %v2442
    %v2759 = vpack.c.b16 %v2447, %v2443
    %v2760 = vpack.c.b16 %v2448, %v2444
    %v2761 = vpack.c.b16 %v2453, %v2449
    %v2762 = vpack.c.b16 %v2454, %v2450
    %v2763 = vpack.c.b16 %v2455, %v2451
    %v2764 = vpack.c.b16 %v2456, %v2452
    %v2765 = vpack.c.b16 %v2461, %v2457
    %v2766 = vpack.c.b16 %v2462, %v2458
    %v2767 = vpack.c.b16 %v2463, %v2459
    %v2768 = vpack.c.b16 %v2464, %v2460
    %v2769 = vpack.c.b16 %v2469, %v2465
    %v2770 = vpack.c.b16 %v2470, %v2466
    %v2771 = vpack.c.b16 %v2471, %v2467
    %v2772 = vpack.c.b16 %v2472, %v2468
    %v2773 = vpack.c.b16 %v2477, %v2473
    %v2774 = vpack.c.b16 %v2478, %v2474
    %v2775 = vpack.c.b16 %v2479, %v2475
    %v2776 = vpack.c.b16 %v2480, %v2476
    %v2777 = vpack.c.b16 %v2485, %v2481
    %v2778 = vpack.c.b16 %v2486, %v2482
    %v2779 = vpack.c.b16 %v2487, %v2483
    %v2780 = vpack.c.b16 %v2488, %v2484
    %v2781 = vpack.c.b16 %v2493, %v2489
    %v2782 = vpack.c.b16 %v2494, %v2490
    %v2783 = vpack.c.b16 %v2495, %v2491
    %v2784 = vpack.c.b16 %v2496, %v2492
    %v2785 = vpack.c.b16 %v2501, %v2497
    %v2786 = vpack.c.b16 %v2502, %v2498
    %v2787 = vpack.c.b16 %v2503, %v2499
    %v2788 = vpack.c.b16 %v2504, %v2500
    %v2789 = vpack.c.b16 %v2509, %v2505
    %v2790 = vpack.c.b16 %v2510, %v2506
    %v2791 = vpack.c.b16 %v2511, %v2507
    %v2792 = vpack.c.b16 %v2512, %v2508
    %v2793 = vpack.c.b16 %v2517, %v2513
    %v2794 = vpack.c.b16 %v2518, %v2514
    %v2795 = vpack.c.b16 %v2519, %v2515
    %v2796 = vpack.c.b16 %v2520, %v2516
    %v2797 = vpack.c.b16 %v2525, %v2521
    %v2798 = vpack.c.b16 %v2526, %v2522
    %v2799 = vpack.c.b16 %v2527, %v2523
    %v2800 = vpack.c.b16 %v2528, %v2524
    %v2801 = vpack.c.b16 %v2533, %v2529
    %v2802 = vpack.c.b16 %v2534, %v2530
    %v2803 = vpack.c.b16 %v2535, %v2531
    %v2804 = vpack.c.b16 %v2536, %v2532
    %v2805 = vpack.c.b16 %v2541, %v2537
    %v2806 = vpack.c.b16 %v2542, %v2538
    %v2807 = vpack.c.b16 %v2543, %v2539
    %v2808 = vpack.c.b16 %v2544, %v2540
    %v2809 = vpack.c.b16 %v2549, %v2545
    %v2810 = vpack.c.b16 %v2550, %v2546
    %v2811 = vpack.c.b16 %v2551, %v2547
    %v2812 = vpack.c.b16 %v2552, %v2548
    %v2813 = vpack.c.b16 %v2557, %v2553
    %v2814 = vpack.c.b16 %v2558, %v2554
    %v2815 = vpack.c.b16 %v2559, %v2555
    %v2816 = vpack.c.b16 %v2560, %v2556
    %3073 = vmatprep.subr.bf16.mxu0 %v2590
    %3074 = vmatpush1.bf16.msra.mxu0 %v2589
    %3075 = vmatprep.subr.bf16.mxu0 %v2586
    %3076 = vmatpush1.bf16.msra.mxu0 %v2585
    %3077 = vmatprep.subr.bf16.mxu0 %v2582
    %3078 = vmatpush1.bf16.msra.mxu0 %v2581
    %3079 = vmatprep.subr.bf16.mxu0 %v2578
    %3080 = vmatpush1.bf16.msra.mxu0 %v2577
    %3081 = vmatprep.subr.bf16.mxu0 %v2574
    %3082 = vmatpush1.bf16.msra.mxu0 %v2573
    %3083 = vmatprep.subr.bf16.mxu0 %v2570
    %3084 = vmatpush1.bf16.msra.mxu0 %v2569
    %3085 = vmatprep.subr.bf16.mxu0 %v2566
    %3086 = vmatpush1.bf16.msra.mxu0 %v2565
    %3087 = vmatprep.subr.bf16.mxu0 %v2562
    %3088 = vmatpush1.bf16.msra.mxu0 %v2561
    %3089 = vmatprep.subr.bf16.mxu0 %v2622
    %3090 = vmatpush2.bf16.msra.mxu0 %v2621
    %3091 = vmatprep.subr.bf16.mxu0 %v2618
    %3092 = vmatpush2.bf16.msra.mxu0 %v2617
    %3093 = vmatprep.subr.bf16.mxu0 %v2614
    %3094 = vmatpush2.bf16.msra.mxu0 %v2613
    %3095 = vmatprep.subr.bf16.mxu0 %v2610
    %3096 = vmatpush2.bf16.msra.mxu0 %v2609
    %3097 = vmatprep.subr.bf16.mxu0 %v2606
    %3098 = vmatpush2.bf16.msra.mxu0 %v2605
    %3099 = vmatprep.subr.bf16.mxu0 %v2602
    %3100 = vmatpush2.bf16.msra.mxu0 %v2601
    %3101 = vmatprep.subr.bf16.mxu0 %v2598
    %3102 = vmatpush2.bf16.msra.mxu0 %v2597
    %3103 = vmatprep.subr.bf16.mxu0 %v2594
    %3104 = vmatpush2.bf16.msra.mxu0 %v2593
    %3105 = vmatprep.mubr.bf16.mxu0 %v1508
    %3106 = vmatmul.mubr.bf16.gmra.mxu0 %v1507
    %v3107 = vpop.f32.mrf.mxu0
    %v3108 = vadd.f32 %v1776, %v3107
    %v3109 = vpop.f32.mrf.mxu0
    %v3110 = vadd.f32 %v1780, %v3109
    %v3111 = vpop.f32.mrf.mxu0
    %v3112 = vpop.f32.mrf.mxu0
    %3113 = vdwg.mxu0
    %3114 = vmatprep.subr.bf16.mxu0 %v2654
    %3115 = vmatpush1.bf16.msra.mxu0 %v2653
    %3116 = vmatprep.subr.bf16.mxu0 %v2650
    %3117 = vmatpush1.bf16.msra.mxu0 %v2649
    %3118 = vmatprep.subr.bf16.mxu0 %v2646
    %3119 = vmatpush1.bf16.msra.mxu0 %v2645
    %3120 = vmatprep.subr.bf16.mxu0 %v2642
    %3121 = vmatpush1.bf16.msra.mxu0 %v2641
    %3122 = vmatprep.subr.bf16.mxu0 %v2638
    %3123 = vmatpush1.bf16.msra.mxu0 %v2637
    %3124 = vmatprep.subr.bf16.mxu0 %v2634
    %3125 = vmatpush1.bf16.msra.mxu0 %v2633
    %3126 = vmatprep.subr.bf16.mxu0 %v2630
    %3127 = vmatpush1.bf16.msra.mxu0 %v2629
    %3128 = vmatprep.subr.bf16.mxu0 %v2626
    %3129 = vmatpush1.bf16.msra.mxu0 %v2625
    %3130 = vmatprep.subr.bf16.mxu0 %v2686
    %3131 = vmatpush2.bf16.msra.mxu0 %v2685
    %3132 = vmatprep.subr.bf16.mxu0 %v2682
    %3133 = vmatpush2.bf16.msra.mxu0 %v2681
    %3134 = vmatprep.subr.bf16.mxu0 %v2678
    %3135 = vmatpush2.bf16.msra.mxu0 %v2677
    %3136 = vmatprep.subr.bf16.mxu0 %v2674
    %3137 = vmatpush2.bf16.msra.mxu0 %v2673
    %3138 = vmatprep.subr.bf16.mxu0 %v2670
    %3139 = vmatpush2.bf16.msra.mxu0 %v2669
    %3140 = vmatprep.subr.bf16.mxu0 %v2666
    %3141 = vmatpush2.bf16.msra.mxu0 %v2665
    %3142 = vmatprep.subr.bf16.mxu0 %v2662
    %3143 = vmatpush2.bf16.msra.mxu0 %v2661
    %3144 = vmatprep.subr.bf16.mxu0 %v2658
    %3145 = vmatpush2.bf16.msra.mxu0 %v2657
    %3146 = vmatprep.mubr.bf16.mxu0 %v1510
    %3147 = vmatmul.mubr.bf16.gmra.mxu0 %v1509
    %v3148 = vpop.f32.mrf.mxu0
    %v3149 = vadd.f32 %v3108, %v3148
    %v3150 = vpop.f32.mrf.mxu0
    %v3151 = vadd.f32 %v3110, %v3150
    %v3152 = vpop.f32.mrf.mxu0
    %v3153 = vpop.f32.mrf.mxu0
    %3154 = vdwg.mxu0
    %3155 = vmatprep.subr.bf16.mxu0 %v2718
    %3156 = vmatpush1.bf16.msra.mxu0 %v2717
    %3157 = vmatprep.subr.bf16.mxu0 %v2714
    %3158 = vmatpush1.bf16.msra.mxu0 %v2713
    %3159 = vmatprep.subr.bf16.mxu0 %v2710
    %3160 = vmatpush1.bf16.msra.mxu0 %v2709
    %3161 = vmatprep.subr.bf16.mxu0 %v2706
    %3162 = vmatpush1.bf16.msra.mxu0 %v2705
    %3163 = vmatprep.subr.bf16.mxu0 %v2702
    %3164 = vmatpush1.bf16.msra.mxu0 %v2701
    %3165 = vmatprep.subr.bf16.mxu0 %v2698
    %3166 = vmatpush1.bf16.msra.mxu0 %v2697
    %3167 = vmatprep.subr.bf16.mxu0 %v2694
    %3168 = vmatpush1.bf16.msra.mxu0 %v2693
    %3169 = vmatprep.subr.bf16.mxu0 %v2690
    %3170 = vmatpush1.bf16.msra.mxu0 %v2689
    %3171 = vmatprep.subr.bf16.mxu0 %v2750
    %3172 = vmatpush2.bf16.msra.mxu0 %v2749
    %3173 = vmatprep.subr.bf16.mxu0 %v2746
    %3174 = vmatpush2.bf16.msra.mxu0 %v2745
    %3175 = vmatprep.subr.bf16.mxu0 %v2742
    %3176 = vmatpush2.bf16.msra.mxu0 %v2741
    %3177 = vmatprep.subr.bf16.mxu0 %v2738
    %3178 = vmatpush2.bf16.msra.mxu0 %v2737
    %3179 = vmatprep.subr.bf16.mxu0 %v2734
    %3180 = vmatpush2.bf16.msra.mxu0 %v2733
    %3181 = vmatprep.subr.bf16.mxu0 %v2730
    %3182 = vmatpush2.bf16.msra.mxu0 %v2729
    %3183 = vmatprep.subr.bf16.mxu0 %v2726
    %3184 = vmatpush2.bf16.msra.mxu0 %v2725
    %3185 = vmatprep.subr.bf16.mxu0 %v2722
    %3186 = vmatpush2.bf16.msra.mxu0 %v2721
    %3187 = vmatprep.mubr.bf16.mxu0 %v1512
    %3188 = vmatmul.mubr.bf16.gmra.mxu0 %v1511
    %v3189 = vpop.f32.mrf.mxu0
    %v3190 = vadd.f32 %v3149, %v3189
    %v3191 = vpop.f32.mrf.mxu0
    %v3192 = vadd.f32 %v3151, %v3191
    %v3193 = vpop.f32.mrf.mxu0
    %v3194 = vpop.f32.mrf.mxu0
    %3195 = vdwg.mxu0
    %3196 = vmatprep.subr.bf16.mxu0 %v2782
    %3197 = vmatpush1.bf16.msra.mxu0 %v2781
    %3198 = vmatprep.subr.bf16.mxu0 %v2778
    %3199 = vmatpush1.bf16.msra.mxu0 %v2777
    %3200 = vmatprep.subr.bf16.mxu0 %v2774
    %3201 = vmatpush1.bf16.msra.mxu0 %v2773
    %3202 = vmatprep.subr.bf16.mxu0 %v2770
    %3203 = vmatpush1.bf16.msra.mxu0 %v2769
    %3204 = vmatprep.subr.bf16.mxu0 %v2766
    %3205 = vmatpush1.bf16.msra.mxu0 %v2765
    %3206 = vmatprep.subr.bf16.mxu0 %v2762
    %3207 = vmatpush1.bf16.msra.mxu0 %v2761
    %3208 = vmatprep.subr.bf16.mxu0 %v2758
    %3209 = vmatpush1.bf16.msra.mxu0 %v2757
    %3210 = vmatprep.subr.bf16.mxu0 %v2754
    %3211 = vmatpush1.bf16.msra.mxu0 %v2753
    %3212 = vmatprep.subr.bf16.mxu0 %v2814
    %3213 = vmatpush2.bf16.msra.mxu0 %v2813
    %3214 = vmatprep.subr.bf16.mxu0 %v2810
    %3215 = vmatpush2.bf16.msra.mxu0 %v2809
    %3216 = vmatprep.subr.bf16.mxu0 %v2806
    %3217 = vmatpush2.bf16.msra.mxu0 %v2805
    %3218 = vmatprep.subr.bf16.mxu0 %v2802
    %3219 = vmatpush2.bf16.msra.mxu0 %v2801
    %3220 = vmatprep.subr.bf16.mxu0 %v2798
    %3221 = vmatpush2.bf16.msra.mxu0 %v2797
    %3222 = vmatprep.subr.bf16.mxu0 %v2794
    %3223 = vmatpush2.bf16.msra.mxu0 %v2793
    %3224 = vmatprep.subr.bf16.mxu0 %v2790
    %3225 = vmatpush2.bf16.msra.mxu0 %v2789
    %3226 = vmatprep.subr.bf16.mxu0 %v2786
    %3227 = vmatpush2.bf16.msra.mxu0 %v2785
    %3228 = vmatprep.mubr.bf16.mxu0 %v1514
    %3229 = vmatmul.mubr.bf16.gmra.mxu0 %v1513
    %v3230 = vpop.f32.mrf.mxu0
    %v3231 = vadd.f32 %v3190, %v3230
    %v3232 = vpop.f32.mrf.mxu0
    %v3233 = vadd.f32 %v3192, %v3232
    %v3234 = vpop.f32.mrf.mxu0
    %v3235 = vpop.f32.mrf.mxu0
    %3236 = vdwg.mxu0
    %3237 = vmatprep.subr.bf16.mxu0 %v2592
    %3238 = vmatpush1.bf16.msra.mxu0 %v2591
    %3239 = vmatprep.subr.bf16.mxu0 %v2588
    %3240 = vmatpush1.bf16.msra.mxu0 %v2587
    %3241 = vmatprep.subr.bf16.mxu0 %v2584
    %3242 = vmatpush1.bf16.msra.mxu0 %v2583
    %3243 = vmatprep.subr.bf16.mxu0 %v2580
    %3244 = vmatpush1.bf16.msra.mxu0 %v2579
    %3245 = vmatprep.subr.bf16.mxu0 %v2576
    %3246 = vmatpush1.bf16.msra.mxu0 %v2575
    %3247 = vmatprep.subr.bf16.mxu0 %v2572
    %3248 = vmatpush1.bf16.msra.mxu0 %v2571
    %3249 = vmatprep.subr.bf16.mxu0 %v2568
    %3250 = vmatpush1.bf16.msra.mxu0 %v2567
    %3251 = vmatprep.subr.bf16.mxu0 %v2564
    %3252 = vmatpush1.bf16.msra.mxu0 %v2563
    %3253 = vmatprep.subr.bf16.mxu0 %v2624
    %3254 = vmatpush2.bf16.msra.mxu0 %v2623
    %3255 = vmatprep.subr.bf16.mxu0 %v2620
    %3256 = vmatpush2.bf16.msra.mxu0 %v2619
    %3257 = vmatprep.subr.bf16.mxu0 %v2616
    %3258 = vmatpush2.bf16.msra.mxu0 %v2615
    %3259 = vmatprep.subr.bf16.mxu0 %v2612
    %3260 = vmatpush2.bf16.msra.mxu0 %v2611
    %3261 = vmatprep.subr.bf16.mxu0 %v2608
    %3262 = vmatpush2.bf16.msra.mxu0 %v2607
    %3263 = vmatprep.subr.bf16.mxu0 %v2604
    %3264 = vmatpush2.bf16.msra.mxu0 %v2603
    %3265 = vmatprep.subr.bf16.mxu0 %v2600
    %3266 = vmatpush2.bf16.msra.mxu0 %v2599
    %3267 = vmatprep.subr.bf16.mxu0 %v2596
    %3268 = vmatpush2.bf16.msra.mxu0 %v2595
    %3269 = vmatprep.mubr.bf16.mxu0 %v1508
    %3270 = vmatmul.mubr.bf16.gmra.mxu0 %v1507
    %v3271 = vpop.f32.mrf.mxu0
    %v3272 = vadd.f32 %v1784, %v3271
    %v3273 = vpop.f32.mrf.mxu0
    %v3274 = vadd.f32 %v1788, %v3273
    %v3275 = vpop.f32.mrf.mxu0
    %v3276 = vpop.f32.mrf.mxu0
    %3277 = vdwg.mxu0
    %3278 = vmatprep.subr.bf16.mxu0 %v2656
    %3279 = vmatpush1.bf16.msra.mxu0 %v2655
    %3280 = vmatprep.subr.bf16.mxu0 %v2652
    %3281 = vmatpush1.bf16.msra.mxu0 %v2651
    %3282 = vmatprep.subr.bf16.mxu0 %v2648
    %3283 = vmatpush1.bf16.msra.mxu0 %v2647
    %3284 = vmatprep.subr.bf16.mxu0 %v2644
    %3285 = vmatpush1.bf16.msra.mxu0 %v2643
    %3286 = vmatprep.subr.bf16.mxu0 %v2640
    %3287 = vmatpush1.bf16.msra.mxu0 %v2639
    %3288 = vmatprep.subr.bf16.mxu0 %v2636
    %3289 = vmatpush1.bf16.msra.mxu0 %v2635
    %3290 = vmatprep.subr.bf16.mxu0 %v2632
    %3291 = vmatpush1.bf16.msra.mxu0 %v2631
    %3292 = vmatprep.subr.bf16.mxu0 %v2628
    %3293 = vmatpush1.bf16.msra.mxu0 %v2627
    %3294 = vmatprep.subr.bf16.mxu0 %v2688
    %3295 = vmatpush2.bf16.msra.mxu0 %v2687
    %3296 = vmatprep.subr.bf16.mxu0 %v2684
    %3297 = vmatpush2.bf16.msra.mxu0 %v2683
    %3298 = vmatprep.subr.bf16.mxu0 %v2680
    %3299 = vmatpush2.bf16.msra.mxu0 %v2679
    %3300 = vmatprep.subr.bf16.mxu0 %v2676
    %3301 = vmatpush2.bf16.msra.mxu0 %v2675
    %3302 = vmatprep.subr.bf16.mxu0 %v2672
    %3303 = vmatpush2.bf16.msra.mxu0 %v2671
    %3304 = vmatprep.subr.bf16.mxu0 %v2668
    %3305 = vmatpush2.bf16.msra.mxu0 %v2667
    %3306 = vmatprep.subr.bf16.mxu0 %v2664
    %3307 = vmatpush2.bf16.msra.mxu0 %v2663
    %3308 = vmatprep.subr.bf16.mxu0 %v2660
    %3309 = vmatpush2.bf16.msra.mxu0 %v2659
    %3310 = vmatprep.mubr.bf16.mxu0 %v1510
    %3311 = vmatmul.mubr.bf16.gmra.mxu0 %v1509
    %v3312 = vpop.f32.mrf.mxu0
    %v3313 = vadd.f32 %v3272, %v3312
    %v3314 = vpop.f32.mrf.mxu0
    %v3315 = vadd.f32 %v3274, %v3314
    %v3316 = vpop.f32.mrf.mxu0
    %v3317 = vpop.f32.mrf.mxu0
    %3318 = vdwg.mxu0
    %3319 = vmatprep.subr.bf16.mxu0 %v2720
    %3320 = vmatpush1.bf16.msra.mxu0 %v2719
    %3321 = vmatprep.subr.bf16.mxu0 %v2716
    %3322 = vmatpush1.bf16.msra.mxu0 %v2715
    %3323 = vmatprep.subr.bf16.mxu0 %v2712
    %3324 = vmatpush1.bf16.msra.mxu0 %v2711
    %3325 = vmatprep.subr.bf16.mxu0 %v2708
    %3326 = vmatpush1.bf16.msra.mxu0 %v2707
    %3327 = vmatprep.subr.bf16.mxu0 %v2704
    %3328 = vmatpush1.bf16.msra.mxu0 %v2703
    %3329 = vmatprep.subr.bf16.mxu0 %v2700
    %3330 = vmatpush1.bf16.msra.mxu0 %v2699
    %3331 = vmatprep.subr.bf16.mxu0 %v2696
    %3332 = vmatpush1.bf16.msra.mxu0 %v2695
    %3333 = vmatprep.subr.bf16.mxu0 %v2692
    %3334 = vmatpush1.bf16.msra.mxu0 %v2691
    %3335 = vmatprep.subr.bf16.mxu0 %v2752
    %3336 = vmatpush2.bf16.msra.mxu0 %v2751
    %3337 = vmatprep.subr.bf16.mxu0 %v2748
    %3338 = vmatpush2.bf16.msra.mxu0 %v2747
    %3339 = vmatprep.subr.bf16.mxu0 %v2744
    %3340 = vmatpush2.bf16.msra.mxu0 %v2743
    %3341 = vmatprep.subr.bf16.mxu0 %v2740
    %3342 = vmatpush2.bf16.msra.mxu0 %v2739
    %3343 = vmatprep.subr.bf16.mxu0 %v2736
    %3344 = vmatpush2.bf16.msra.mxu0 %v2735
    %3345 = vmatprep.subr.bf16.mxu0 %v2732
    %3346 = vmatpush2.bf16.msra.mxu0 %v2731
    %3347 = vmatprep.subr.bf16.mxu0 %v2728
    %3348 = vmatpush2.bf16.msra.mxu0 %v2727
    %3349 = vmatprep.subr.bf16.mxu0 %v2724
    %3350 = vmatpush2.bf16.msra.mxu0 %v2723
    %3351 = vmatprep.mubr.bf16.mxu0 %v1512
    %3352 = vmatmul.mubr.bf16.gmra.mxu0 %v1511
    %v3353 = vpop.f32.mrf.mxu0
    %v3354 = vadd.f32 %v3313, %v3353
    %v3355 = vpop.f32.mrf.mxu0
    %v3356 = vadd.f32 %v3315, %v3355
    %v3357 = vpop.f32.mrf.mxu0
    %v3358 = vpop.f32.mrf.mxu0
    %3359 = vdwg.mxu0
    %3360 = vmatprep.subr.bf16.mxu0 %v2784
    %3361 = vmatpush1.bf16.msra.mxu0 %v2783
    %3362 = vmatprep.subr.bf16.mxu0 %v2780
    %3363 = vmatpush1.bf16.msra.mxu0 %v2779
    %3364 = vmatprep.subr.bf16.mxu0 %v2776
    %3365 = vmatpush1.bf16.msra.mxu0 %v2775
    %3366 = vmatprep.subr.bf16.mxu0 %v2772
    %3367 = vmatpush1.bf16.msra.mxu0 %v2771
    %3368 = vmatprep.subr.bf16.mxu0 %v2768
    %3369 = vmatpush1.bf16.msra.mxu0 %v2767
    %3370 = vmatprep.subr.bf16.mxu0 %v2764
    %3371 = vmatpush1.bf16.msra.mxu0 %v2763
    %3372 = vmatprep.subr.bf16.mxu0 %v2760
    %3373 = vmatpush1.bf16.msra.mxu0 %v2759
    %3374 = vmatprep.subr.bf16.mxu0 %v2756
    %3375 = vmatpush1.bf16.msra.mxu0 %v2755
    %3376 = vmatprep.subr.bf16.mxu0 %v2816
    %3377 = vmatpush2.bf16.msra.mxu0 %v2815
    %3378 = vmatprep.subr.bf16.mxu0 %v2812
    %3379 = vmatpush2.bf16.msra.mxu0 %v2811
    %3380 = vmatprep.subr.bf16.mxu0 %v2808
    %3381 = vmatpush2.bf16.msra.mxu0 %v2807
    %3382 = vmatprep.subr.bf16.mxu0 %v2804
    %3383 = vmatpush2.bf16.msra.mxu0 %v2803
    %3384 = vmatprep.subr.bf16.mxu0 %v2800
    %3385 = vmatpush2.bf16.msra.mxu0 %v2799
    %3386 = vmatprep.subr.bf16.mxu0 %v2796
    %3387 = vmatpush2.bf16.msra.mxu0 %v2795
    %3388 = vmatprep.subr.bf16.mxu0 %v2792
    %3389 = vmatpush2.bf16.msra.mxu0 %v2791
    %3390 = vmatprep.subr.bf16.mxu0 %v2788
    %3391 = vmatpush2.bf16.msra.mxu0 %v2787
    %3392 = vmatprep.mubr.bf16.mxu0 %v1514
    %3393 = vmatmul.mubr.bf16.gmra.mxu0 %v1513
    %v3394 = vpop.f32.mrf.mxu0
    %v3395 = vadd.f32 %v3354, %v3394
    %v3396 = vpop.f32.mrf.mxu0
    %v3397 = vadd.f32 %v3356, %v3396
    %v3398 = vpop.f32.mrf.mxu0
    %v3399 = vpop.f32.mrf.mxu0
    %3400 = vdwg.mxu0
    %v3401 = vmax.f32 %v3231, 0.0
    %v3402 = vmax.f32 %v3233, 0.0
    %v3403 = vmax.f32 %v3395, 0.0
    %v3404 = vmax.f32 %v3397, 0.0
    %v3405 = vpack.c.bf16 %v3401, %v3401
    %v3406 = vpack.c.bf16 %v3402, %v3402
    %v3407 = vpack.c.bf16 %v3403, %v3403
    %v3408 = vpack.c.bf16 %v3404, %v3404
    %v3409 = vld [vmem:[%s7] sm:$0xf]
    %v3410 = vld [vmem:[%s7 + $0x4] sm:$0xf]
    %v3411 = vld [vmem:[%s7 + $0x8] sm:$0xf]
    %v3412 = vld [vmem:[%s7 + $0xc] sm:$0xf]
    %v3413 = vld [vmem:[%s7 + $0x10] sm:$0xf]
    %v3414 = vld [vmem:[%s7 + $0x14] sm:$0xf]
    %v3415 = vld [vmem:[%s7 + $0x18] sm:$0xf]
    %v3416 = vld [vmem:[%s7 + $0x1c] sm:$0xf]
    %v3417 = vld [vmem:[%s7 + $0x20] sm:$0xf]
    %v3418 = vld [vmem:[%s7 + $0x24] sm:$0xf]
    %v3419 = vld [vmem:[%s7 + $0x28] sm:$0xf]
    %v3420 = vld [vmem:[%s7 + $0x2c] sm:$0xf]
    %v3421 = vld [vmem:[%s7 + $0x30] sm:$0xf]
    %v3422 = vld [vmem:[%s7 + $0x34] sm:$0xf]
    %v3423 = vld [vmem:[%s7 + $0x38] sm:$0xf]
    %v3424 = vld [vmem:[%s7 + $0x3c] sm:$0xf]
    %v3425 = vld [vmem:[%s7 + $0x40] sm:$0xf]
    %v3426 = vld [vmem:[%s7 + $0x44] sm:$0xf]
    %v3427 = vld [vmem:[%s7 + $0x48] sm:$0xf]
    %v3428 = vld [vmem:[%s7 + $0x4c] sm:$0xf]
    %v3429 = vld [vmem:[%s7 + $0x50] sm:$0xf]
    %v3430 = vld [vmem:[%s7 + $0x54] sm:$0xf]
    %v3431 = vld [vmem:[%s7 + $0x58] sm:$0xf]
    %v3432 = vld [vmem:[%s7 + $0x5c] sm:$0xf]
    %v3433 = vld [vmem:[%s7 + $0x60] sm:$0xf]
    %v3434 = vld [vmem:[%s7 + $0x64] sm:$0xf]
    %v3435 = vld [vmem:[%s7 + $0x68] sm:$0xf]
    %v3436 = vld [vmem:[%s7 + $0x6c] sm:$0xf]
    %v3437 = vld [vmem:[%s7 + $0x70] sm:$0xf]
    %v3438 = vld [vmem:[%s7 + $0x74] sm:$0xf]
    %v3439 = vld [vmem:[%s7 + $0x78] sm:$0xf]
    %v3440 = vld [vmem:[%s7 + $0x7c] sm:$0xf]
    %v3441 = vld [vmem:[%s7 + $0x80] sm:$0xf]
    %v3442 = vld [vmem:[%s7 + $0x84] sm:$0xf]
    %v3443 = vld [vmem:[%s7 + $0x88] sm:$0xf]
    %v3444 = vld [vmem:[%s7 + $0x8c] sm:$0xf]
    %v3445 = vld [vmem:[%s7 + $0x90] sm:$0xf]
    %v3446 = vld [vmem:[%s7 + $0x94] sm:$0xf]
    %v3447 = vld [vmem:[%s7 + $0x98] sm:$0xf]
    %v3448 = vld [vmem:[%s7 + $0x9c] sm:$0xf]
    %v3449 = vld [vmem:[%s7 + $0xa0] sm:$0xf]
    %v3450 = vld [vmem:[%s7 + $0xa4] sm:$0xf]
    %v3451 = vld [vmem:[%s7 + $0xa8] sm:$0xf]
    %v3452 = vld [vmem:[%s7 + $0xac] sm:$0xf]
    %v3453 = vld [vmem:[%s7 + $0xb0] sm:$0xf]
    %v3454 = vld [vmem:[%s7 + $0xb4] sm:$0xf]
    %v3455 = vld [vmem:[%s7 + $0xb8] sm:$0xf]
    %v3456 = vld [vmem:[%s7 + $0xbc] sm:$0xf]
    %v3457 = vld [vmem:[%s7 + $0xc0] sm:$0xf]
    %v3458 = vld [vmem:[%s7 + $0xc4] sm:$0xf]
    %v3459 = vld [vmem:[%s7 + $0xc8] sm:$0xf]
    %v3460 = vld [vmem:[%s7 + $0xcc] sm:$0xf]
    %v3461 = vld [vmem:[%s7 + $0xd0] sm:$0xf]
    %v3462 = vld [vmem:[%s7 + $0xd4] sm:$0xf]
    %v3463 = vld [vmem:[%s7 + $0xd8] sm:$0xf]
    %v3464 = vld [vmem:[%s7 + $0xdc] sm:$0xf]
    %v3465 = vld [vmem:[%s7 + $0xe0] sm:$0xf]
    %v3466 = vld [vmem:[%s7 + $0xe4] sm:$0xf]
    %v3467 = vld [vmem:[%s7 + $0xe8] sm:$0xf]
    %v3468 = vld [vmem:[%s7 + $0xec] sm:$0xf]
    %v3469 = vld [vmem:[%s7 + $0xf0] sm:$0xf]
    %v3470 = vld [vmem:[%s7 + $0xf4] sm:$0xf]
    %v3471 = vld [vmem:[%s7 + $0xf8] sm:$0xf]
    %v3472 = vld [vmem:[%s7 + $0xfc] sm:$0xf]
    %v3473 = vld [vmem:[%s8] sm:$0x1]
    %v3475 = vlaneseq
    %v3476 = vshrl.u32 %v3475, 7
    %v3477 = vsub.s32 0, %v3476
    %v3478 = vrot.slane %v3473, %v3477
    %v3544 = vunpack.c.l.b16 %v3409
    %v3545 = vunpack.c.l.b16 %v3410
    %v3546 = vunpack.c.l.b16 %v3411
    %v3547 = vunpack.c.l.b16 %v3412
    %v3548 = vunpack.c.l.b16 %v3413
    %v3549 = vunpack.c.l.b16 %v3414
    %v3550 = vunpack.c.l.b16 %v3415
    %v3551 = vunpack.c.l.b16 %v3416
    %v3552 = vunpack.c.l.b16 %v3417
    %v3553 = vunpack.c.l.b16 %v3418
    %v3554 = vunpack.c.l.b16 %v3419
    %v3555 = vunpack.c.l.b16 %v3420
    %v3556 = vunpack.c.l.b16 %v3421
    %v3557 = vunpack.c.l.b16 %v3422
    %v3558 = vunpack.c.l.b16 %v3423
    %v3559 = vunpack.c.l.b16 %v3424
    %v3560 = vunpack.c.l.b16 %v3425
    %v3561 = vunpack.c.l.b16 %v3426
    %v3562 = vunpack.c.l.b16 %v3427
    %v3563 = vunpack.c.l.b16 %v3428
    %v3564 = vunpack.c.l.b16 %v3429
    %v3565 = vunpack.c.l.b16 %v3430
    %v3566 = vunpack.c.l.b16 %v3431
    %v3567 = vunpack.c.l.b16 %v3432
    %v3568 = vunpack.c.l.b16 %v3433
    %v3569 = vunpack.c.l.b16 %v3434
    %v3570 = vunpack.c.l.b16 %v3435
    %v3571 = vunpack.c.l.b16 %v3436
    %v3572 = vunpack.c.l.b16 %v3437
    %v3573 = vunpack.c.l.b16 %v3438
    %v3574 = vunpack.c.l.b16 %v3439
    %v3575 = vunpack.c.l.b16 %v3440
    %v3576 = vunpack.c.l.b16 %v3441
    %v3577 = vunpack.c.l.b16 %v3442
    %v3578 = vunpack.c.l.b16 %v3443
    %v3579 = vunpack.c.l.b16 %v3444
    %v3580 = vunpack.c.l.b16 %v3445
    %v3581 = vunpack.c.l.b16 %v3446
    %v3582 = vunpack.c.l.b16 %v3447
    %v3583 = vunpack.c.l.b16 %v3448
    %v3584 = vunpack.c.l.b16 %v3449
    %v3585 = vunpack.c.l.b16 %v3450
    %v3586 = vunpack.c.l.b16 %v3451
    %v3587 = vunpack.c.l.b16 %v3452
    %v3588 = vunpack.c.l.b16 %v3453
    %v3589 = vunpack.c.l.b16 %v3454
    %v3590 = vunpack.c.l.b16 %v3455
    %v3591 = vunpack.c.l.b16 %v3456
    %v3592 = vunpack.c.l.b16 %v3457
    %v3593 = vunpack.c.l.b16 %v3458
    %v3594 = vunpack.c.l.b16 %v3459
    %v3595 = vunpack.c.l.b16 %v3460
    %v3596 = vunpack.c.l.b16 %v3461
    %v3597 = vunpack.c.l.b16 %v3462
    %v3598 = vunpack.c.l.b16 %v3463
    %v3599 = vunpack.c.l.b16 %v3464
    %v3600 = vunpack.c.l.b16 %v3465
    %v3601 = vunpack.c.l.b16 %v3466
    %v3602 = vunpack.c.l.b16 %v3467
    %v3603 = vunpack.c.l.b16 %v3468
    %v3604 = vunpack.c.l.b16 %v3469
    %v3605 = vunpack.c.l.b16 %v3470
    %v3606 = vunpack.c.l.b16 %v3471
    %v3607 = vunpack.c.l.b16 %v3472
    %v3608 = vpack.c.b16 %v3545, %v3544
    %v3609 = vpack.c.b16 %v3547, %v3546
    %v3610 = vpack.c.b16 %v3549, %v3548
    %v3611 = vpack.c.b16 %v3551, %v3550
    %v3612 = vpack.c.b16 %v3553, %v3552
    %v3613 = vpack.c.b16 %v3555, %v3554
    %v3614 = vpack.c.b16 %v3557, %v3556
    %v3615 = vpack.c.b16 %v3559, %v3558
    %v3616 = vpack.c.b16 %v3561, %v3560
    %v3617 = vpack.c.b16 %v3563, %v3562
    %v3618 = vpack.c.b16 %v3565, %v3564
    %v3619 = vpack.c.b16 %v3567, %v3566
    %v3620 = vpack.c.b16 %v3569, %v3568
    %v3621 = vpack.c.b16 %v3571, %v3570
    %v3622 = vpack.c.b16 %v3573, %v3572
    %v3623 = vpack.c.b16 %v3575, %v3574
    %v3624 = vpack.c.b16 %v3577, %v3576
    %v3625 = vpack.c.b16 %v3579, %v3578
    %v3626 = vpack.c.b16 %v3581, %v3580
    %v3627 = vpack.c.b16 %v3583, %v3582
    %v3628 = vpack.c.b16 %v3585, %v3584
    %v3629 = vpack.c.b16 %v3587, %v3586
    %v3630 = vpack.c.b16 %v3589, %v3588
    %v3631 = vpack.c.b16 %v3591, %v3590
    %v3632 = vpack.c.b16 %v3593, %v3592
    %v3633 = vpack.c.b16 %v3595, %v3594
    %v3634 = vpack.c.b16 %v3597, %v3596
    %v3635 = vpack.c.b16 %v3599, %v3598
    %v3636 = vpack.c.b16 %v3601, %v3600
    %v3637 = vpack.c.b16 %v3603, %v3602
    %v3638 = vpack.c.b16 %v3605, %v3604
    %v3639 = vpack.c.b16 %v3607, %v3606
    %3672 = vmatprep.subr.bf16.mxu0 0
    %3673 = vmatpush1.bf16.msra.mxu0 %v3615
    %3674 = vmatprep.subr.bf16.mxu0 0
    %3675 = vmatpush1.bf16.msra.mxu0 %v3614
    %3676 = vmatprep.subr.bf16.mxu0 0
    %3677 = vmatpush1.bf16.msra.mxu0 %v3613
    %3678 = vmatprep.subr.bf16.mxu0 0
    %3679 = vmatpush1.bf16.msra.mxu0 %v3612
    %3680 = vmatprep.subr.bf16.mxu0 0
    %3681 = vmatpush1.bf16.msra.mxu0 %v3611
    %3682 = vmatprep.subr.bf16.mxu0 0
    %3683 = vmatpush1.bf16.msra.mxu0 %v3610
    %3684 = vmatprep.subr.bf16.mxu0 0
    %3685 = vmatpush1.bf16.msra.mxu0 %v3609
    %3686 = vmatprep.subr.bf16.mxu0 0
    %3687 = vmatpush1.bf16.msra.mxu0 %v3608
    %3688 = vmatprep.subr.bf16.mxu0 0
    %3689 = vmatpush2.bf16.msra.mxu0 %v3623
    %3690 = vmatprep.subr.bf16.mxu0 0
    %3691 = vmatpush2.bf16.msra.mxu0 %v3622
    %3692 = vmatprep.subr.bf16.mxu0 0
    %3693 = vmatpush2.bf16.msra.mxu0 %v3621
    %3694 = vmatprep.subr.bf16.mxu0 0
    %3695 = vmatpush2.bf16.msra.mxu0 %v3620
    %3696 = vmatprep.subr.bf16.mxu0 0
    %3697 = vmatpush2.bf16.msra.mxu0 %v3619
    %3698 = vmatprep.subr.bf16.mxu0 0
    %3699 = vmatpush2.bf16.msra.mxu0 %v3618
    %3700 = vmatprep.subr.bf16.mxu0 0
    %3701 = vmatpush2.bf16.msra.mxu0 %v3617
    %3702 = vmatprep.subr.bf16.mxu0 0
    %3703 = vmatpush2.bf16.msra.mxu0 %v3616
    %3704 = vmatprep.mubr.bf16.mxu0 %v3406
    %3705 = vmatmul.mubr.bf16.gmra.mxu0 %v3405
    %v3706 = vpop.f32.mrf.mxu0
    %v3707 = vadd.f32 %v3478, %v3706
    %v3708 = vpop.f32.mrf.mxu0
    %v3709 = vpop.f32.mrf.mxu0
    %v3710 = vpop.f32.mrf.mxu0
    %3711 = vdwg.mxu0
    %3712 = vmatprep.subr.bf16.mxu0 0
    %3713 = vmatpush1.bf16.msra.mxu0 %v3631
    %3714 = vmatprep.subr.bf16.mxu0 0
    %3715 = vmatpush1.bf16.msra.mxu0 %v3630
    %3716 = vmatprep.subr.bf16.mxu0 0
    %3717 = vmatpush1.bf16.msra.mxu0 %v3629
    %3718 = vmatprep.subr.bf16.mxu0 0
    %3719 = vmatpush1.bf16.msra.mxu0 %v3628
    %3720 = vmatprep.subr.bf16.mxu0 0
    %3721 = vmatpush1.bf16.msra.mxu0 %v3627
    %3722 = vmatprep.subr.bf16.mxu0 0
    %3723 = vmatpush1.bf16.msra.mxu0 %v3626
    %3724 = vmatprep.subr.bf16.mxu0 0
    %3725 = vmatpush1.bf16.msra.mxu0 %v3625
    %3726 = vmatprep.subr.bf16.mxu0 0
    %3727 = vmatpush1.bf16.msra.mxu0 %v3624
    %3728 = vmatprep.subr.bf16.mxu0 0
    %3729 = vmatpush2.bf16.msra.mxu0 %v3639
    %3730 = vmatprep.subr.bf16.mxu0 0
    %3731 = vmatpush2.bf16.msra.mxu0 %v3638
    %3732 = vmatprep.subr.bf16.mxu0 0
    %3733 = vmatpush2.bf16.msra.mxu0 %v3637
    %3734 = vmatprep.subr.bf16.mxu0 0
    %3735 = vmatpush2.bf16.msra.mxu0 %v3636
    %3736 = vmatprep.subr.bf16.mxu0 0
    %3737 = vmatpush2.bf16.msra.mxu0 %v3635
    %3738 = vmatprep.subr.bf16.mxu0 0
    %3739 = vmatpush2.bf16.msra.mxu0 %v3634
    %3740 = vmatprep.subr.bf16.mxu0 0
    %3741 = vmatpush2.bf16.msra.mxu0 %v3633
    %3742 = vmatprep.subr.bf16.mxu0 0
    %3743 = vmatpush2.bf16.msra.mxu0 %v3632
    %3744 = vmatprep.mubr.bf16.mxu0 %v3408
    %3745 = vmatmul.mubr.bf16.gmra.mxu0 %v3407
    %v3746 = vpop.f32.mrf.mxu0
    %v3747 = vadd.f32 %v3707, %v3746
    %v3748 = vpop.f32.mrf.mxu0
    %v3749 = vpop.f32.mrf.mxu0
    %v3750 = vpop.f32.mrf.mxu0
    %3751 = vdwg.mxu0
    %v3752 = vsel %vm632, %v3747, -inf
    %3753 = vmax.xlane.f32.xlu0 %v3752
    %v3754 = vpop.xlane.xlu0 %3753
    %v3755 = vsub.f32 %v3747, %v3754
    %v3756 = vmul.f32 %v3755, 1.442695
    %v3757 = vpow.pop %v3756
    %v3758 = vsel %vm632, %v3757, 0.0
    %3759 = vadd.xlane.f32.xlu0 %v3758
    %v3760 = vpop.xlane.xlu0 %3759
    %v3761 = vrcp.pop %v3760
    %v3762 = vmul.f32 %v3760, %v3761
    %v3763 = vsub.f32 2.0, %v3762
    %v3764 = vmul.f32 %v3761, %v3763
    %v3765 = vmul.f32 %v3757, %v3764
    %3766 = vst [vmem:[#allocation5] sm:$0x3] %v3765
    // Predicated region
    $region68: #{actor_forward.1} parent=1 // pred_check
      _
    $region69: #{actor_forward.1} parent=1 // pred_check_branch
      %3768 = sbr.rel (0) target = $region71
    $region70: #{actor_forward.1} parent=1 // pred_region
      %s3770 = ssub.s32 32, 32
      %3771 = vsyncadd [#allocation6], %s3770
      %s3773 = sshll.u32 [#allocation5], 4
      %s3774 = int_to_ptr.vmem [resolvable:$true] %s3773
      %3776 = dma.vmem_to_hbm [thread:$0]  %s3774, 32, %s9, [#allocation6]
    $region71: #{actor_forward.1} parent=1 // pred_fallthru
      _
    // Predicated region
    $region72: #{actor_forward.1} parent=1 // pred_check
      _
    $region73: #{actor_forward.1} parent=1 // pred_check_branch
      %3778 = sbr.rel (0) target = $region75
    $region74: #{actor_forward.1} parent=1 // pred_region
      %3779 = dma.done [#allocation6], 32
    $region75: #{actor_forward.1} parent=1 // pred_fallthru
      _
    %3780 = vsyncpa [#allocation6], 1
  %3781 = vsyncmov [#allocation4]
  %s3782 = vpop.sfrf %3781
  %p3783 = scmp.eq.s32.totalorder %s3782, 0
  %p3784 = pneg %p3783
  %3786 = shalt.err (%p3784)

</llo_original>
